<compile_context>
chip_gen: v7x
topology: tpu7x:2x2x1
jax: 0.10.0
libtpu: 0.0.40
codegen_flags: <defaults>
</compile_context>

<pallas_src>
import numpy as np
import jax
import jax.numpy as jnp
from jax.experimental import pallas as pl
from jax.experimental.pallas import tpu as pltpu

MODALITY_DISTRIBUTION = [197, 50, 50, 50, 200, 105, 277, 61, 34]   # sums to 1024
LAYER_NORM_EPS = 1e-12


def _embeddings_kernel(x_ref, pos_ref, ids_ref, tt_ref, gamma_ref, beta_ref, o_ref):
    # x_ref / pos_ref / o_ref : (tile_s, H)
    # ids_ref                 : (tile_s, 1) int32
    # tt_ref                  : (V, H)   token-type embedding table
    # gamma_ref / beta_ref    : (1, H)   LayerNorm affine params
    x = x_ref[...].astype(jnp.float32) + pos_ref[...].astype(jnp.float32)
    ids = ids_ref[...]                                   # (tile_s, 1) int32

    # Token-type embedding lookup: tiny vocab -> select chain (pure VPU).
    # ids outside [0, V) silently resolve to row 0 (see assumption above).
    v_count = tt_ref.shape[0]
    tt = tt_ref[0:1, :].astype(jnp.float32)              # (1, H), broadcasts below
    for v in range(1, v_count):                          # static unroll (V is tiny)
        tt = jnp.where(ids == v, tt_ref[v:v + 1, :].astype(jnp.float32), tt)

    e = x + tt                                           # (tile_s, H)

    # LayerNorm over hidden (last) axis -- single reduction pass:
    #   mean = sum(e)/H ; var = sum(e*e)/H - mean^2
    h = e.shape[-1]
    inv_h = 1.0 / h
    s1 = jnp.sum(e, axis=-1, keepdims=True)
    s2 = jnp.sum(e * e, axis=-1, keepdims=True)
    mean = s1 * inv_h
    var = jnp.maximum(s2 * inv_h - mean * mean, 0.0)
    normed = (e - mean) * jax.lax.rsqrt(var + LAYER_NORM_EPS)
    out = normed * gamma_ref[...].astype(jnp.float32) + beta_ref[...].astype(jnp.float32)

    # TODO(synk): dropout omitted (module is evaluated in eval mode -> identity).
    o_ref[...] = out.astype(o_ref.dtype)


def gather_position_table(position_embeddings):
    """Static gather of the concatenated per-modality position ids.

    Hoisted out of the per-call path: call this ONCE at parameter-setup time and
    pass the resulting (S, H) table to multimodal_bert_embeddings.
    """
    all_position_ids = np.concatenate(
        [np.arange(l) for l in MODALITY_DISTRIBUTION]).astype(np.int32)
    return jnp.asarray(position_embeddings)[all_position_ids]          # (S, H)


def multimodal_bert_embeddings(inputs_embeds, token_type_ids, pos_table,
                               tt_table, ln_weight, ln_bias, *, tile_s=None):
    B, S, H = inputs_embeds.shape
    assert S == sum(MODALITY_DISTRIBUTION), "seq length must match modality_distribution"
    assert pos_table.shape == (S, H)

    if tile_s is None:
        tile_s = S              # full-sequence tile -> grid of B steps
    assert S % tile_s == 0 and tile_s % 8 == 0
    tiles_per_seq = S // tile_s

    rows = B * S
    n_tiles = rows // tile_s

    # Collapse batch into the row axis (contiguous reshape, no data movement).
    x2 = inputs_embeds.reshape(rows, H)
    ids2 = token_type_ids.astype(jnp.int32).reshape(rows, 1)
    gamma = ln_weight.reshape(1, H)
    beta = ln_bias.reshape(1, H)

    # Position block index is batch-invariant: with tile_s == S it is constant,
    # so the 512 KiB pos tile is DMA'd exactly once for the whole grid.
    if tiles_per_seq == 1:
        pos_map = lambda r: (0, 0)
    else:
        pos_map = lambda r: (r % tiles_per_seq, 0)

    out2 = pl.pallas_call(
        _embeddings_kernel,
        out_shape=jax.ShapeDtypeStruct((rows, H), inputs_embeds.dtype),
        grid_spec=pltpu.PrefetchScalarGridSpec(
            num_scalar_prefetch=0,
            grid=(n_tiles,),
            in_specs=[
                pl.BlockSpec((tile_s, H), lambda r: (r, 0)),   # inputs_embeds rows
                pl.BlockSpec((tile_s, H), pos_map),            # gathered pos emb (reused)
                pl.BlockSpec((tile_s, 1), lambda r: (r, 0)),   # token_type_ids
                pl.BlockSpec(tt_table.shape, lambda r: (0, 0)),# token-type table
                pl.BlockSpec((1, H), lambda r: (0, 0)),        # LN gamma
                pl.BlockSpec((1, H), lambda r: (0, 0)),        # LN beta
            ],
            out_specs=pl.BlockSpec((tile_s, H), lambda r: (r, 0)),
        ),
        compiler_params=pltpu.CompilerParams(
            dimension_semantics=("parallel",)),
    )(x2, pos_table, ids2, tt_table, gamma, beta)
    return out2.reshape(B, S, H)


def _reference(inputs_embeds, token_type_ids, params):
    all_position_ids = np.concatenate([np.arange(l) for l in MODALITY_DISTRIBUTION])
    pos = params["position_embeddings"][all_position_ids][None]
    tt = params["token_type_embeddings"][token_type_ids]
    e = inputs_embeds + tt + pos
    mean = jnp.mean(e, axis=-1, keepdims=True)
    var = jnp.mean((e - mean) ** 2, axis=-1, keepdims=True)
    return ((e - mean) * jax.lax.rsqrt(var + LAYER_NORM_EPS)
            * params["ln_weight"] + params["ln_bias"])


if __name__ == "__main__":
    # Small config consistent with the module: hidden=128, type_vocab=2,
    # max_position_embeddings=512, batch=2; seq is fixed to 1024 by
    # modality_distribution (sum of segment lengths).
    B, H, V, MAX_POS = 2, 128, 2, 512
    S = sum(MODALITY_DISTRIBUTION)   # 1024

    key = jax.random.PRNGKey(0)
    k_pos, k_tt, k_g, k_b, k_x, k_ids = jax.random.split(key, 6)

    params = {
        "position_embeddings": jax.random.normal(k_pos, (MAX_POS, H), jnp.float32) * 0.02,
        "token_type_embeddings": jax.random.normal(k_tt, (V, H), jnp.float32) * 0.02,
        "ln_weight": 1.0 + 0.1 * jax.random.normal(k_g, (H,), jnp.float32),
        "ln_bias": 0.1 * jax.random.normal(k_b, (H,), jnp.float32),
    }

    inputs_embeds = jax.random.normal(k_x, (B, S, H), jnp.float32)
    token_type_ids = jax.random.randint(k_ids, (B, S), 0, V, dtype=jnp.int32)

    # One-time parameter setup (static gather hoisted out of the per-call path).
    pos_table = gather_position_table(params["position_embeddings"])       # (S, H)

    out = multimodal_bert_embeddings(
        inputs_embeds, token_type_ids, pos_table,
        params["token_type_embeddings"], params["ln_weight"], params["ln_bias"])
    out = jax.block_until_ready(out)

    ref = _reference(inputs_embeds, token_type_ids, params)
    np.testing.assert_allclose(np.asarray(out), np.asarray(ref), atol=1e-5, rtol=1e-5)

    print("KERNEL_OK")
</pallas_src>

<mosaic_0001>
module attributes {stable_mosaic.version = 11 : i64} {
  func.func @_embeddings_kernel(%arg0: i32, %arg1: memref<1024x128xf32, #tpu.memory_space<vmem>>, %arg2: memref<1024x128xf32, #tpu.memory_space<vmem>>, %arg3: memref<1024x1xi32, #tpu.memory_space<vmem>>, %arg4: memref<2x128xf32, #tpu.memory_space<vmem>>, %arg5: memref<1x128xf32, #tpu.memory_space<vmem>>, %arg6: memref<1x128xf32, #tpu.memory_space<vmem>>, %arg7: memref<1024x128xf32, #tpu.memory_space<vmem>>) attributes {dimension_semantics = [#tpu.dimension_semantics<parallel>], iteration_bounds = array<i64: 2>, scalar_prefetch = 0 : i64, scratch_operands = 0 : i64, tpu.core_type = #tpu.core_type<tc>, window_params = [{transform_indices = @transform_0, window_bounds = array<i64: 1024, 128>}, {pipeline_mode = #tpu.pipeline_mode<synchronous>, transform_indices = @transform_1, window_bounds = array<i64: 1024, 128>}, {transform_indices = @transform_2, window_bounds = array<i64: 1024, 1>}, {pipeline_mode = #tpu.pipeline_mode<synchronous>, transform_indices = @transform_3, window_bounds = array<i64: 2, 128>}, {pipeline_mode = #tpu.pipeline_mode<synchronous>, transform_indices = @transform_4, window_bounds = array<i64: 1, 128>}, {pipeline_mode = #tpu.pipeline_mode<synchronous>, transform_indices = @transform_5, window_bounds = array<i64: 1, 128>}, {transform_indices = @transform_6, window_bounds = array<i64: 1024, 128>}]} {
    %c0 = arith.constant 0 : index
    %c0_0 = arith.constant 0 : index
    %0 = vector.load %arg1[%c0, %c0_0] : memref<1024x128xf32, #tpu.memory_space<vmem>>, vector<1024x128xf32>
    %c0_1 = arith.constant 0 : index
    %c0_2 = arith.constant 0 : index
    %1 = vector.load %arg2[%c0_1, %c0_2] : memref<1024x128xf32, #tpu.memory_space<vmem>>, vector<1024x128xf32>
    %2 = arith.addf %0, %1 : vector<1024x128xf32>
    %c0_3 = arith.constant 0 : index
    %c0_4 = arith.constant 0 : index
    %3 = vector.load %arg3[%c0_3, %c0_4] : memref<1024x1xi32, #tpu.memory_space<vmem>>, vector<1024x1xi32>
    %c0_5 = arith.constant 0 : index
    %c0_6 = arith.constant 0 : index
    %4 = vector.load %arg4[%c0_5, %c0_6] : memref<2x128xf32, #tpu.memory_space<vmem>>, vector<1x128xf32>
    %c1_i32 = arith.constant 1 : i32
    %5 = vector.broadcast %c1_i32 : i32 to vector<1024x1xi32>
    %6 = arith.cmpi eq, %3, %5 : vector<1024x1xi32>
    %c1 = arith.constant 1 : index
    %c0_7 = arith.constant 0 : index
    %7 = vector.load %arg4[%c1, %c0_7] : memref<2x128xf32, #tpu.memory_space<vmem>>, vector<1x128xf32>
    %8 = vector.shape_cast %6 : vector<1024x1xi1> to vector<1024x1xi1>
    %9 = vector.broadcast %8 : vector<1024x1xi1> to vector<1024x128xi1>
    %10 = vector.shape_cast %7 : vector<1x128xf32> to vector<1x128xf32>
    %11 = vector.broadcast %10 : vector<1x128xf32> to vector<1024x128xf32>
    %12 = vector.shape_cast %4 : vector<1x128xf32> to vector<1x128xf32>
    %13 = vector.broadcast %12 : vector<1x128xf32> to vector<1024x128xf32>
    %14 = arith.select %9, %11, %13 : vector<1024x128xi1>, vector<1024x128xf32>
    %15 = arith.addf %2, %14 : vector<1024x128xf32>
    %cst = arith.constant dense<0.000000e+00> : vector<1024xf32>
    %16 = vector.multi_reduction <add>, %15, %cst [1] : vector<1024x128xf32> to vector<1024xf32>
    %17 = vector.shape_cast %16 : vector<1024xf32> to vector<1024x1xf32>
    %18 = arith.mulf %15, %15 : vector<1024x128xf32>
    %cst_8 = arith.constant dense<0.000000e+00> : vector<1024xf32>
    %19 = vector.multi_reduction <add>, %18, %cst_8 [1] : vector<1024x128xf32> to vector<1024xf32>
    %20 = vector.shape_cast %19 : vector<1024xf32> to vector<1024x1xf32>
    %cst_9 = arith.constant 7.812500e-03 : f32
    %21 = vector.broadcast %cst_9 : f32 to vector<1024x1xf32>
    %22 = arith.mulf %17, %21 : vector<1024x1xf32>
    %cst_10 = arith.constant 7.812500e-03 : f32
    %23 = vector.broadcast %cst_10 : f32 to vector<1024x1xf32>
    %24 = arith.mulf %20, %23 : vector<1024x1xf32>
    %25 = arith.mulf %22, %22 : vector<1024x1xf32>
    %26 = arith.subf %24, %25 : vector<1024x1xf32>
    %cst_11 = arith.constant 0.000000e+00 : f32
    %27 = vector.broadcast %cst_11 : f32 to vector<1024x1xf32>
    %28 = arith.maximumf %26, %27 : vector<1024x1xf32>
    %29 = vector.broadcast %22 : vector<1024x1xf32> to vector<1024x128xf32>
    %30 = arith.subf %15, %29 : vector<1024x128xf32>
    %cst_12 = arith.constant 9.99999996E-13 : f32
    %31 = vector.broadcast %cst_12 : f32 to vector<1024x1xf32>
    %32 = arith.addf %28, %31 : vector<1024x1xf32>
    %33 = math.rsqrt %32 : vector<1024x1xf32>
    %34 = vector.broadcast %33 : vector<1024x1xf32> to vector<1024x128xf32>
    %35 = arith.mulf %30, %34 : vector<1024x128xf32>
    %c0_13 = arith.constant 0 : index
    %c0_14 = arith.constant 0 : index
    %36 = vector.load %arg5[%c0_13, %c0_14] : memref<1x128xf32, #tpu.memory_space<vmem>>, vector<1x128xf32>
    %37 = vector.broadcast %36 : vector<1x128xf32> to vector<1024x128xf32>
    %38 = arith.mulf %35, %37 : vector<1024x128xf32>
    %c0_15 = arith.constant 0 : index
    %c0_16 = arith.constant 0 : index
    %39 = vector.load %arg6[%c0_15, %c0_16] : memref<1x128xf32, #tpu.memory_space<vmem>>, vector<1x128xf32>
    %40 = vector.broadcast %39 : vector<1x128xf32> to vector<1024x128xf32>
    %41 = arith.addf %38, %40 : vector<1024x128xf32>
    %c0_17 = arith.constant 0 : index
    %c0_18 = arith.constant 0 : index
    %42 = vector.load %arg7[%c0_17, %c0_18] : memref<1024x128xf32, #tpu.memory_space<vmem>>, vector<1024x128xf32>
    tpu.vector_store %arg7[%c0_17, %c0_18], %41 {strides = array<i32>} : memref<1024x128xf32, #tpu.memory_space<vmem>>, vector<1024x128xf32>,
    return
  }
  func.func @transform_0(%arg0: i32) -> (i32, i32) {
    %c0_i32 = arith.constant 0 : i32
    %c0_i32_0 = arith.constant 0 : i32
    return %arg0, %c0_i32 : i32, i32
  }
  func.func @transform_1(%arg0: i32) -> (i32, i32) {
    %c0_i32 = arith.constant 0 : i32
    %c0_i32_0 = arith.constant 0 : i32
    %c0_i32_1 = arith.constant 0 : i32
    return %c0_i32, %c0_i32_0 : i32, i32
  }
  func.func @transform_2(%arg0: i32) -> (i32, i32) {
    %c0_i32 = arith.constant 0 : i32
    %c0_i32_0 = arith.constant 0 : i32
    return %arg0, %c0_i32 : i32, i32
  }
  func.func @transform_3(%arg0: i32) -> (i32, i32) {
    %c0_i32 = arith.constant 0 : i32
    %c0_i32_0 = arith.constant 0 : i32
    %c0_i32_1 = arith.constant 0 : i32
    return %c0_i32, %c0_i32_0 : i32, i32
  }
  func.func @transform_4(%arg0: i32) -> (i32, i32) {
    %c0_i32 = arith.constant 0 : i32
    %c0_i32_0 = arith.constant 0 : i32
    %c0_i32_1 = arith.constant 0 : i32
    return %c0_i32, %c0_i32_0 : i32, i32
  }
  func.func @transform_5(%arg0: i32) -> (i32, i32) {
    %c0_i32 = arith.constant 0 : i32
    %c0_i32_0 = arith.constant 0 : i32
    %c0_i32_1 = arith.constant 0 : i32
    return %c0_i32, %c0_i32_0 : i32, i32
  }
  func.func @transform_6(%arg0: i32) -> (i32, i32) {
    %c0_i32 = arith.constant 0 : i32
    %c0_i32_0 = arith.constant 0 : i32
    return %arg0, %c0_i32 : i32, i32
  }
}

</mosaic_0001>

<llo_original>
// kernel: tpu_custom_call.1
$region0: #{tpu_custom_call.1}
  #allocation0 [shape = 'u32[]', space=smem, size = 0x4, offset = 0x4, fixed_abs, tag = 'smem constant byte address 0x4 - core index']
  #allocation1 [shape = 'u32[144,128]{1,0:T(1,128)}', space=vmem, size = 0x12000, scoped, tag = 'internal scratch']
  %s0 = inlined_call_operand.vmem [shape: f32[2048,128], index: 0, kind: input, shape index: {}]
  %s1 = inlined_call_operand.hbm [shape: f32[1024,128], index: 1, kind: input, shape index: {}]
  %s2 = inlined_call_operand.vmem [shape: s32[2048,1], index: 2, kind: input, shape index: {}]
  %s3 = inlined_call_operand.vmem [shape: f32[2,128], index: 3, kind: input, shape index: {}]
  %s4 = inlined_call_operand.vmem [shape: f32[1,128], index: 4, kind: input, shape index: {}]
  %s5 = inlined_call_operand.vmem [shape: f32[1,128], index: 5, kind: input, shape index: {}]
  %s6 = inlined_call_operand.hbm [shape: f32[2048,128], index: 6, kind: output, shape index: {}]
  %s7 = sld [smem:[#allocation0]]
  $region61: #{tpu_custom_call.1} parent=0
    _
  %s9 = ssub.s32 1, %s7
  %s10 = scalar_select 0, %s9, %s7
  $region1: #{tpu_custom_call.1} parent=0
    #allocation2 [shape = 'u8[524288]{0}', space=vmem, size = 0x80000, scoped, tag = 'input window, operand 1, single buffered']
    #allocation3 [shape = 's32[2]{0}', space=sflag, size = 0x8, scoped, tag = 'scoped memory for tpu_custom_call.1']
    #allocation4 [shape = 's32[2]{0}', space=sflag, size = 0x8, scoped, tag = 'scoped memory for tpu_custom_call.1']
    #allocation5 [shape = 'u8[1048576]{0}', space=vmem, size = 0x100000, scoped, tag = 'output window, operand 0']
    %11 = vsyncpa [#allocation3], 0
    %12 = vsyncpa [#allocation4], 0
    %s13 = scalar_lea.sflag [#allocation4], 1
    %14 = vsyncpa %s13, 0
    loop: start=0, step=1, limit=4
    $region2: #{tpu_custom_call.1} parent=1 // loop_pre_header
      _
    $region3: #{tpu_custom_call.1} parent=1 // loop_header
      %s16 = sphi 0, %s20
      %p17 = scmp.ge.s32.totalorder %s16, 4
      %s26 = sphi 0, %s28
      %s29 = sphi 0, %s26
      %s30 = sphi 0, %s29
      %s46 = sphi 0, %s30
      %s50 = sphi 0, %s50
      %s52 = sphi 0, %s50
      %s53 = sphi 0, %s52
      %s67 = sphi 0, %s53
      %s73 = sphi 0, %s75
      %s76 = sphi 0, %s73
      %s77 = sphi 0, %s76
      %s93 = sphi 0, %s77
      %s97 = sphi 0, %s97
      %s99 = sphi 0, %s97
      %s100 = sphi 0, %s99
      %s114 = sphi 0, %s100
      %s118 = sphi 0, %s118
      %s120 = sphi 0, %s118
      %s121 = sphi 0, %s120
      %s135 = sphi 0, %s121
      %s139 = sphi 0, %s139
      %s141 = sphi 0, %s139
      %s142 = sphi 0, %s141
      %s156 = sphi 0, %s142
      %s162 = sphi 0, %s164
      %s165 = sphi 0, %s162
      %s166 = sphi 0, %s165
      %s182 = sphi 0, %s166
    $region4: #{tpu_custom_call.1} parent=1 // loop_header_branch
      %19 = sbr.rel (%p17) target = $region8
    $region5: #{tpu_custom_call.1} parent=1 // loop_body
      %s21 = ssub.s32 %s16, 1
      %s22 = ssub.s32 %s16, 2
      %s23 = sadd.s32 %s16, 1
      %s24 = ssub.s32 %s16, %s23
      %p25 = scmp.eq.s32.totalorder %s24, 0
      %s27 = sadd.s32 %s26, 1
      %s28 = scalar_select %p25, %s26, %s27
      %p31 = pneg %p25
      %p32 = scmp.eq.s32.totalorder %s16, 1
      %p33 = por %p31, %p32
      %p34 = scmp.ne.s32.totalorder %s26, %s29
      %p35 = scmp.eq.s32.totalorder %s16, 0
      %p36 = por %p34, %p35
      %p37 = scmp.ne.s32.totalorder %s26, %s29
      %p38 = scmp.eq.s32.totalorder %s21, 1
      %p39 = por %p37, %p38
      %p40 = scmp.ne.s32.totalorder %s29, %s30
      %p41 = scmp.eq.s32.totalorder %s21, 0
      %p42 = por %p40, %p41
      %p43 = scmp.ne.s32.totalorder %s29, %s30
      %p44 = scmp.eq.s32.totalorder %s22, 1
      %p45 = por %p43, %p44
      %p47 = scmp.ne.s32.totalorder %s30, %s46
      %p48 = scmp.eq.s32.totalorder %s22, 0
      %p49 = por %p47, %p48
      %s51 = sadd.s32 %s50, 1
      %p54 = scmp.eq.s32.totalorder %s16, 1
      %p55 = scmp.ne.s32.totalorder %s50, %s52
      %p56 = scmp.eq.s32.totalorder %s16, 0
      %p57 = por %p55, %p56
      %p58 = scmp.ne.s32.totalorder %s50, %s52
      %p59 = scmp.eq.s32.totalorder %s21, 1
      %p60 = por %p58, %p59
      %p61 = scmp.ne.s32.totalorder %s52, %s53
      %p62 = scmp.eq.s32.totalorder %s21, 0
      %p63 = por %p61, %p62
      %p64 = scmp.ne.s32.totalorder %s52, %s53
      %p65 = scmp.eq.s32.totalorder %s22, 1
      %p66 = por %p64, %p65
      %p68 = scmp.ne.s32.totalorder %s53, %s67
      %p69 = scmp.eq.s32.totalorder %s22, 0
      %p70 = por %p68, %p69
      %s71 = ssub.s32 %s16, %s23
      %p72 = scmp.eq.s32.totalorder %s71, 0
      %s74 = sadd.s32 %s73, 1
      %s75 = scalar_select %p72, %s73, %s74
      %p78 = pneg %p72
      %p79 = scmp.eq.s32.totalorder %s16, 1
      %p80 = por %p78, %p79
      %p81 = scmp.ne.s32.totalorder %s73, %s76
      %p82 = scmp.eq.s32.totalorder %s16, 0
      %p83 = por %p81, %p82
      %p84 = scmp.ne.s32.totalorder %s73, %s76
      %p85 = scmp.eq.s32.totalorder %s21, 1
      %p86 = por %p84, %p85
      %p87 = scmp.ne.s32.totalorder %s76, %s77
      %p88 = scmp.eq.s32.totalorder %s21, 0
      %p89 = por %p87, %p88
      %p90 = scmp.ne.s32.totalorder %s76, %s77
      %p91 = scmp.eq.s32.totalorder %s22, 1
      %p92 = por %p90, %p91
      %p94 = scmp.ne.s32.totalorder %s77, %s93
      %p95 = scmp.eq.s32.totalorder %s22, 0
      %p96 = por %p94, %p95
      %s98 = sadd.s32 %s97, 1
      %p101 = scmp.eq.s32.totalorder %s16, 1
      %p102 = scmp.ne.s32.totalorder %s97, %s99
      %p103 = scmp.eq.s32.totalorder %s16, 0
      %p104 = por %p102, %p103
      %p105 = scmp.ne.s32.totalorder %s97, %s99
      %p106 = scmp.eq.s32.totalorder %s21, 1
      %p107 = por %p105, %p106
      %p108 = scmp.ne.s32.totalorder %s99, %s100
      %p109 = scmp.eq.s32.totalorder %s21, 0
      %p110 = por %p108, %p109
      %p111 = scmp.ne.s32.totalorder %s99, %s100
      %p112 = scmp.eq.s32.totalorder %s22, 1
      %p113 = por %p111, %p112
      %p115 = scmp.ne.s32.totalorder %s100, %s114
      %p116 = scmp.eq.s32.totalorder %s22, 0
      %p117 = por %p115, %p116
      %s119 = sadd.s32 %s118, 1
      %p122 = scmp.eq.s32.totalorder %s16, 1
      %p123 = scmp.ne.s32.totalorder %s118, %s120
      %p124 = scmp.eq.s32.totalorder %s16, 0
      %p125 = por %p123, %p124
      %p126 = scmp.ne.s32.totalorder %s118, %s120
      %p127 = scmp.eq.s32.totalorder %s21, 1
      %p128 = por %p126, %p127
      %p129 = scmp.ne.s32.totalorder %s120, %s121
      %p130 = scmp.eq.s32.totalorder %s21, 0
      %p131 = por %p129, %p130
      %p132 = scmp.ne.s32.totalorder %s120, %s121
      %p133 = scmp.eq.s32.totalorder %s22, 1
      %p134 = por %p132, %p133
      %p136 = scmp.ne.s32.totalorder %s121, %s135
      %p137 = scmp.eq.s32.totalorder %s22, 0
      %p138 = por %p136, %p137
      %s140 = sadd.s32 %s139, 1
      %p143 = scmp.eq.s32.totalorder %s16, 1
      %p144 = scmp.ne.s32.totalorder %s139, %s141
      %p145 = scmp.eq.s32.totalorder %s16, 0
      %p146 = por %p144, %p145
      %p147 = scmp.ne.s32.totalorder %s139, %s141
      %p148 = scmp.eq.s32.totalorder %s21, 1
      %p149 = por %p147, %p148
      %p150 = scmp.ne.s32.totalorder %s141, %s142
      %p151 = scmp.eq.s32.totalorder %s21, 0
      %p152 = por %p150, %p151
      %p153 = scmp.ne.s32.totalorder %s141, %s142
      %p154 = scmp.eq.s32.totalorder %s22, 1
      %p155 = por %p153, %p154
      %p157 = scmp.ne.s32.totalorder %s142, %s156
      %p158 = scmp.eq.s32.totalorder %s22, 0
      %p159 = por %p157, %p158
      %s160 = ssub.s32 %s16, %s23
      %p161 = scmp.eq.s32.totalorder %s160, 0
      %s163 = sadd.s32 %s162, 1
      %s164 = scalar_select %p161, %s162, %s163
      %p167 = pneg %p161
      %p168 = scmp.eq.s32.totalorder %s16, 1
      %p169 = por %p167, %p168
      %p170 = scmp.ne.s32.totalorder %s162, %s165
      %p171 = scmp.eq.s32.totalorder %s16, 0
      %p172 = por %p170, %p171
      %p173 = scmp.ne.s32.totalorder %s162, %s165
      %p174 = scmp.eq.s32.totalorder %s21, 1
      %p175 = por %p173, %p174
      %p176 = scmp.ne.s32.totalorder %s165, %s166
      %p177 = scmp.eq.s32.totalorder %s21, 0
      %p178 = por %p176, %p177
      %p179 = scmp.ne.s32.totalorder %s165, %s166
      %p180 = scmp.eq.s32.totalorder %s22, 1
      %p181 = por %p179, %p180
      %p183 = scmp.ne.s32.totalorder %s166, %s182
      %p184 = scmp.eq.s32.totalorder %s22, 0
      %p185 = por %p183, %p184
      %p186 = scmp.le.s32.totalorder 1, %s16
      %p187 = scmp.lt.s32.totalorder %s16, 3
      %p188 = pnand %p186, %p187
      %p189 = pneg %p188
      // Predicated region
      $region9: #{tpu_custom_call.1} parent=5 // pred_check
        _
      $region10: #{tpu_custom_call.1} parent=5 // pred_check_branch
        %191 = sbr.rel (%p188) target = $region12
      $region11: #{tpu_custom_call.1} parent=5 // pred_region
        %s192 = ssub.s32 %s16, 1
        // Predicated region
        $region13: #{tpu_custom_call.1} parent=11 // pred_check
          %p193 = pneg %p63
        $region14: #{tpu_custom_call.1} parent=11 // pred_check_branch
          %195 = sbr.rel (%p193) target = $region16
        $region15: #{tpu_custom_call.1} parent=11 // pred_region
          %s197 = ssub.s32 16384, 16384
          %198 = vsyncadd [#allocation3], %s197
          %s199 = sshll.u32 [#allocation2], 4
          %s200 = int_to_ptr.vmem [resolvable:$true] %s199
          %205 = dma.hbm_to_vmem [thread:$0]  %s1, 16384, %s200, [#allocation3], 128, 128, 8
        $region16: #{tpu_custom_call.1} parent=11 // pred_fallthru
          _
        // Predicated region
        $region17: #{tpu_custom_call.1} parent=11 // pred_check
          %p206 = pneg %p110
        $region18: #{tpu_custom_call.1} parent=11 // pred_check_branch
          %208 = sbr.rel (%p206) target = $region20
        $region19: #{tpu_custom_call.1} parent=11 // pred_region
          _
        $region20: #{tpu_custom_call.1} parent=11 // pred_fallthru
          _
        // Predicated region
        $region21: #{tpu_custom_call.1} parent=11 // pred_check
          %p209 = pneg %p131
        $region22: #{tpu_custom_call.1} parent=11 // pred_check_branch
          %211 = sbr.rel (%p209) target = $region24
        $region23: #{tpu_custom_call.1} parent=11 // pred_region
          _
        $region24: #{tpu_custom_call.1} parent=11 // pred_fallthru
          _
        // Predicated region
        $region25: #{tpu_custom_call.1} parent=11 // pred_check
          %p212 = pneg %p152
        $region26: #{tpu_custom_call.1} parent=11 // pred_check_branch
          %214 = sbr.rel (%p212) target = $region28
        $region27: #{tpu_custom_call.1} parent=11 // pred_region
          _
        $region28: #{tpu_custom_call.1} parent=11 // pred_fallthru
          _
      $region12: #{tpu_custom_call.1} parent=5 // pred_fallthru
        _
      %p215 = scmp.lt.s32.totalorder %s16, 2
      // Predicated region
      $region29: #{tpu_custom_call.1} parent=5 // pred_check
        %p216 = pneg %p215
      $region30: #{tpu_custom_call.1} parent=5 // pred_check_branch
        %218 = sbr.rel (%p216) target = $region32
      $region31: #{tpu_custom_call.1} parent=5 // pred_region
        // Predicated region
        $region33: #{tpu_custom_call.1} parent=31 // pred_check
          %p219 = pneg %p36
        $region34: #{tpu_custom_call.1} parent=31 // pred_check_branch
          %221 = sbr.rel (%p219) target = $region36
        $region35: #{tpu_custom_call.1} parent=31 // pred_region
          %s222 = smul.u32 128, %s16
          %p223 = scmp.lt.s32.totalorder %s222, 255
          %s224 = scalar_select %p223, %s222, 255
          %s225 = smul.addr %s224, 8
          %s226 = scalar_lea.vmem %s0, %s225
          %s227 = smul.u32 128, %s16
        $region36: #{tpu_custom_call.1} parent=31 // pred_fallthru
          _
        // Predicated region
        $region37: #{tpu_custom_call.1} parent=31 // pred_check
          %p228 = pneg %p83
        $region38: #{tpu_custom_call.1} parent=31 // pred_check_branch
          %230 = sbr.rel (%p228) target = $region40
        $region39: #{tpu_custom_call.1} parent=31 // pred_region
          %s231 = smul.u32 128, %s16
          %p232 = scmp.lt.s32.totalorder %s231, 255
          %s233 = scalar_select %p232, %s231, 255
          %s234 = smul.addr %s233, 8
          %s235 = scalar_lea.vmem %s2, %s234
          %s236 = smul.u32 128, %s16
        $region40: #{tpu_custom_call.1} parent=31 // pred_fallthru
          _
      $region32: #{tpu_custom_call.1} parent=5 // pred_fallthru
        _
      %p237 = scmp.le.s32.totalorder 1, %s16
      %p238 = scmp.lt.s32.totalorder %s16, 3
      %p239 = pnand %p237, %p238
      %p240 = pneg %p239
      // Predicated region
      $region41: #{tpu_custom_call.1} parent=5 // pred_check
        _
      $region42: #{tpu_custom_call.1} parent=5 // pred_check_branch
        %242 = sbr.rel (%p239) target = $region44
      $region43: #{tpu_custom_call.1} parent=5 // pred_region
        %s243 = ssub.s32 %s16, 1
        // Predicated region
        $region45: #{tpu_custom_call.1} parent=43 // pred_check
          %p244 = pneg %p63
        $region46: #{tpu_custom_call.1} parent=43 // pred_check_branch
          %246 = sbr.rel (%p244) target = $region48
        $region47: #{tpu_custom_call.1} parent=43 // pred_region
          %247 = dma.done [#allocation3], 16384
        $region48: #{tpu_custom_call.1} parent=43 // pred_fallthru
          _
        %s248 = smul.u32 128, %s21
        %p249 = scmp.lt.s32.totalorder %s248, 255
        %s250 = scalar_select %p249, %s248, 255
        %s251 = smul.addr %s250, 8
        %s252 = scalar_lea.vmem %s0, %s251
        %p253 = pneg %p42
        %p254 = pneg %p39
        %p255 = pneg %p63
        %p256 = pneg %p60
        %s257 = smul.u32 128, %s21
        %p258 = scmp.lt.s32.totalorder %s257, 255
        %s259 = scalar_select %p258, %s257, 255
        %s260 = smul.addr %s259, 8
        %s261 = scalar_lea.vmem %s2, %s260
        %p262 = pneg %p89
        %p263 = pneg %p86
        %p264 = pneg %p110
        %p265 = pneg %p107
        %p266 = pneg %p131
        %p267 = pneg %p128
        %p268 = pneg %p152
        %p269 = pneg %p149
        %p270 = pneg %p178
        %p271 = pneg %p175
        %s272 = sand.u32 %s165, 1
        %s273 = scalar_lea.sflag [#allocation4], %s272
        %s274 = sand.u32 %s165, 1
        %s275 = smul.addr %s274, 1024
        %s276 = scalar_lea.vmem [#allocation5], %s275
        %s277 = smul.u32 128, %s21
        %p278 = scmp.lt.s32.totalorder %s277, 255
        %s279 = scalar_select %p278, %s277, 255
        %s280 = smul.addr %s279, 8
        %s281 = scalar_lea.vmem %s0, %s280
        %s282 = smul.u32 128, %s21
        %s283 = smul.u32 128, %s21
        %p284 = scmp.lt.s32.totalorder %s283, 255
        %s285 = scalar_select %p284, %s283, 255
        %s286 = smul.addr %s285, 8
        %s287 = scalar_lea.vmem %s2, %s286
        %s288 = smul.u32 128, %s21
        %s289 = smul.u32 128, %s21
        %v290 = vld [vmem:[%s281] sm:$0xff]
        %v291 = vld [vmem:[%s281 + $0x8] sm:$0xff]
        %v292 = vld [vmem:[%s281 + $0x10] sm:$0xff]
        %v293 = vld [vmem:[%s281 + $0x18] sm:$0xff]
        %v294 = vld [vmem:[%s281 + $0x20] sm:$0xff]
        %v295 = vld [vmem:[%s281 + $0x28] sm:$0xff]
        %v296 = vld [vmem:[%s281 + $0x30] sm:$0xff]
        %v297 = vld [vmem:[%s281 + $0x38] sm:$0xff]
        %v298 = vld [vmem:[%s281 + $0x40] sm:$0xff]
        %v299 = vld [vmem:[%s281 + $0x48] sm:$0xff]
        %v300 = vld [vmem:[%s281 + $0x50] sm:$0xff]
        %v301 = vld [vmem:[%s281 + $0x58] sm:$0xff]
        %v302 = vld [vmem:[%s281 + $0x60] sm:$0xff]
        %v303 = vld [vmem:[%s281 + $0x68] sm:$0xff]
        %v304 = vld [vmem:[%s281 + $0x70] sm:$0xff]
        %v305 = vld [vmem:[%s281 + $0x78] sm:$0xff]
        %v306 = vld [vmem:[%s281 + $0x80] sm:$0xff]
        %v307 = vld [vmem:[%s281 + $0x88] sm:$0xff]
        %v308 = vld [vmem:[%s281 + $0x90] sm:$0xff]
        %v309 = vld [vmem:[%s281 + $0x98] sm:$0xff]
        %v310 = vld [vmem:[%s281 + $0xa0] sm:$0xff]
        %v311 = vld [vmem:[%s281 + $0xa8] sm:$0xff]
        %v312 = vld [vmem:[%s281 + $0xb0] sm:$0xff]
        %v313 = vld [vmem:[%s281 + $0xb8] sm:$0xff]
        %v314 = vld [vmem:[%s281 + $0xc0] sm:$0xff]
        %v315 = vld [vmem:[%s281 + $0xc8] sm:$0xff]
        %v316 = vld [vmem:[%s281 + $0xd0] sm:$0xff]
        %v317 = vld [vmem:[%s281 + $0xd8] sm:$0xff]
        %v318 = vld [vmem:[%s281 + $0xe0] sm:$0xff]
        %v319 = vld [vmem:[%s281 + $0xe8] sm:$0xff]
        %v320 = vld [vmem:[%s281 + $0xf0] sm:$0xff]
        %v321 = vld [vmem:[%s281 + $0xf8] sm:$0xff]
        %v322 = vld [vmem:[%s281 + $0x100] sm:$0xff]
        %v323 = vld [vmem:[%s281 + $0x108] sm:$0xff]
        %v324 = vld [vmem:[%s281 + $0x110] sm:$0xff]
        %v325 = vld [vmem:[%s281 + $0x118] sm:$0xff]
        %v326 = vld [vmem:[%s281 + $0x120] sm:$0xff]
        %v327 = vld [vmem:[%s281 + $0x128] sm:$0xff]
        %v328 = vld [vmem:[%s281 + $0x130] sm:$0xff]
        %v329 = vld [vmem:[%s281 + $0x138] sm:$0xff]
        %v330 = vld [vmem:[%s281 + $0x140] sm:$0xff]
        %v331 = vld [vmem:[%s281 + $0x148] sm:$0xff]
        %v332 = vld [vmem:[%s281 + $0x150] sm:$0xff]
        %v333 = vld [vmem:[%s281 + $0x158] sm:$0xff]
        %v334 = vld [vmem:[%s281 + $0x160] sm:$0xff]
        %v335 = vld [vmem:[%s281 + $0x168] sm:$0xff]
        %v336 = vld [vmem:[%s281 + $0x170] sm:$0xff]
        %v337 = vld [vmem:[%s281 + $0x178] sm:$0xff]
        %v338 = vld [vmem:[%s281 + $0x180] sm:$0xff]
        %v339 = vld [vmem:[%s281 + $0x188] sm:$0xff]
        %v340 = vld [vmem:[%s281 + $0x190] sm:$0xff]
        %v341 = vld [vmem:[%s281 + $0x198] sm:$0xff]
        %v342 = vld [vmem:[%s281 + $0x1a0] sm:$0xff]
        %v343 = vld [vmem:[%s281 + $0x1a8] sm:$0xff]
        %v344 = vld [vmem:[%s281 + $0x1b0] sm:$0xff]
        %v345 = vld [vmem:[%s281 + $0x1b8] sm:$0xff]
        %v346 = vld [vmem:[%s281 + $0x1c0] sm:$0xff]
        %v347 = vld [vmem:[%s281 + $0x1c8] sm:$0xff]
        %v348 = vld [vmem:[%s281 + $0x1d0] sm:$0xff]
        %v349 = vld [vmem:[%s281 + $0x1d8] sm:$0xff]
        %v350 = vld [vmem:[%s281 + $0x1e0] sm:$0xff]
        %v351 = vld [vmem:[%s281 + $0x1e8] sm:$0xff]
        %v352 = vld [vmem:[%s281 + $0x1f0] sm:$0xff]
        %v353 = vld [vmem:[%s281 + $0x1f8] sm:$0xff]
        %v354 = vld [vmem:[%s281 + $0x200] sm:$0xff]
        %v355 = vld [vmem:[%s281 + $0x208] sm:$0xff]
        %v356 = vld [vmem:[%s281 + $0x210] sm:$0xff]
        %v357 = vld [vmem:[%s281 + $0x218] sm:$0xff]
        %v358 = vld [vmem:[%s281 + $0x220] sm:$0xff]
        %v359 = vld [vmem:[%s281 + $0x228] sm:$0xff]
        %v360 = vld [vmem:[%s281 + $0x230] sm:$0xff]
        %v361 = vld [vmem:[%s281 + $0x238] sm:$0xff]
        %v362 = vld [vmem:[%s281 + $0x240] sm:$0xff]
        %v363 = vld [vmem:[%s281 + $0x248] sm:$0xff]
        %v364 = vld [vmem:[%s281 + $0x250] sm:$0xff]
        %v365 = vld [vmem:[%s281 + $0x258] sm:$0xff]
        %v366 = vld [vmem:[%s281 + $0x260] sm:$0xff]
        %v367 = vld [vmem:[%s281 + $0x268] sm:$0xff]
        %v368 = vld [vmem:[%s281 + $0x270] sm:$0xff]
        %v369 = vld [vmem:[%s281 + $0x278] sm:$0xff]
        %v370 = vld [vmem:[%s281 + $0x280] sm:$0xff]
        %v371 = vld [vmem:[%s281 + $0x288] sm:$0xff]
        %v372 = vld [vmem:[%s281 + $0x290] sm:$0xff]
        %v373 = vld [vmem:[%s281 + $0x298] sm:$0xff]
        %v374 = vld [vmem:[%s281 + $0x2a0] sm:$0xff]
        %v375 = vld [vmem:[%s281 + $0x2a8] sm:$0xff]
        %v376 = vld [vmem:[%s281 + $0x2b0] sm:$0xff]
        %v377 = vld [vmem:[%s281 + $0x2b8] sm:$0xff]
        %v378 = vld [vmem:[%s281 + $0x2c0] sm:$0xff]
        %v379 = vld [vmem:[%s281 + $0x2c8] sm:$0xff]
        %v380 = vld [vmem:[%s281 + $0x2d0] sm:$0xff]
        %v381 = vld [vmem:[%s281 + $0x2d8] sm:$0xff]
        %v382 = vld [vmem:[%s281 + $0x2e0] sm:$0xff]
        %v383 = vld [vmem:[%s281 + $0x2e8] sm:$0xff]
        %v384 = vld [vmem:[%s281 + $0x2f0] sm:$0xff]
        %v385 = vld [vmem:[%s281 + $0x2f8] sm:$0xff]
        %v386 = vld [vmem:[%s281 + $0x300] sm:$0xff]
        %v387 = vld [vmem:[%s281 + $0x308] sm:$0xff]
        %v388 = vld [vmem:[%s281 + $0x310] sm:$0xff]
        %v389 = vld [vmem:[%s281 + $0x318] sm:$0xff]
        %v390 = vld [vmem:[%s281 + $0x320] sm:$0xff]
        %v391 = vld [vmem:[%s281 + $0x328] sm:$0xff]
        %v392 = vld [vmem:[%s281 + $0x330] sm:$0xff]
        %v393 = vld [vmem:[%s281 + $0x338] sm:$0xff]
        %v394 = vld [vmem:[%s281 + $0x340] sm:$0xff]
        %v395 = vld [vmem:[%s281 + $0x348] sm:$0xff]
        %v396 = vld [vmem:[%s281 + $0x350] sm:$0xff]
        %v397 = vld [vmem:[%s281 + $0x358] sm:$0xff]
        %v398 = vld [vmem:[%s281 + $0x360] sm:$0xff]
        %v399 = vld [vmem:[%s281 + $0x368] sm:$0xff]
        %v400 = vld [vmem:[%s281 + $0x370] sm:$0xff]
        %v401 = vld [vmem:[%s281 + $0x378] sm:$0xff]
        %v402 = vld [vmem:[%s281 + $0x380] sm:$0xff]
        %v403 = vld [vmem:[%s281 + $0x388] sm:$0xff]
        %v404 = vld [vmem:[%s281 + $0x390] sm:$0xff]
        %v405 = vld [vmem:[%s281 + $0x398] sm:$0xff]
        %v406 = vld [vmem:[%s281 + $0x3a0] sm:$0xff]
        %v407 = vld [vmem:[%s281 + $0x3a8] sm:$0xff]
        %v408 = vld [vmem:[%s281 + $0x3b0] sm:$0xff]
        %v409 = vld [vmem:[%s281 + $0x3b8] sm:$0xff]
        %v410 = vld [vmem:[%s281 + $0x3c0] sm:$0xff]
        %v411 = vld [vmem:[%s281 + $0x3c8] sm:$0xff]
        %v412 = vld [vmem:[%s281 + $0x3d0] sm:$0xff]
        %v413 = vld [vmem:[%s281 + $0x3d8] sm:$0xff]
        %v414 = vld [vmem:[%s281 + $0x3e0] sm:$0xff]
        %v415 = vld [vmem:[%s281 + $0x3e8] sm:$0xff]
        %v416 = vld [vmem:[%s281 + $0x3f0] sm:$0xff]
        %v417 = vld [vmem:[%s281 + $0x3f8] sm:$0xff]
        %v418 = vld [vmem:[#allocation2] sm:$0xff]
        %v419 = vld [vmem:[#allocation2 + $0x8] sm:$0xff]
        %v420 = vld [vmem:[#allocation2 + $0x10] sm:$0xff]
        %v421 = vld [vmem:[#allocation2 + $0x18] sm:$0xff]
        %v422 = vld [vmem:[#allocation2 + $0x20] sm:$0xff]
        %v423 = vld [vmem:[#allocation2 + $0x28] sm:$0xff]
        %v424 = vld [vmem:[#allocation2 + $0x30] sm:$0xff]
        %v425 = vld [vmem:[#allocation2 + $0x38] sm:$0xff]
        %v426 = vld [vmem:[#allocation2 + $0x40] sm:$0xff]
        %v427 = vld [vmem:[#allocation2 + $0x48] sm:$0xff]
        %v428 = vld [vmem:[#allocation2 + $0x50] sm:$0xff]
        %v429 = vld [vmem:[#allocation2 + $0x58] sm:$0xff]
        %v430 = vld [vmem:[#allocation2 + $0x60] sm:$0xff]
        %v431 = vld [vmem:[#allocation2 + $0x68] sm:$0xff]
        %v432 = vld [vmem:[#allocation2 + $0x70] sm:$0xff]
        %v433 = vld [vmem:[#allocation2 + $0x78] sm:$0xff]
        %v434 = vld [vmem:[#allocation2 + $0x80] sm:$0xff]
        %v435 = vld [vmem:[#allocation2 + $0x88] sm:$0xff]
        %v436 = vld [vmem:[#allocation2 + $0x90] sm:$0xff]
        %v437 = vld [vmem:[#allocation2 + $0x98] sm:$0xff]
        %v438 = vld [vmem:[#allocation2 + $0xa0] sm:$0xff]
        %v439 = vld [vmem:[#allocation2 + $0xa8] sm:$0xff]
        %v440 = vld [vmem:[#allocation2 + $0xb0] sm:$0xff]
        %v441 = vld [vmem:[#allocation2 + $0xb8] sm:$0xff]
        %v442 = vld [vmem:[#allocation2 + $0xc0] sm:$0xff]
        %v443 = vld [vmem:[#allocation2 + $0xc8] sm:$0xff]
        %v444 = vld [vmem:[#allocation2 + $0xd0] sm:$0xff]
        %v445 = vld [vmem:[#allocation2 + $0xd8] sm:$0xff]
        %v446 = vld [vmem:[#allocation2 + $0xe0] sm:$0xff]
        %v447 = vld [vmem:[#allocation2 + $0xe8] sm:$0xff]
        %v448 = vld [vmem:[#allocation2 + $0xf0] sm:$0xff]
        %v449 = vld [vmem:[#allocation2 + $0xf8] sm:$0xff]
        %v450 = vld [vmem:[#allocation2 + $0x100] sm:$0xff]
        %v451 = vld [vmem:[#allocation2 + $0x108] sm:$0xff]
        %v452 = vld [vmem:[#allocation2 + $0x110] sm:$0xff]
        %v453 = vld [vmem:[#allocation2 + $0x118] sm:$0xff]
        %v454 = vld [vmem:[#allocation2 + $0x120] sm:$0xff]
        %v455 = vld [vmem:[#allocation2 + $0x128] sm:$0xff]
        %v456 = vld [vmem:[#allocation2 + $0x130] sm:$0xff]
        %v457 = vld [vmem:[#allocation2 + $0x138] sm:$0xff]
        %v458 = vld [vmem:[#allocation2 + $0x140] sm:$0xff]
        %v459 = vld [vmem:[#allocation2 + $0x148] sm:$0xff]
        %v460 = vld [vmem:[#allocation2 + $0x150] sm:$0xff]
        %v461 = vld [vmem:[#allocation2 + $0x158] sm:$0xff]
        %v462 = vld [vmem:[#allocation2 + $0x160] sm:$0xff]
        %v463 = vld [vmem:[#allocation2 + $0x168] sm:$0xff]
        %v464 = vld [vmem:[#allocation2 + $0x170] sm:$0xff]
        %v465 = vld [vmem:[#allocation2 + $0x178] sm:$0xff]
        %v466 = vld [vmem:[#allocation2 + $0x180] sm:$0xff]
        %v467 = vld [vmem:[#allocation2 + $0x188] sm:$0xff]
        %v468 = vld [vmem:[#allocation2 + $0x190] sm:$0xff]
        %v469 = vld [vmem:[#allocation2 + $0x198] sm:$0xff]
        %v470 = vld [vmem:[#allocation2 + $0x1a0] sm:$0xff]
        %v471 = vld [vmem:[#allocation2 + $0x1a8] sm:$0xff]
        %v472 = vld [vmem:[#allocation2 + $0x1b0] sm:$0xff]
        %v473 = vld [vmem:[#allocation2 + $0x1b8] sm:$0xff]
        %v474 = vld [vmem:[#allocation2 + $0x1c0] sm:$0xff]
        %v475 = vld [vmem:[#allocation2 + $0x1c8] sm:$0xff]
        %v476 = vld [vmem:[#allocation2 + $0x1d0] sm:$0xff]
        %v477 = vld [vmem:[#allocation2 + $0x1d8] sm:$0xff]
        %v478 = vld [vmem:[#allocation2 + $0x1e0] sm:$0xff]
        %v479 = vld [vmem:[#allocation2 + $0x1e8] sm:$0xff]
        %v480 = vld [vmem:[#allocation2 + $0x1f0] sm:$0xff]
        %v481 = vld [vmem:[#allocation2 + $0x1f8] sm:$0xff]
        %v482 = vld [vmem:[#allocation2 + $0x200] sm:$0xff]
        %v483 = vld [vmem:[#allocation2 + $0x208] sm:$0xff]
        %v484 = vld [vmem:[#allocation2 + $0x210] sm:$0xff]
        %v485 = vld [vmem:[#allocation2 + $0x218] sm:$0xff]
        %v486 = vld [vmem:[#allocation2 + $0x220] sm:$0xff]
        %v487 = vld [vmem:[#allocation2 + $0x228] sm:$0xff]
        %v488 = vld [vmem:[#allocation2 + $0x230] sm:$0xff]
        %v489 = vld [vmem:[#allocation2 + $0x238] sm:$0xff]
        %v490 = vld [vmem:[#allocation2 + $0x240] sm:$0xff]
        %v491 = vld [vmem:[#allocation2 + $0x248] sm:$0xff]
        %v492 = vld [vmem:[#allocation2 + $0x250] sm:$0xff]
        %v493 = vld [vmem:[#allocation2 + $0x258] sm:$0xff]
        %v494 = vld [vmem:[#allocation2 + $0x260] sm:$0xff]
        %v495 = vld [vmem:[#allocation2 + $0x268] sm:$0xff]
        %v496 = vld [vmem:[#allocation2 + $0x270] sm:$0xff]
        %v497 = vld [vmem:[#allocation2 + $0x278] sm:$0xff]
        %v498 = vld [vmem:[#allocation2 + $0x280] sm:$0xff]
        %v499 = vld [vmem:[#allocation2 + $0x288] sm:$0xff]
        %v500 = vld [vmem:[#allocation2 + $0x290] sm:$0xff]
        %v501 = vld [vmem:[#allocation2 + $0x298] sm:$0xff]
        %v502 = vld [vmem:[#allocation2 + $0x2a0] sm:$0xff]
        %v503 = vld [vmem:[#allocation2 + $0x2a8] sm:$0xff]
        %v504 = vld [vmem:[#allocation2 + $0x2b0] sm:$0xff]
        %v505 = vld [vmem:[#allocation2 + $0x2b8] sm:$0xff]
        %v506 = vld [vmem:[#allocation2 + $0x2c0] sm:$0xff]
        %v507 = vld [vmem:[#allocation2 + $0x2c8] sm:$0xff]
        %v508 = vld [vmem:[#allocation2 + $0x2d0] sm:$0xff]
        %v509 = vld [vmem:[#allocation2 + $0x2d8] sm:$0xff]
        %v510 = vld [vmem:[#allocation2 + $0x2e0] sm:$0xff]
        %v511 = vld [vmem:[#allocation2 + $0x2e8] sm:$0xff]
        %v512 = vld [vmem:[#allocation2 + $0x2f0] sm:$0xff]
        %v513 = vld [vmem:[#allocation2 + $0x2f8] sm:$0xff]
        %v514 = vld [vmem:[#allocation2 + $0x300] sm:$0xff]
        %v515 = vld [vmem:[#allocation2 + $0x308] sm:$0xff]
        %v516 = vld [vmem:[#allocation2 + $0x310] sm:$0xff]
        %v517 = vld [vmem:[#allocation2 + $0x318] sm:$0xff]
        %v518 = vld [vmem:[#allocation2 + $0x320] sm:$0xff]
        %v519 = vld [vmem:[#allocation2 + $0x328] sm:$0xff]
        %v520 = vld [vmem:[#allocation2 + $0x330] sm:$0xff]
        %v521 = vld [vmem:[#allocation2 + $0x338] sm:$0xff]
        %v522 = vld [vmem:[#allocation2 + $0x340] sm:$0xff]
        %v523 = vld [vmem:[#allocation2 + $0x348] sm:$0xff]
        %v524 = vld [vmem:[#allocation2 + $0x350] sm:$0xff]
        %v525 = vld [vmem:[#allocation2 + $0x358] sm:$0xff]
        %v526 = vld [vmem:[#allocation2 + $0x360] sm:$0xff]
        %v527 = vld [vmem:[#allocation2 + $0x368] sm:$0xff]
        %v528 = vld [vmem:[#allocation2 + $0x370] sm:$0xff]
        %v529 = vld [vmem:[#allocation2 + $0x378] sm:$0xff]
        %v530 = vld [vmem:[#allocation2 + $0x380] sm:$0xff]
        %v531 = vld [vmem:[#allocation2 + $0x388] sm:$0xff]
        %v532 = vld [vmem:[#allocation2 + $0x390] sm:$0xff]
        %v533 = vld [vmem:[#allocation2 + $0x398] sm:$0xff]
        %v534 = vld [vmem:[#allocation2 + $0x3a0] sm:$0xff]
        %v535 = vld [vmem:[#allocation2 + $0x3a8] sm:$0xff]
        %v536 = vld [vmem:[#allocation2 + $0x3b0] sm:$0xff]
        %v537 = vld [vmem:[#allocation2 + $0x3b8] sm:$0xff]
        %v538 = vld [vmem:[#allocation2 + $0x3c0] sm:$0xff]
        %v539 = vld [vmem:[#allocation2 + $0x3c8] sm:$0xff]
        %v540 = vld [vmem:[#allocation2 + $0x3d0] sm:$0xff]
        %v541 = vld [vmem:[#allocation2 + $0x3d8] sm:$0xff]
        %v542 = vld [vmem:[#allocation2 + $0x3e0] sm:$0xff]
        %v543 = vld [vmem:[#allocation2 + $0x3e8] sm:$0xff]
        %v544 = vld [vmem:[#allocation2 + $0x3f0] sm:$0xff]
        %v545 = vld [vmem:[#allocation2 + $0x3f8] sm:$0xff]
        %v546 = vadd.f32 %v290, %v418
        %v547 = vadd.f32 %v291, %v419
        %v548 = vadd.f32 %v292, %v420
        %v549 = vadd.f32 %v293, %v421
        %v550 = vadd.f32 %v294, %v422
        %v551 = vadd.f32 %v295, %v423
        %v552 = vadd.f32 %v296, %v424
        %v553 = vadd.f32 %v297, %v425
        %v554 = vadd.f32 %v298, %v426
        %v555 = vadd.f32 %v299, %v427
        %v556 = vadd.f32 %v300, %v428
        %v557 = vadd.f32 %v301, %v429
        %v558 = vadd.f32 %v302, %v430
        %v559 = vadd.f32 %v303, %v431
        %v560 = vadd.f32 %v304, %v432
        %v561 = vadd.f32 %v305, %v433
        %v562 = vadd.f32 %v306, %v434
        %v563 = vadd.f32 %v307, %v435
        %v564 = vadd.f32 %v308, %v436
        %v565 = vadd.f32 %v309, %v437
        %v566 = vadd.f32 %v310, %v438
        %v567 = vadd.f32 %v311, %v439
        %v568 = vadd.f32 %v312, %v440
        %v569 = vadd.f32 %v313, %v441
        %v570 = vadd.f32 %v314, %v442
        %v571 = vadd.f32 %v315, %v443
        %v572 = vadd.f32 %v316, %v444
        %v573 = vadd.f32 %v317, %v445
        %v574 = vadd.f32 %v318, %v446
        %v575 = vadd.f32 %v319, %v447
        %v576 = vadd.f32 %v320, %v448
        %v577 = vadd.f32 %v321, %v449
        %v578 = vadd.f32 %v322, %v450
        %v579 = vadd.f32 %v323, %v451
        %v580 = vadd.f32 %v324, %v452
        %v581 = vadd.f32 %v325, %v453
        %v582 = vadd.f32 %v326, %v454
        %v583 = vadd.f32 %v327, %v455
        %v584 = vadd.f32 %v328, %v456
        %v585 = vadd.f32 %v329, %v457
        %v586 = vadd.f32 %v330, %v458
        %v587 = vadd.f32 %v331, %v459
        %v588 = vadd.f32 %v332, %v460
        %v589 = vadd.f32 %v333, %v461
        %v590 = vadd.f32 %v334, %v462
        %v591 = vadd.f32 %v335, %v463
        %v592 = vadd.f32 %v336, %v464
        %v593 = vadd.f32 %v337, %v465
        %v594 = vadd.f32 %v338, %v466
        %v595 = vadd.f32 %v339, %v467
        %v596 = vadd.f32 %v340, %v468
        %v597 = vadd.f32 %v341, %v469
        %v598 = vadd.f32 %v342, %v470
        %v599 = vadd.f32 %v343, %v471
        %v600 = vadd.f32 %v344, %v472
        %v601 = vadd.f32 %v345, %v473
        %v602 = vadd.f32 %v346, %v474
        %v603 = vadd.f32 %v347, %v475
        %v604 = vadd.f32 %v348, %v476
        %v605 = vadd.f32 %v349, %v477
        %v606 = vadd.f32 %v350, %v478
        %v607 = vadd.f32 %v351, %v479
        %v608 = vadd.f32 %v352, %v480
        %v609 = vadd.f32 %v353, %v481
        %v610 = vadd.f32 %v354, %v482
        %v611 = vadd.f32 %v355, %v483
        %v612 = vadd.f32 %v356, %v484
        %v613 = vadd.f32 %v357, %v485
        %v614 = vadd.f32 %v358, %v486
        %v615 = vadd.f32 %v359, %v487
        %v616 = vadd.f32 %v360, %v488
        %v617 = vadd.f32 %v361, %v489
        %v618 = vadd.f32 %v362, %v490
        %v619 = vadd.f32 %v363, %v491
        %v620 = vadd.f32 %v364, %v492
        %v621 = vadd.f32 %v365, %v493
        %v622 = vadd.f32 %v366, %v494
        %v623 = vadd.f32 %v367, %v495
        %v624 = vadd.f32 %v368, %v496
        %v625 = vadd.f32 %v369, %v497
        %v626 = vadd.f32 %v370, %v498
        %v627 = vadd.f32 %v371, %v499
        %v628 = vadd.f32 %v372, %v500
        %v629 = vadd.f32 %v373, %v501
        %v630 = vadd.f32 %v374, %v502
        %v631 = vadd.f32 %v375, %v503
        %v632 = vadd.f32 %v376, %v504
        %v633 = vadd.f32 %v377, %v505
        %v634 = vadd.f32 %v378, %v506
        %v635 = vadd.f32 %v379, %v507
        %v636 = vadd.f32 %v380, %v508
        %v637 = vadd.f32 %v381, %v509
        %v638 = vadd.f32 %v382, %v510
        %v639 = vadd.f32 %v383, %v511
        %v640 = vadd.f32 %v384, %v512
        %v641 = vadd.f32 %v385, %v513
        %v642 = vadd.f32 %v386, %v514
        %v643 = vadd.f32 %v387, %v515
        %v644 = vadd.f32 %v388, %v516
        %v645 = vadd.f32 %v389, %v517
        %v646 = vadd.f32 %v390, %v518
        %v647 = vadd.f32 %v391, %v519
        %v648 = vadd.f32 %v392, %v520
        %v649 = vadd.f32 %v393, %v521
        %v650 = vadd.f32 %v394, %v522
        %v651 = vadd.f32 %v395, %v523
        %v652 = vadd.f32 %v396, %v524
        %v653 = vadd.f32 %v397, %v525
        %v654 = vadd.f32 %v398, %v526
        %v655 = vadd.f32 %v399, %v527
        %v656 = vadd.f32 %v400, %v528
        %v657 = vadd.f32 %v401, %v529
        %v658 = vadd.f32 %v402, %v530
        %v659 = vadd.f32 %v403, %v531
        %v660 = vadd.f32 %v404, %v532
        %v661 = vadd.f32 %v405, %v533
        %v662 = vadd.f32 %v406, %v534
        %v663 = vadd.f32 %v407, %v535
        %v664 = vadd.f32 %v408, %v536
        %v665 = vadd.f32 %v409, %v537
        %v666 = vadd.f32 %v410, %v538
        %v667 = vadd.f32 %v411, %v539
        %v668 = vadd.f32 %v412, %v540
        %v669 = vadd.f32 %v413, %v541
        %v670 = vadd.f32 %v414, %v542
        %v671 = vadd.f32 %v415, %v543
        %v672 = vadd.f32 %v416, %v544
        %v673 = vadd.f32 %v417, %v545
        %v674 = vld [vmem:[%s287] sm:$0xff]
        %v675 = vld [vmem:[%s287 + $0x8] sm:$0xff]
        %v676 = vld [vmem:[%s287 + $0x10] sm:$0xff]
        %v677 = vld [vmem:[%s287 + $0x18] sm:$0xff]
        %v678 = vld [vmem:[%s287 + $0x20] sm:$0xff]
        %v679 = vld [vmem:[%s287 + $0x28] sm:$0xff]
        %v680 = vld [vmem:[%s287 + $0x30] sm:$0xff]
        %v681 = vld [vmem:[%s287 + $0x38] sm:$0xff]
        %v682 = vld [vmem:[%s287 + $0x40] sm:$0xff]
        %v683 = vld [vmem:[%s287 + $0x48] sm:$0xff]
        %v684 = vld [vmem:[%s287 + $0x50] sm:$0xff]
        %v685 = vld [vmem:[%s287 + $0x58] sm:$0xff]
        %v686 = vld [vmem:[%s287 + $0x60] sm:$0xff]
        %v687 = vld [vmem:[%s287 + $0x68] sm:$0xff]
        %v688 = vld [vmem:[%s287 + $0x70] sm:$0xff]
        %v689 = vld [vmem:[%s287 + $0x78] sm:$0xff]
        %v690 = vld [vmem:[%s287 + $0x80] sm:$0xff]
        %v691 = vld [vmem:[%s287 + $0x88] sm:$0xff]
        %v692 = vld [vmem:[%s287 + $0x90] sm:$0xff]
        %v693 = vld [vmem:[%s287 + $0x98] sm:$0xff]
        %v694 = vld [vmem:[%s287 + $0xa0] sm:$0xff]
        %v695 = vld [vmem:[%s287 + $0xa8] sm:$0xff]
        %v696 = vld [vmem:[%s287 + $0xb0] sm:$0xff]
        %v697 = vld [vmem:[%s287 + $0xb8] sm:$0xff]
        %v698 = vld [vmem:[%s287 + $0xc0] sm:$0xff]
        %v699 = vld [vmem:[%s287 + $0xc8] sm:$0xff]
        %v700 = vld [vmem:[%s287 + $0xd0] sm:$0xff]
        %v701 = vld [vmem:[%s287 + $0xd8] sm:$0xff]
        %v702 = vld [vmem:[%s287 + $0xe0] sm:$0xff]
        %v703 = vld [vmem:[%s287 + $0xe8] sm:$0xff]
        %v704 = vld [vmem:[%s287 + $0xf0] sm:$0xff]
        %v705 = vld [vmem:[%s287 + $0xf8] sm:$0xff]
        %v706 = vld [vmem:[%s287 + $0x100] sm:$0xff]
        %v707 = vld [vmem:[%s287 + $0x108] sm:$0xff]
        %v708 = vld [vmem:[%s287 + $0x110] sm:$0xff]
        %v709 = vld [vmem:[%s287 + $0x118] sm:$0xff]
        %v710 = vld [vmem:[%s287 + $0x120] sm:$0xff]
        %v711 = vld [vmem:[%s287 + $0x128] sm:$0xff]
        %v712 = vld [vmem:[%s287 + $0x130] sm:$0xff]
        %v713 = vld [vmem:[%s287 + $0x138] sm:$0xff]
        %v714 = vld [vmem:[%s287 + $0x140] sm:$0xff]
        %v715 = vld [vmem:[%s287 + $0x148] sm:$0xff]
        %v716 = vld [vmem:[%s287 + $0x150] sm:$0xff]
        %v717 = vld [vmem:[%s287 + $0x158] sm:$0xff]
        %v718 = vld [vmem:[%s287 + $0x160] sm:$0xff]
        %v719 = vld [vmem:[%s287 + $0x168] sm:$0xff]
        %v720 = vld [vmem:[%s287 + $0x170] sm:$0xff]
        %v721 = vld [vmem:[%s287 + $0x178] sm:$0xff]
        %v722 = vld [vmem:[%s287 + $0x180] sm:$0xff]
        %v723 = vld [vmem:[%s287 + $0x188] sm:$0xff]
        %v724 = vld [vmem:[%s287 + $0x190] sm:$0xff]
        %v725 = vld [vmem:[%s287 + $0x198] sm:$0xff]
        %v726 = vld [vmem:[%s287 + $0x1a0] sm:$0xff]
        %v727 = vld [vmem:[%s287 + $0x1a8] sm:$0xff]
        %v728 = vld [vmem:[%s287 + $0x1b0] sm:$0xff]
        %v729 = vld [vmem:[%s287 + $0x1b8] sm:$0xff]
        %v730 = vld [vmem:[%s287 + $0x1c0] sm:$0xff]
        %v731 = vld [vmem:[%s287 + $0x1c8] sm:$0xff]
        %v732 = vld [vmem:[%s287 + $0x1d0] sm:$0xff]
        %v733 = vld [vmem:[%s287 + $0x1d8] sm:$0xff]
        %v734 = vld [vmem:[%s287 + $0x1e0] sm:$0xff]
        %v735 = vld [vmem:[%s287 + $0x1e8] sm:$0xff]
        %v736 = vld [vmem:[%s287 + $0x1f0] sm:$0xff]
        %v737 = vld [vmem:[%s287 + $0x1f8] sm:$0xff]
        %v738 = vld [vmem:[%s287 + $0x200] sm:$0xff]
        %v739 = vld [vmem:[%s287 + $0x208] sm:$0xff]
        %v740 = vld [vmem:[%s287 + $0x210] sm:$0xff]
        %v741 = vld [vmem:[%s287 + $0x218] sm:$0xff]
        %v742 = vld [vmem:[%s287 + $0x220] sm:$0xff]
        %v743 = vld [vmem:[%s287 + $0x228] sm:$0xff]
        %v744 = vld [vmem:[%s287 + $0x230] sm:$0xff]
        %v745 = vld [vmem:[%s287 + $0x238] sm:$0xff]
        %v746 = vld [vmem:[%s287 + $0x240] sm:$0xff]
        %v747 = vld [vmem:[%s287 + $0x248] sm:$0xff]
        %v748 = vld [vmem:[%s287 + $0x250] sm:$0xff]
        %v749 = vld [vmem:[%s287 + $0x258] sm:$0xff]
        %v750 = vld [vmem:[%s287 + $0x260] sm:$0xff]
        %v751 = vld [vmem:[%s287 + $0x268] sm:$0xff]
        %v752 = vld [vmem:[%s287 + $0x270] sm:$0xff]
        %v753 = vld [vmem:[%s287 + $0x278] sm:$0xff]
        %v754 = vld [vmem:[%s287 + $0x280] sm:$0xff]
        %v755 = vld [vmem:[%s287 + $0x288] sm:$0xff]
        %v756 = vld [vmem:[%s287 + $0x290] sm:$0xff]
        %v757 = vld [vmem:[%s287 + $0x298] sm:$0xff]
        %v758 = vld [vmem:[%s287 + $0x2a0] sm:$0xff]
        %v759 = vld [vmem:[%s287 + $0x2a8] sm:$0xff]
        %v760 = vld [vmem:[%s287 + $0x2b0] sm:$0xff]
        %v761 = vld [vmem:[%s287 + $0x2b8] sm:$0xff]
        %v762 = vld [vmem:[%s287 + $0x2c0] sm:$0xff]
        %v763 = vld [vmem:[%s287 + $0x2c8] sm:$0xff]
        %v764 = vld [vmem:[%s287 + $0x2d0] sm:$0xff]
        %v765 = vld [vmem:[%s287 + $0x2d8] sm:$0xff]
        %v766 = vld [vmem:[%s287 + $0x2e0] sm:$0xff]
        %v767 = vld [vmem:[%s287 + $0x2e8] sm:$0xff]
        %v768 = vld [vmem:[%s287 + $0x2f0] sm:$0xff]
        %v769 = vld [vmem:[%s287 + $0x2f8] sm:$0xff]
        %v770 = vld [vmem:[%s287 + $0x300] sm:$0xff]
        %v771 = vld [vmem:[%s287 + $0x308] sm:$0xff]
        %v772 = vld [vmem:[%s287 + $0x310] sm:$0xff]
        %v773 = vld [vmem:[%s287 + $0x318] sm:$0xff]
        %v774 = vld [vmem:[%s287 + $0x320] sm:$0xff]
        %v775 = vld [vmem:[%s287 + $0x328] sm:$0xff]
        %v776 = vld [vmem:[%s287 + $0x330] sm:$0xff]
        %v777 = vld [vmem:[%s287 + $0x338] sm:$0xff]
        %v778 = vld [vmem:[%s287 + $0x340] sm:$0xff]
        %v779 = vld [vmem:[%s287 + $0x348] sm:$0xff]
        %v780 = vld [vmem:[%s287 + $0x350] sm:$0xff]
        %v781 = vld [vmem:[%s287 + $0x358] sm:$0xff]
        %v782 = vld [vmem:[%s287 + $0x360] sm:$0xff]
        %v783 = vld [vmem:[%s287 + $0x368] sm:$0xff]
        %v784 = vld [vmem:[%s287 + $0x370] sm:$0xff]
        %v785 = vld [vmem:[%s287 + $0x378] sm:$0xff]
        %v786 = vld [vmem:[%s287 + $0x380] sm:$0xff]
        %v787 = vld [vmem:[%s287 + $0x388] sm:$0xff]
        %v788 = vld [vmem:[%s287 + $0x390] sm:$0xff]
        %v789 = vld [vmem:[%s287 + $0x398] sm:$0xff]
        %v790 = vld [vmem:[%s287 + $0x3a0] sm:$0xff]
        %v791 = vld [vmem:[%s287 + $0x3a8] sm:$0xff]
        %v792 = vld [vmem:[%s287 + $0x3b0] sm:$0xff]
        %v793 = vld [vmem:[%s287 + $0x3b8] sm:$0xff]
        %v794 = vld [vmem:[%s287 + $0x3c0] sm:$0xff]
        %v795 = vld [vmem:[%s287 + $0x3c8] sm:$0xff]
        %v796 = vld [vmem:[%s287 + $0x3d0] sm:$0xff]
        %v797 = vld [vmem:[%s287 + $0x3d8] sm:$0xff]
        %v798 = vld [vmem:[%s287 + $0x3e0] sm:$0xff]
        %v799 = vld [vmem:[%s287 + $0x3e8] sm:$0xff]
        %v800 = vld [vmem:[%s287 + $0x3f0] sm:$0xff]
        %v801 = vld [vmem:[%s287 + $0x3f8] sm:$0xff]
        %v802 = vld [vmem:[%s3] sm:$0x1]
        %vm803 = vcmp.eq.s32.totalorder %v674, 1
        %vm804 = vcmp.eq.s32.totalorder %v675, 1
        %vm805 = vcmp.eq.s32.totalorder %v676, 1
        %vm806 = vcmp.eq.s32.totalorder %v677, 1
        %vm807 = vcmp.eq.s32.totalorder %v678, 1
        %vm808 = vcmp.eq.s32.totalorder %v679, 1
        %vm809 = vcmp.eq.s32.totalorder %v680, 1
        %vm810 = vcmp.eq.s32.totalorder %v681, 1
        %vm811 = vcmp.eq.s32.totalorder %v682, 1
        %vm812 = vcmp.eq.s32.totalorder %v683, 1
        %vm813 = vcmp.eq.s32.totalorder %v684, 1
        %vm814 = vcmp.eq.s32.totalorder %v685, 1
        %vm815 = vcmp.eq.s32.totalorder %v686, 1
        %vm816 = vcmp.eq.s32.totalorder %v687, 1
        %vm817 = vcmp.eq.s32.totalorder %v688, 1
        %vm818 = vcmp.eq.s32.totalorder %v689, 1
        %vm819 = vcmp.eq.s32.totalorder %v690, 1
        %vm820 = vcmp.eq.s32.totalorder %v691, 1
        %vm821 = vcmp.eq.s32.totalorder %v692, 1
        %vm822 = vcmp.eq.s32.totalorder %v693, 1
        %vm823 = vcmp.eq.s32.totalorder %v694, 1
        %vm824 = vcmp.eq.s32.totalorder %v695, 1
        %vm825 = vcmp.eq.s32.totalorder %v696, 1
        %vm826 = vcmp.eq.s32.totalorder %v697, 1
        %vm827 = vcmp.eq.s32.totalorder %v698, 1
        %vm828 = vcmp.eq.s32.totalorder %v699, 1
        %vm829 = vcmp.eq.s32.totalorder %v700, 1
        %vm830 = vcmp.eq.s32.totalorder %v701, 1
        %vm831 = vcmp.eq.s32.totalorder %v702, 1
        %vm832 = vcmp.eq.s32.totalorder %v703, 1
        %vm833 = vcmp.eq.s32.totalorder %v704, 1
        %vm834 = vcmp.eq.s32.totalorder %v705, 1
        %vm835 = vcmp.eq.s32.totalorder %v706, 1
        %vm836 = vcmp.eq.s32.totalorder %v707, 1
        %vm837 = vcmp.eq.s32.totalorder %v708, 1
        %vm838 = vcmp.eq.s32.totalorder %v709, 1
        %vm839 = vcmp.eq.s32.totalorder %v710, 1
        %vm840 = vcmp.eq.s32.totalorder %v711, 1
        %vm841 = vcmp.eq.s32.totalorder %v712, 1
        %vm842 = vcmp.eq.s32.totalorder %v713, 1
        %vm843 = vcmp.eq.s32.totalorder %v714, 1
        %vm844 = vcmp.eq.s32.totalorder %v715, 1
        %vm845 = vcmp.eq.s32.totalorder %v716, 1
        %vm846 = vcmp.eq.s32.totalorder %v717, 1
        %vm847 = vcmp.eq.s32.totalorder %v718, 1
        %vm848 = vcmp.eq.s32.totalorder %v719, 1
        %vm849 = vcmp.eq.s32.totalorder %v720, 1
        %vm850 = vcmp.eq.s32.totalorder %v721, 1
        %vm851 = vcmp.eq.s32.totalorder %v722, 1
        %vm852 = vcmp.eq.s32.totalorder %v723, 1
        %vm853 = vcmp.eq.s32.totalorder %v724, 1
        %vm854 = vcmp.eq.s32.totalorder %v725, 1
        %vm855 = vcmp.eq.s32.totalorder %v726, 1
        %vm856 = vcmp.eq.s32.totalorder %v727, 1
        %vm857 = vcmp.eq.s32.totalorder %v728, 1
        %vm858 = vcmp.eq.s32.totalorder %v729, 1
        %vm859 = vcmp.eq.s32.totalorder %v730, 1
        %vm860 = vcmp.eq.s32.totalorder %v731, 1
        %vm861 = vcmp.eq.s32.totalorder %v732, 1
        %vm862 = vcmp.eq.s32.totalorder %v733, 1
        %vm863 = vcmp.eq.s32.totalorder %v734, 1
        %vm864 = vcmp.eq.s32.totalorder %v735, 1
        %vm865 = vcmp.eq.s32.totalorder %v736, 1
        %vm866 = vcmp.eq.s32.totalorder %v737, 1
        %vm867 = vcmp.eq.s32.totalorder %v738, 1
        %vm868 = vcmp.eq.s32.totalorder %v739, 1
        %vm869 = vcmp.eq.s32.totalorder %v740, 1
        %vm870 = vcmp.eq.s32.totalorder %v741, 1
        %vm871 = vcmp.eq.s32.totalorder %v742, 1
        %vm872 = vcmp.eq.s32.totalorder %v743, 1
        %vm873 = vcmp.eq.s32.totalorder %v744, 1
        %vm874 = vcmp.eq.s32.totalorder %v745, 1
        %vm875 = vcmp.eq.s32.totalorder %v746, 1
        %vm876 = vcmp.eq.s32.totalorder %v747, 1
        %vm877 = vcmp.eq.s32.totalorder %v748, 1
        %vm878 = vcmp.eq.s32.totalorder %v749, 1
        %vm879 = vcmp.eq.s32.totalorder %v750, 1
        %vm880 = vcmp.eq.s32.totalorder %v751, 1
        %vm881 = vcmp.eq.s32.totalorder %v752, 1
        %vm882 = vcmp.eq.s32.totalorder %v753, 1
        %vm883 = vcmp.eq.s32.totalorder %v754, 1
        %vm884 = vcmp.eq.s32.totalorder %v755, 1
        %vm885 = vcmp.eq.s32.totalorder %v756, 1
        %vm886 = vcmp.eq.s32.totalorder %v757, 1
        %vm887 = vcmp.eq.s32.totalorder %v758, 1
        %vm888 = vcmp.eq.s32.totalorder %v759, 1
        %vm889 = vcmp.eq.s32.totalorder %v760, 1
        %vm890 = vcmp.eq.s32.totalorder %v761, 1
        %vm891 = vcmp.eq.s32.totalorder %v762, 1
        %vm892 = vcmp.eq.s32.totalorder %v763, 1
        %vm893 = vcmp.eq.s32.totalorder %v764, 1
        %vm894 = vcmp.eq.s32.totalorder %v765, 1
        %vm895 = vcmp.eq.s32.totalorder %v766, 1
        %vm896 = vcmp.eq.s32.totalorder %v767, 1
        %vm897 = vcmp.eq.s32.totalorder %v768, 1
        %vm898 = vcmp.eq.s32.totalorder %v769, 1
        %vm899 = vcmp.eq.s32.totalorder %v770, 1
        %vm900 = vcmp.eq.s32.totalorder %v771, 1
        %vm901 = vcmp.eq.s32.totalorder %v772, 1
        %vm902 = vcmp.eq.s32.totalorder %v773, 1
        %vm903 = vcmp.eq.s32.totalorder %v774, 1
        %vm904 = vcmp.eq.s32.totalorder %v775, 1
        %vm905 = vcmp.eq.s32.totalorder %v776, 1
        %vm906 = vcmp.eq.s32.totalorder %v777, 1
        %vm907 = vcmp.eq.s32.totalorder %v778, 1
        %vm908 = vcmp.eq.s32.totalorder %v779, 1
        %vm909 = vcmp.eq.s32.totalorder %v780, 1
        %vm910 = vcmp.eq.s32.totalorder %v781, 1
        %vm911 = vcmp.eq.s32.totalorder %v782, 1
        %vm912 = vcmp.eq.s32.totalorder %v783, 1
        %vm913 = vcmp.eq.s32.totalorder %v784, 1
        %vm914 = vcmp.eq.s32.totalorder %v785, 1
        %vm915 = vcmp.eq.s32.totalorder %v786, 1
        %vm916 = vcmp.eq.s32.totalorder %v787, 1
        %vm917 = vcmp.eq.s32.totalorder %v788, 1
        %vm918 = vcmp.eq.s32.totalorder %v789, 1
        %vm919 = vcmp.eq.s32.totalorder %v790, 1
        %vm920 = vcmp.eq.s32.totalorder %v791, 1
        %vm921 = vcmp.eq.s32.totalorder %v792, 1
        %vm922 = vcmp.eq.s32.totalorder %v793, 1
        %vm923 = vcmp.eq.s32.totalorder %v794, 1
        %vm924 = vcmp.eq.s32.totalorder %v795, 1
        %vm925 = vcmp.eq.s32.totalorder %v796, 1
        %vm926 = vcmp.eq.s32.totalorder %v797, 1
        %vm927 = vcmp.eq.s32.totalorder %v798, 1
        %vm928 = vcmp.eq.s32.totalorder %v799, 1
        %vm929 = vcmp.eq.s32.totalorder %v800, 1
        %vm930 = vcmp.eq.s32.totalorder %v801, 1
        %v931 = vld [vmem:[%s3 + $0x1] sm:$0x1]
        %v932 = vsel %vm803, 1, 0
        %v933 = vsel %vm804, 1, 0
        %v934 = vsel %vm805, 1, 0
        %v935 = vsel %vm806, 1, 0
        %v936 = vsel %vm807, 1, 0
        %v937 = vsel %vm808, 1, 0
        %v938 = vsel %vm809, 1, 0
        %v939 = vsel %vm810, 1, 0
        %v940 = vsel %vm811, 1, 0
        %v941 = vsel %vm812, 1, 0
        %v942 = vsel %vm813, 1, 0
        %v943 = vsel %vm814, 1, 0
        %v944 = vsel %vm815, 1, 0
        %v945 = vsel %vm816, 1, 0
        %v946 = vsel %vm817, 1, 0
        %v947 = vsel %vm818, 1, 0
        %v948 = vsel %vm819, 1, 0
        %v949 = vsel %vm820, 1, 0
        %v950 = vsel %vm821, 1, 0
        %v951 = vsel %vm822, 1, 0
        %v952 = vsel %vm823, 1, 0
        %v953 = vsel %vm824, 1, 0
        %v954 = vsel %vm825, 1, 0
        %v955 = vsel %vm826, 1, 0
        %v956 = vsel %vm827, 1, 0
        %v957 = vsel %vm828, 1, 0
        %v958 = vsel %vm829, 1, 0
        %v959 = vsel %vm830, 1, 0
        %v960 = vsel %vm831, 1, 0
        %v961 = vsel %vm832, 1, 0
        %v962 = vsel %vm833, 1, 0
        %v963 = vsel %vm834, 1, 0
        %v964 = vsel %vm835, 1, 0
        %v965 = vsel %vm836, 1, 0
        %v966 = vsel %vm837, 1, 0
        %v967 = vsel %vm838, 1, 0
        %v968 = vsel %vm839, 1, 0
        %v969 = vsel %vm840, 1, 0
        %v970 = vsel %vm841, 1, 0
        %v971 = vsel %vm842, 1, 0
        %v972 = vsel %vm843, 1, 0
        %v973 = vsel %vm844, 1, 0
        %v974 = vsel %vm845, 1, 0
        %v975 = vsel %vm846, 1, 0
        %v976 = vsel %vm847, 1, 0
        %v977 = vsel %vm848, 1, 0
        %v978 = vsel %vm849, 1, 0
        %v979 = vsel %vm850, 1, 0
        %v980 = vsel %vm851, 1, 0
        %v981 = vsel %vm852, 1, 0
        %v982 = vsel %vm853, 1, 0
        %v983 = vsel %vm854, 1, 0
        %v984 = vsel %vm855, 1, 0
        %v985 = vsel %vm856, 1, 0
        %v986 = vsel %vm857, 1, 0
        %v987 = vsel %vm858, 1, 0
        %v988 = vsel %vm859, 1, 0
        %v989 = vsel %vm860, 1, 0
        %v990 = vsel %vm861, 1, 0
        %v991 = vsel %vm862, 1, 0
        %v992 = vsel %vm863, 1, 0
        %v993 = vsel %vm864, 1, 0
        %v994 = vsel %vm865, 1, 0
        %v995 = vsel %vm866, 1, 0
        %v996 = vsel %vm867, 1, 0
        %v997 = vsel %vm868, 1, 0
        %v998 = vsel %vm869, 1, 0
        %v999 = vsel %vm870, 1, 0
        %v1000 = vsel %vm871, 1, 0
        %v1001 = vsel %vm872, 1, 0
        %v1002 = vsel %vm873, 1, 0
        %v1003 = vsel %vm874, 1, 0
        %v1004 = vsel %vm875, 1, 0
        %v1005 = vsel %vm876, 1, 0
        %v1006 = vsel %vm877, 1, 0
        %v1007 = vsel %vm878, 1, 0
        %v1008 = vsel %vm879, 1, 0
        %v1009 = vsel %vm880, 1, 0
        %v1010 = vsel %vm881, 1, 0
        %v1011 = vsel %vm882, 1, 0
        %v1012 = vsel %vm883, 1, 0
        %v1013 = vsel %vm884, 1, 0
        %v1014 = vsel %vm885, 1, 0
        %v1015 = vsel %vm886, 1, 0
        %v1016 = vsel %vm887, 1, 0
        %v1017 = vsel %vm888, 1, 0
        %v1018 = vsel %vm889, 1, 0
        %v1019 = vsel %vm890, 1, 0
        %v1020 = vsel %vm891, 1, 0
        %v1021 = vsel %vm892, 1, 0
        %v1022 = vsel %vm893, 1, 0
        %v1023 = vsel %vm894, 1, 0
        %v1024 = vsel %vm895, 1, 0
        %v1025 = vsel %vm896, 1, 0
        %v1026 = vsel %vm897, 1, 0
        %v1027 = vsel %vm898, 1, 0
        %v1028 = vsel %vm899, 1, 0
        %v1029 = vsel %vm900, 1, 0
        %v1030 = vsel %vm901, 1, 0
        %v1031 = vsel %vm902, 1, 0
        %v1032 = vsel %vm903, 1, 0
        %v1033 = vsel %vm904, 1, 0
        %v1034 = vsel %vm905, 1, 0
        %v1035 = vsel %vm906, 1, 0
        %v1036 = vsel %vm907, 1, 0
        %v1037 = vsel %vm908, 1, 0
        %v1038 = vsel %vm909, 1, 0
        %v1039 = vsel %vm910, 1, 0
        %v1040 = vsel %vm911, 1, 0
        %v1041 = vsel %vm912, 1, 0
        %v1042 = vsel %vm913, 1, 0
        %v1043 = vsel %vm914, 1, 0
        %v1044 = vsel %vm915, 1, 0
        %v1045 = vsel %vm916, 1, 0
        %v1046 = vsel %vm917, 1, 0
        %v1047 = vsel %vm918, 1, 0
        %v1048 = vsel %vm919, 1, 0
        %v1049 = vsel %vm920, 1, 0
        %v1050 = vsel %vm921, 1, 0
        %v1051 = vsel %vm922, 1, 0
        %v1052 = vsel %vm923, 1, 0
        %v1053 = vsel %vm924, 1, 0
        %v1054 = vsel %vm925, 1, 0
        %v1055 = vsel %vm926, 1, 0
        %v1056 = vsel %vm927, 1, 0
        %v1057 = vsel %vm928, 1, 0
        %v1058 = vsel %vm929, 1, 0
        %v1059 = vsel %vm930, 1, 0
        %1060 = vset.pattern.permute.xlu0 0
        %1061 = vperm.xlu0 %1060, %v932
        %v1062 = vpop.permute.xlu0 %1061
        %1063 = vset.pattern.permute.xlu0 0
        %1064 = vperm.xlu0 %1063, %v933
        %v1065 = vpop.permute.xlu0 %1064
        %1066 = vset.pattern.permute.xlu0 0
        %1067 = vperm.xlu0 %1066, %v934
        %v1068 = vpop.permute.xlu0 %1067
        %1069 = vset.pattern.permute.xlu0 0
        %1070 = vperm.xlu0 %1069, %v935
        %v1071 = vpop.permute.xlu0 %1070
        %1072 = vset.pattern.permute.xlu0 0
        %1073 = vperm.xlu0 %1072, %v936
        %v1074 = vpop.permute.xlu0 %1073
        %1075 = vset.pattern.permute.xlu0 0
        %1076 = vperm.xlu0 %1075, %v937
        %v1077 = vpop.permute.xlu0 %1076
        %1078 = vset.pattern.permute.xlu0 0
        %1079 = vperm.xlu0 %1078, %v938
        %v1080 = vpop.permute.xlu0 %1079
        %1081 = vset.pattern.permute.xlu0 0
        %1082 = vperm.xlu0 %1081, %v939
        %v1083 = vpop.permute.xlu0 %1082
        %1084 = vset.pattern.permute.xlu0 0
        %1085 = vperm.xlu0 %1084, %v940
        %v1086 = vpop.permute.xlu0 %1085
        %1087 = vset.pattern.permute.xlu0 0
        %1088 = vperm.xlu0 %1087, %v941
        %v1089 = vpop.permute.xlu0 %1088
        %1090 = vset.pattern.permute.xlu0 0
        %1091 = vperm.xlu0 %1090, %v942
        %v1092 = vpop.permute.xlu0 %1091
        %1093 = vset.pattern.permute.xlu0 0
        %1094 = vperm.xlu0 %1093, %v943
        %v1095 = vpop.permute.xlu0 %1094
        %1096 = vset.pattern.permute.xlu0 0
        %1097 = vperm.xlu0 %1096, %v944
        %v1098 = vpop.permute.xlu0 %1097
        %1099 = vset.pattern.permute.xlu0 0
        %1100 = vperm.xlu0 %1099, %v945
        %v1101 = vpop.permute.xlu0 %1100
        %1102 = vset.pattern.permute.xlu0 0
        %1103 = vperm.xlu0 %1102, %v946
        %v1104 = vpop.permute.xlu0 %1103
        %1105 = vset.pattern.permute.xlu0 0
        %1106 = vperm.xlu0 %1105, %v947
        %v1107 = vpop.permute.xlu0 %1106
        %1108 = vset.pattern.permute.xlu0 0
        %1109 = vperm.xlu0 %1108, %v948
        %v1110 = vpop.permute.xlu0 %1109
        %1111 = vset.pattern.permute.xlu0 0
        %1112 = vperm.xlu0 %1111, %v949
        %v1113 = vpop.permute.xlu0 %1112
        %1114 = vset.pattern.permute.xlu0 0
        %1115 = vperm.xlu0 %1114, %v950
        %v1116 = vpop.permute.xlu0 %1115
        %1117 = vset.pattern.permute.xlu0 0
        %1118 = vperm.xlu0 %1117, %v951
        %v1119 = vpop.permute.xlu0 %1118
        %1120 = vset.pattern.permute.xlu0 0
        %1121 = vperm.xlu0 %1120, %v952
        %v1122 = vpop.permute.xlu0 %1121
        %1123 = vset.pattern.permute.xlu0 0
        %1124 = vperm.xlu0 %1123, %v953
        %v1125 = vpop.permute.xlu0 %1124
        %1126 = vset.pattern.permute.xlu0 0
        %1127 = vperm.xlu0 %1126, %v954
        %v1128 = vpop.permute.xlu0 %1127
        %1129 = vset.pattern.permute.xlu0 0
        %1130 = vperm.xlu0 %1129, %v955
        %v1131 = vpop.permute.xlu0 %1130
        %1132 = vset.pattern.permute.xlu0 0
        %1133 = vperm.xlu0 %1132, %v956
        %v1134 = vpop.permute.xlu0 %1133
        %1135 = vset.pattern.permute.xlu0 0
        %1136 = vperm.xlu0 %1135, %v957
        %v1137 = vpop.permute.xlu0 %1136
        %1138 = vset.pattern.permute.xlu0 0
        %1139 = vperm.xlu0 %1138, %v958
        %v1140 = vpop.permute.xlu0 %1139
        %1141 = vset.pattern.permute.xlu0 0
        %1142 = vperm.xlu0 %1141, %v959
        %v1143 = vpop.permute.xlu0 %1142
        %1144 = vset.pattern.permute.xlu0 0
        %1145 = vperm.xlu0 %1144, %v960
        %v1146 = vpop.permute.xlu0 %1145
        %1147 = vset.pattern.permute.xlu0 0
        %1148 = vperm.xlu0 %1147, %v961
        %v1149 = vpop.permute.xlu0 %1148
        %1150 = vset.pattern.permute.xlu0 0
        %1151 = vperm.xlu0 %1150, %v962
        %v1152 = vpop.permute.xlu0 %1151
        %1153 = vset.pattern.permute.xlu0 0
        %1154 = vperm.xlu0 %1153, %v963
        %v1155 = vpop.permute.xlu0 %1154
        %1156 = vset.pattern.permute.xlu0 0
        %1157 = vperm.xlu0 %1156, %v964
        %v1158 = vpop.permute.xlu0 %1157
        %1159 = vset.pattern.permute.xlu0 0
        %1160 = vperm.xlu0 %1159, %v965
        %v1161 = vpop.permute.xlu0 %1160
        %1162 = vset.pattern.permute.xlu0 0
        %1163 = vperm.xlu0 %1162, %v966
        %v1164 = vpop.permute.xlu0 %1163
        %1165 = vset.pattern.permute.xlu0 0
        %1166 = vperm.xlu0 %1165, %v967
        %v1167 = vpop.permute.xlu0 %1166
        %1168 = vset.pattern.permute.xlu0 0
        %1169 = vperm.xlu0 %1168, %v968
        %v1170 = vpop.permute.xlu0 %1169
        %1171 = vset.pattern.permute.xlu0 0
        %1172 = vperm.xlu0 %1171, %v969
        %v1173 = vpop.permute.xlu0 %1172
        %1174 = vset.pattern.permute.xlu0 0
        %1175 = vperm.xlu0 %1174, %v970
        %v1176 = vpop.permute.xlu0 %1175
        %1177 = vset.pattern.permute.xlu0 0
        %1178 = vperm.xlu0 %1177, %v971
        %v1179 = vpop.permute.xlu0 %1178
        %1180 = vset.pattern.permute.xlu0 0
        %1181 = vperm.xlu0 %1180, %v972
        %v1182 = vpop.permute.xlu0 %1181
        %1183 = vset.pattern.permute.xlu0 0
        %1184 = vperm.xlu0 %1183, %v973
        %v1185 = vpop.permute.xlu0 %1184
        %1186 = vset.pattern.permute.xlu0 0
        %1187 = vperm.xlu0 %1186, %v974
        %v1188 = vpop.permute.xlu0 %1187
        %1189 = vset.pattern.permute.xlu0 0
        %1190 = vperm.xlu0 %1189, %v975
        %v1191 = vpop.permute.xlu0 %1190
        %1192 = vset.pattern.permute.xlu0 0
        %1193 = vperm.xlu0 %1192, %v976
        %v1194 = vpop.permute.xlu0 %1193
        %1195 = vset.pattern.permute.xlu0 0
        %1196 = vperm.xlu0 %1195, %v977
        %v1197 = vpop.permute.xlu0 %1196
        %1198 = vset.pattern.permute.xlu0 0
        %1199 = vperm.xlu0 %1198, %v978
        %v1200 = vpop.permute.xlu0 %1199
        %1201 = vset.pattern.permute.xlu0 0
        %1202 = vperm.xlu0 %1201, %v979
        %v1203 = vpop.permute.xlu0 %1202
        %1204 = vset.pattern.permute.xlu0 0
        %1205 = vperm.xlu0 %1204, %v980
        %v1206 = vpop.permute.xlu0 %1205
        %1207 = vset.pattern.permute.xlu0 0
        %1208 = vperm.xlu0 %1207, %v981
        %v1209 = vpop.permute.xlu0 %1208
        %1210 = vset.pattern.permute.xlu0 0
        %1211 = vperm.xlu0 %1210, %v982
        %v1212 = vpop.permute.xlu0 %1211
        %1213 = vset.pattern.permute.xlu0 0
        %1214 = vperm.xlu0 %1213, %v983
        %v1215 = vpop.permute.xlu0 %1214
        %1216 = vset.pattern.permute.xlu0 0
        %1217 = vperm.xlu0 %1216, %v984
        %v1218 = vpop.permute.xlu0 %1217
        %1219 = vset.pattern.permute.xlu0 0
        %1220 = vperm.xlu0 %1219, %v985
        %v1221 = vpop.permute.xlu0 %1220
        %1222 = vset.pattern.permute.xlu0 0
        %1223 = vperm.xlu0 %1222, %v986
        %v1224 = vpop.permute.xlu0 %1223
        %1225 = vset.pattern.permute.xlu0 0
        %1226 = vperm.xlu0 %1225, %v987
        %v1227 = vpop.permute.xlu0 %1226
        %1228 = vset.pattern.permute.xlu0 0
        %1229 = vperm.xlu0 %1228, %v988
        %v1230 = vpop.permute.xlu0 %1229
        %1231 = vset.pattern.permute.xlu0 0
        %1232 = vperm.xlu0 %1231, %v989
        %v1233 = vpop.permute.xlu0 %1232
        %1234 = vset.pattern.permute.xlu0 0
        %1235 = vperm.xlu0 %1234, %v990
        %v1236 = vpop.permute.xlu0 %1235
        %1237 = vset.pattern.permute.xlu0 0
        %1238 = vperm.xlu0 %1237, %v991
        %v1239 = vpop.permute.xlu0 %1238
        %1240 = vset.pattern.permute.xlu0 0
        %1241 = vperm.xlu0 %1240, %v992
        %v1242 = vpop.permute.xlu0 %1241
        %1243 = vset.pattern.permute.xlu0 0
        %1244 = vperm.xlu0 %1243, %v993
        %v1245 = vpop.permute.xlu0 %1244
        %1246 = vset.pattern.permute.xlu0 0
        %1247 = vperm.xlu0 %1246, %v994
        %v1248 = vpop.permute.xlu0 %1247
        %1249 = vset.pattern.permute.xlu0 0
        %1250 = vperm.xlu0 %1249, %v995
        %v1251 = vpop.permute.xlu0 %1250
        %1252 = vset.pattern.permute.xlu0 0
        %1253 = vperm.xlu0 %1252, %v996
        %v1254 = vpop.permute.xlu0 %1253
        %1255 = vset.pattern.permute.xlu0 0
        %1256 = vperm.xlu0 %1255, %v997
        %v1257 = vpop.permute.xlu0 %1256
        %1258 = vset.pattern.permute.xlu0 0
        %1259 = vperm.xlu0 %1258, %v998
        %v1260 = vpop.permute.xlu0 %1259
        %1261 = vset.pattern.permute.xlu0 0
        %1262 = vperm.xlu0 %1261, %v999
        %v1263 = vpop.permute.xlu0 %1262
        %1264 = vset.pattern.permute.xlu0 0
        %1265 = vperm.xlu0 %1264, %v1000
        %v1266 = vpop.permute.xlu0 %1265
        %1267 = vset.pattern.permute.xlu0 0
        %1268 = vperm.xlu0 %1267, %v1001
        %v1269 = vpop.permute.xlu0 %1268
        %1270 = vset.pattern.permute.xlu0 0
        %1271 = vperm.xlu0 %1270, %v1002
        %v1272 = vpop.permute.xlu0 %1271
        %1273 = vset.pattern.permute.xlu0 0
        %1274 = vperm.xlu0 %1273, %v1003
        %v1275 = vpop.permute.xlu0 %1274
        %1276 = vset.pattern.permute.xlu0 0
        %1277 = vperm.xlu0 %1276, %v1004
        %v1278 = vpop.permute.xlu0 %1277
        %1279 = vset.pattern.permute.xlu0 0
        %1280 = vperm.xlu0 %1279, %v1005
        %v1281 = vpop.permute.xlu0 %1280
        %1282 = vset.pattern.permute.xlu0 0
        %1283 = vperm.xlu0 %1282, %v1006
        %v1284 = vpop.permute.xlu0 %1283
        %1285 = vset.pattern.permute.xlu0 0
        %1286 = vperm.xlu0 %1285, %v1007
        %v1287 = vpop.permute.xlu0 %1286
        %1288 = vset.pattern.permute.xlu0 0
        %1289 = vperm.xlu0 %1288, %v1008
        %v1290 = vpop.permute.xlu0 %1289
        %1291 = vset.pattern.permute.xlu0 0
        %1292 = vperm.xlu0 %1291, %v1009
        %v1293 = vpop.permute.xlu0 %1292
        %1294 = vset.pattern.permute.xlu0 0
        %1295 = vperm.xlu0 %1294, %v1010
        %v1296 = vpop.permute.xlu0 %1295
        %1297 = vset.pattern.permute.xlu0 0
        %1298 = vperm.xlu0 %1297, %v1011
        %v1299 = vpop.permute.xlu0 %1298
        %1300 = vset.pattern.permute.xlu0 0
        %1301 = vperm.xlu0 %1300, %v1012
        %v1302 = vpop.permute.xlu0 %1301
        %1303 = vset.pattern.permute.xlu0 0
        %1304 = vperm.xlu0 %1303, %v1013
        %v1305 = vpop.permute.xlu0 %1304
        %1306 = vset.pattern.permute.xlu0 0
        %1307 = vperm.xlu0 %1306, %v1014
        %v1308 = vpop.permute.xlu0 %1307
        %1309 = vset.pattern.permute.xlu0 0
        %1310 = vperm.xlu0 %1309, %v1015
        %v1311 = vpop.permute.xlu0 %1310
        %1312 = vset.pattern.permute.xlu0 0
        %1313 = vperm.xlu0 %1312, %v1016
        %v1314 = vpop.permute.xlu0 %1313
        %1315 = vset.pattern.permute.xlu0 0
        %1316 = vperm.xlu0 %1315, %v1017
        %v1317 = vpop.permute.xlu0 %1316
        %1318 = vset.pattern.permute.xlu0 0
        %1319 = vperm.xlu0 %1318, %v1018
        %v1320 = vpop.permute.xlu0 %1319
        %1321 = vset.pattern.permute.xlu0 0
        %1322 = vperm.xlu0 %1321, %v1019
        %v1323 = vpop.permute.xlu0 %1322
        %1324 = vset.pattern.permute.xlu0 0
        %1325 = vperm.xlu0 %1324, %v1020
        %v1326 = vpop.permute.xlu0 %1325
        %1327 = vset.pattern.permute.xlu0 0
        %1328 = vperm.xlu0 %1327, %v1021
        %v1329 = vpop.permute.xlu0 %1328
        %1330 = vset.pattern.permute.xlu0 0
        %1331 = vperm.xlu0 %1330, %v1022
        %v1332 = vpop.permute.xlu0 %1331
        %1333 = vset.pattern.permute.xlu0 0
        %1334 = vperm.xlu0 %1333, %v1023
        %v1335 = vpop.permute.xlu0 %1334
        %1336 = vset.pattern.permute.xlu0 0
        %1337 = vperm.xlu0 %1336, %v1024
        %v1338 = vpop.permute.xlu0 %1337
        %1339 = vset.pattern.permute.xlu0 0
        %1340 = vperm.xlu0 %1339, %v1025
        %v1341 = vpop.permute.xlu0 %1340
        %1342 = vset.pattern.permute.xlu0 0
        %1343 = vperm.xlu0 %1342, %v1026
        %v1344 = vpop.permute.xlu0 %1343
        %1345 = vset.pattern.permute.xlu0 0
        %1346 = vperm.xlu0 %1345, %v1027
        %v1347 = vpop.permute.xlu0 %1346
        %1348 = vset.pattern.permute.xlu0 0
        %1349 = vperm.xlu0 %1348, %v1028
        %v1350 = vpop.permute.xlu0 %1349
        %1351 = vset.pattern.permute.xlu0 0
        %1352 = vperm.xlu0 %1351, %v1029
        %v1353 = vpop.permute.xlu0 %1352
        %1354 = vset.pattern.permute.xlu0 0
        %1355 = vperm.xlu0 %1354, %v1030
        %v1356 = vpop.permute.xlu0 %1355
        %1357 = vset.pattern.permute.xlu0 0
        %1358 = vperm.xlu0 %1357, %v1031
        %v1359 = vpop.permute.xlu0 %1358
        %1360 = vset.pattern.permute.xlu0 0
        %1361 = vperm.xlu0 %1360, %v1032
        %v1362 = vpop.permute.xlu0 %1361
        %1363 = vset.pattern.permute.xlu0 0
        %1364 = vperm.xlu0 %1363, %v1033
        %v1365 = vpop.permute.xlu0 %1364
        %1366 = vset.pattern.permute.xlu0 0
        %1367 = vperm.xlu0 %1366, %v1034
        %v1368 = vpop.permute.xlu0 %1367
        %1369 = vset.pattern.permute.xlu0 0
        %1370 = vperm.xlu0 %1369, %v1035
        %v1371 = vpop.permute.xlu0 %1370
        %1372 = vset.pattern.permute.xlu0 0
        %1373 = vperm.xlu0 %1372, %v1036
        %v1374 = vpop.permute.xlu0 %1373
        %1375 = vset.pattern.permute.xlu0 0
        %1376 = vperm.xlu0 %1375, %v1037
        %v1377 = vpop.permute.xlu0 %1376
        %1378 = vset.pattern.permute.xlu0 0
        %1379 = vperm.xlu0 %1378, %v1038
        %v1380 = vpop.permute.xlu0 %1379
        %1381 = vset.pattern.permute.xlu0 0
        %1382 = vperm.xlu0 %1381, %v1039
        %v1383 = vpop.permute.xlu0 %1382
        %1384 = vset.pattern.permute.xlu0 0
        %1385 = vperm.xlu0 %1384, %v1040
        %v1386 = vpop.permute.xlu0 %1385
        %1387 = vset.pattern.permute.xlu0 0
        %1388 = vperm.xlu0 %1387, %v1041
        %v1389 = vpop.permute.xlu0 %1388
        %1390 = vset.pattern.permute.xlu0 0
        %1391 = vperm.xlu0 %1390, %v1042
        %v1392 = vpop.permute.xlu0 %1391
        %1393 = vset.pattern.permute.xlu0 0
        %1394 = vperm.xlu0 %1393, %v1043
        %v1395 = vpop.permute.xlu0 %1394
        %1396 = vset.pattern.permute.xlu0 0
        %1397 = vperm.xlu0 %1396, %v1044
        %v1398 = vpop.permute.xlu0 %1397
        %1399 = vset.pattern.permute.xlu0 0
        %1400 = vperm.xlu0 %1399, %v1045
        %v1401 = vpop.permute.xlu0 %1400
        %1402 = vset.pattern.permute.xlu0 0
        %1403 = vperm.xlu0 %1402, %v1046
        %v1404 = vpop.permute.xlu0 %1403
        %1405 = vset.pattern.permute.xlu0 0
        %1406 = vperm.xlu0 %1405, %v1047
        %v1407 = vpop.permute.xlu0 %1406
        %1408 = vset.pattern.permute.xlu0 0
        %1409 = vperm.xlu0 %1408, %v1048
        %v1410 = vpop.permute.xlu0 %1409
        %1411 = vset.pattern.permute.xlu0 0
        %1412 = vperm.xlu0 %1411, %v1049
        %v1413 = vpop.permute.xlu0 %1412
        %1414 = vset.pattern.permute.xlu0 0
        %1415 = vperm.xlu0 %1414, %v1050
        %v1416 = vpop.permute.xlu0 %1415
        %1417 = vset.pattern.permute.xlu0 0
        %1418 = vperm.xlu0 %1417, %v1051
        %v1419 = vpop.permute.xlu0 %1418
        %1420 = vset.pattern.permute.xlu0 0
        %1421 = vperm.xlu0 %1420, %v1052
        %v1422 = vpop.permute.xlu0 %1421
        %1423 = vset.pattern.permute.xlu0 0
        %1424 = vperm.xlu0 %1423, %v1053
        %v1425 = vpop.permute.xlu0 %1424
        %1426 = vset.pattern.permute.xlu0 0
        %1427 = vperm.xlu0 %1426, %v1054
        %v1428 = vpop.permute.xlu0 %1427
        %1429 = vset.pattern.permute.xlu0 0
        %1430 = vperm.xlu0 %1429, %v1055
        %v1431 = vpop.permute.xlu0 %1430
        %1432 = vset.pattern.permute.xlu0 0
        %1433 = vperm.xlu0 %1432, %v1056
        %v1434 = vpop.permute.xlu0 %1433
        %1435 = vset.pattern.permute.xlu0 0
        %1436 = vperm.xlu0 %1435, %v1057
        %v1437 = vpop.permute.xlu0 %1436
        %1438 = vset.pattern.permute.xlu0 0
        %1439 = vperm.xlu0 %1438, %v1058
        %v1440 = vpop.permute.xlu0 %1439
        %1441 = vset.pattern.permute.xlu0 0
        %1442 = vperm.xlu0 %1441, %v1059
        %v1443 = vpop.permute.xlu0 %1442
        %vm1444 = vcmp.eq.s32.totalorder %v1062, 1
        %vm1445 = vcmp.eq.s32.totalorder %v1065, 1
        %vm1446 = vcmp.eq.s32.totalorder %v1068, 1
        %vm1447 = vcmp.eq.s32.totalorder %v1071, 1
        %vm1448 = vcmp.eq.s32.totalorder %v1074, 1
        %vm1449 = vcmp.eq.s32.totalorder %v1077, 1
        %vm1450 = vcmp.eq.s32.totalorder %v1080, 1
        %vm1451 = vcmp.eq.s32.totalorder %v1083, 1
        %vm1452 = vcmp.eq.s32.totalorder %v1086, 1
        %vm1453 = vcmp.eq.s32.totalorder %v1089, 1
        %vm1454 = vcmp.eq.s32.totalorder %v1092, 1
        %vm1455 = vcmp.eq.s32.totalorder %v1095, 1
        %vm1456 = vcmp.eq.s32.totalorder %v1098, 1
        %vm1457 = vcmp.eq.s32.totalorder %v1101, 1
        %vm1458 = vcmp.eq.s32.totalorder %v1104, 1
        %vm1459 = vcmp.eq.s32.totalorder %v1107, 1
        %vm1460 = vcmp.eq.s32.totalorder %v1110, 1
        %vm1461 = vcmp.eq.s32.totalorder %v1113, 1
        %vm1462 = vcmp.eq.s32.totalorder %v1116, 1
        %vm1463 = vcmp.eq.s32.totalorder %v1119, 1
        %vm1464 = vcmp.eq.s32.totalorder %v1122, 1
        %vm1465 = vcmp.eq.s32.totalorder %v1125, 1
        %vm1466 = vcmp.eq.s32.totalorder %v1128, 1
        %vm1467 = vcmp.eq.s32.totalorder %v1131, 1
        %vm1468 = vcmp.eq.s32.totalorder %v1134, 1
        %vm1469 = vcmp.eq.s32.totalorder %v1137, 1
        %vm1470 = vcmp.eq.s32.totalorder %v1140, 1
        %vm1471 = vcmp.eq.s32.totalorder %v1143, 1
        %vm1472 = vcmp.eq.s32.totalorder %v1146, 1
        %vm1473 = vcmp.eq.s32.totalorder %v1149, 1
        %vm1474 = vcmp.eq.s32.totalorder %v1152, 1
        %vm1475 = vcmp.eq.s32.totalorder %v1155, 1
        %vm1476 = vcmp.eq.s32.totalorder %v1158, 1
        %vm1477 = vcmp.eq.s32.totalorder %v1161, 1
        %vm1478 = vcmp.eq.s32.totalorder %v1164, 1
        %vm1479 = vcmp.eq.s32.totalorder %v1167, 1
        %vm1480 = vcmp.eq.s32.totalorder %v1170, 1
        %vm1481 = vcmp.eq.s32.totalorder %v1173, 1
        %vm1482 = vcmp.eq.s32.totalorder %v1176, 1
        %vm1483 = vcmp.eq.s32.totalorder %v1179, 1
        %vm1484 = vcmp.eq.s32.totalorder %v1182, 1
        %vm1485 = vcmp.eq.s32.totalorder %v1185, 1
        %vm1486 = vcmp.eq.s32.totalorder %v1188, 1
        %vm1487 = vcmp.eq.s32.totalorder %v1191, 1
        %vm1488 = vcmp.eq.s32.totalorder %v1194, 1
        %vm1489 = vcmp.eq.s32.totalorder %v1197, 1
        %vm1490 = vcmp.eq.s32.totalorder %v1200, 1
        %vm1491 = vcmp.eq.s32.totalorder %v1203, 1
        %vm1492 = vcmp.eq.s32.totalorder %v1206, 1
        %vm1493 = vcmp.eq.s32.totalorder %v1209, 1
        %vm1494 = vcmp.eq.s32.totalorder %v1212, 1
        %vm1495 = vcmp.eq.s32.totalorder %v1215, 1
        %vm1496 = vcmp.eq.s32.totalorder %v1218, 1
        %vm1497 = vcmp.eq.s32.totalorder %v1221, 1
        %vm1498 = vcmp.eq.s32.totalorder %v1224, 1
        %vm1499 = vcmp.eq.s32.totalorder %v1227, 1
        %vm1500 = vcmp.eq.s32.totalorder %v1230, 1
        %vm1501 = vcmp.eq.s32.totalorder %v1233, 1
        %vm1502 = vcmp.eq.s32.totalorder %v1236, 1
        %vm1503 = vcmp.eq.s32.totalorder %v1239, 1
        %vm1504 = vcmp.eq.s32.totalorder %v1242, 1
        %vm1505 = vcmp.eq.s32.totalorder %v1245, 1
        %vm1506 = vcmp.eq.s32.totalorder %v1248, 1
        %vm1507 = vcmp.eq.s32.totalorder %v1251, 1
        %vm1508 = vcmp.eq.s32.totalorder %v1254, 1
        %vm1509 = vcmp.eq.s32.totalorder %v1257, 1
        %vm1510 = vcmp.eq.s32.totalorder %v1260, 1
        %vm1511 = vcmp.eq.s32.totalorder %v1263, 1
        %vm1512 = vcmp.eq.s32.totalorder %v1266, 1
        %vm1513 = vcmp.eq.s32.totalorder %v1269, 1
        %vm1514 = vcmp.eq.s32.totalorder %v1272, 1
        %vm1515 = vcmp.eq.s32.totalorder %v1275, 1
        %vm1516 = vcmp.eq.s32.totalorder %v1278, 1
        %vm1517 = vcmp.eq.s32.totalorder %v1281, 1
        %vm1518 = vcmp.eq.s32.totalorder %v1284, 1
        %vm1519 = vcmp.eq.s32.totalorder %v1287, 1
        %vm1520 = vcmp.eq.s32.totalorder %v1290, 1
        %vm1521 = vcmp.eq.s32.totalorder %v1293, 1
        %vm1522 = vcmp.eq.s32.totalorder %v1296, 1
        %vm1523 = vcmp.eq.s32.totalorder %v1299, 1
        %vm1524 = vcmp.eq.s32.totalorder %v1302, 1
        %vm1525 = vcmp.eq.s32.totalorder %v1305, 1
        %vm1526 = vcmp.eq.s32.totalorder %v1308, 1
        %vm1527 = vcmp.eq.s32.totalorder %v1311, 1
        %vm1528 = vcmp.eq.s32.totalorder %v1314, 1
        %vm1529 = vcmp.eq.s32.totalorder %v1317, 1
        %vm1530 = vcmp.eq.s32.totalorder %v1320, 1
        %vm1531 = vcmp.eq.s32.totalorder %v1323, 1
        %vm1532 = vcmp.eq.s32.totalorder %v1326, 1
        %vm1533 = vcmp.eq.s32.totalorder %v1329, 1
        %vm1534 = vcmp.eq.s32.totalorder %v1332, 1
        %vm1535 = vcmp.eq.s32.totalorder %v1335, 1
        %vm1536 = vcmp.eq.s32.totalorder %v1338, 1
        %vm1537 = vcmp.eq.s32.totalorder %v1341, 1
        %vm1538 = vcmp.eq.s32.totalorder %v1344, 1
        %vm1539 = vcmp.eq.s32.totalorder %v1347, 1
        %vm1540 = vcmp.eq.s32.totalorder %v1350, 1
        %vm1541 = vcmp.eq.s32.totalorder %v1353, 1
        %vm1542 = vcmp.eq.s32.totalorder %v1356, 1
        %vm1543 = vcmp.eq.s32.totalorder %v1359, 1
        %vm1544 = vcmp.eq.s32.totalorder %v1362, 1
        %vm1545 = vcmp.eq.s32.totalorder %v1365, 1
        %vm1546 = vcmp.eq.s32.totalorder %v1368, 1
        %vm1547 = vcmp.eq.s32.totalorder %v1371, 1
        %vm1548 = vcmp.eq.s32.totalorder %v1374, 1
        %vm1549 = vcmp.eq.s32.totalorder %v1377, 1
        %vm1550 = vcmp.eq.s32.totalorder %v1380, 1
        %vm1551 = vcmp.eq.s32.totalorder %v1383, 1
        %vm1552 = vcmp.eq.s32.totalorder %v1386, 1
        %vm1553 = vcmp.eq.s32.totalorder %v1389, 1
        %vm1554 = vcmp.eq.s32.totalorder %v1392, 1
        %vm1555 = vcmp.eq.s32.totalorder %v1395, 1
        %vm1556 = vcmp.eq.s32.totalorder %v1398, 1
        %vm1557 = vcmp.eq.s32.totalorder %v1401, 1
        %vm1558 = vcmp.eq.s32.totalorder %v1404, 1
        %vm1559 = vcmp.eq.s32.totalorder %v1407, 1
        %vm1560 = vcmp.eq.s32.totalorder %v1410, 1
        %vm1561 = vcmp.eq.s32.totalorder %v1413, 1
        %vm1562 = vcmp.eq.s32.totalorder %v1416, 1
        %vm1563 = vcmp.eq.s32.totalorder %v1419, 1
        %vm1564 = vcmp.eq.s32.totalorder %v1422, 1
        %vm1565 = vcmp.eq.s32.totalorder %v1425, 1
        %vm1566 = vcmp.eq.s32.totalorder %v1428, 1
        %vm1567 = vcmp.eq.s32.totalorder %v1431, 1
        %vm1568 = vcmp.eq.s32.totalorder %v1434, 1
        %vm1569 = vcmp.eq.s32.totalorder %v1437, 1
        %vm1570 = vcmp.eq.s32.totalorder %v1440, 1
        %vm1571 = vcmp.eq.s32.totalorder %v1443, 1
        %v1572 = vlaneseq
        %v1573 = vshrl.u32 %v1572, 7
        %v1574 = vsub.s32 0, %v1573
        %v1575 = vrot.slane %v931, %v1574
        %v1576 = vlaneseq
        %v1577 = vshrl.u32 %v1576, 7
        %v1578 = vsub.s32 0, %v1577
        %v1579 = vrot.slane %v802, %v1578
        %v1580 = vsel %vm1444, %v1575, %v1579
        %v1581 = vsel %vm1445, %v1575, %v1579
        %v1582 = vsel %vm1446, %v1575, %v1579
        %v1583 = vsel %vm1447, %v1575, %v1579
        %v1584 = vsel %vm1448, %v1575, %v1579
        %v1585 = vsel %vm1449, %v1575, %v1579
        %v1586 = vsel %vm1450, %v1575, %v1579
        %v1587 = vsel %vm1451, %v1575, %v1579
        %v1588 = vsel %vm1452, %v1575, %v1579
        %v1589 = vsel %vm1453, %v1575, %v1579
        %v1590 = vsel %vm1454, %v1575, %v1579
        %v1591 = vsel %vm1455, %v1575, %v1579
        %v1592 = vsel %vm1456, %v1575, %v1579
        %v1593 = vsel %vm1457, %v1575, %v1579
        %v1594 = vsel %vm1458, %v1575, %v1579
        %v1595 = vsel %vm1459, %v1575, %v1579
        %v1596 = vsel %vm1460, %v1575, %v1579
        %v1597 = vsel %vm1461, %v1575, %v1579
        %v1598 = vsel %vm1462, %v1575, %v1579
        %v1599 = vsel %vm1463, %v1575, %v1579
        %v1600 = vsel %vm1464, %v1575, %v1579
        %v1601 = vsel %vm1465, %v1575, %v1579
        %v1602 = vsel %vm1466, %v1575, %v1579
        %v1603 = vsel %vm1467, %v1575, %v1579
        %v1604 = vsel %vm1468, %v1575, %v1579
        %v1605 = vsel %vm1469, %v1575, %v1579
        %v1606 = vsel %vm1470, %v1575, %v1579
        %v1607 = vsel %vm1471, %v1575, %v1579
        %v1608 = vsel %vm1472, %v1575, %v1579
        %v1609 = vsel %vm1473, %v1575, %v1579
        %v1610 = vsel %vm1474, %v1575, %v1579
        %v1611 = vsel %vm1475, %v1575, %v1579
        %v1612 = vsel %vm1476, %v1575, %v1579
        %v1613 = vsel %vm1477, %v1575, %v1579
        %v1614 = vsel %vm1478, %v1575, %v1579
        %v1615 = vsel %vm1479, %v1575, %v1579
        %v1616 = vsel %vm1480, %v1575, %v1579
        %v1617 = vsel %vm1481, %v1575, %v1579
        %v1618 = vsel %vm1482, %v1575, %v1579
        %v1619 = vsel %vm1483, %v1575, %v1579
        %v1620 = vsel %vm1484, %v1575, %v1579
        %v1621 = vsel %vm1485, %v1575, %v1579
        %v1622 = vsel %vm1486, %v1575, %v1579
        %v1623 = vsel %vm1487, %v1575, %v1579
        %v1624 = vsel %vm1488, %v1575, %v1579
        %v1625 = vsel %vm1489, %v1575, %v1579
        %v1626 = vsel %vm1490, %v1575, %v1579
        %v1627 = vsel %vm1491, %v1575, %v1579
        %v1628 = vsel %vm1492, %v1575, %v1579
        %v1629 = vsel %vm1493, %v1575, %v1579
        %v1630 = vsel %vm1494, %v1575, %v1579
        %v1631 = vsel %vm1495, %v1575, %v1579
        %v1632 = vsel %vm1496, %v1575, %v1579
        %v1633 = vsel %vm1497, %v1575, %v1579
        %v1634 = vsel %vm1498, %v1575, %v1579
        %v1635 = vsel %vm1499, %v1575, %v1579
        %v1636 = vsel %vm1500, %v1575, %v1579
        %v1637 = vsel %vm1501, %v1575, %v1579
        %v1638 = vsel %vm1502, %v1575, %v1579
        %v1639 = vsel %vm1503, %v1575, %v1579
        %v1640 = vsel %vm1504, %v1575, %v1579
        %v1641 = vsel %vm1505, %v1575, %v1579
        %v1642 = vsel %vm1506, %v1575, %v1579
        %v1643 = vsel %vm1507, %v1575, %v1579
        %v1644 = vsel %vm1508, %v1575, %v1579
        %v1645 = vsel %vm1509, %v1575, %v1579
        %v1646 = vsel %vm1510, %v1575, %v1579
        %v1647 = vsel %vm1511, %v1575, %v1579
        %v1648 = vsel %vm1512, %v1575, %v1579
        %v1649 = vsel %vm1513, %v1575, %v1579
        %v1650 = vsel %vm1514, %v1575, %v1579
        %v1651 = vsel %vm1515, %v1575, %v1579
        %v1652 = vsel %vm1516, %v1575, %v1579
        %v1653 = vsel %vm1517, %v1575, %v1579
        %v1654 = vsel %vm1518, %v1575, %v1579
        %v1655 = vsel %vm1519, %v1575, %v1579
        %v1656 = vsel %vm1520, %v1575, %v1579
        %v1657 = vsel %vm1521, %v1575, %v1579
        %v1658 = vsel %vm1522, %v1575, %v1579
        %v1659 = vsel %vm1523, %v1575, %v1579
        %v1660 = vsel %vm1524, %v1575, %v1579
        %v1661 = vsel %vm1525, %v1575, %v1579
        %v1662 = vsel %vm1526, %v1575, %v1579
        %v1663 = vsel %vm1527, %v1575, %v1579
        %v1664 = vsel %vm1528, %v1575, %v1579
        %v1665 = vsel %vm1529, %v1575, %v1579
        %v1666 = vsel %vm1530, %v1575, %v1579
        %v1667 = vsel %vm1531, %v1575, %v1579
        %v1668 = vsel %vm1532, %v1575, %v1579
        %v1669 = vsel %vm1533, %v1575, %v1579
        %v1670 = vsel %vm1534, %v1575, %v1579
        %v1671 = vsel %vm1535, %v1575, %v1579
        %v1672 = vsel %vm1536, %v1575, %v1579
        %v1673 = vsel %vm1537, %v1575, %v1579
        %v1674 = vsel %vm1538, %v1575, %v1579
        %v1675 = vsel %vm1539, %v1575, %v1579
        %v1676 = vsel %vm1540, %v1575, %v1579
        %v1677 = vsel %vm1541, %v1575, %v1579
        %v1678 = vsel %vm1542, %v1575, %v1579
        %v1679 = vsel %vm1543, %v1575, %v1579
        %v1680 = vsel %vm1544, %v1575, %v1579
        %v1681 = vsel %vm1545, %v1575, %v1579
        %v1682 = vsel %vm1546, %v1575, %v1579
        %v1683 = vsel %vm1547, %v1575, %v1579
        %v1684 = vsel %vm1548, %v1575, %v1579
        %v1685 = vsel %vm1549, %v1575, %v1579
        %v1686 = vsel %vm1550, %v1575, %v1579
        %v1687 = vsel %vm1551, %v1575, %v1579
        %v1688 = vsel %vm1552, %v1575, %v1579
        %v1689 = vsel %vm1553, %v1575, %v1579
        %v1690 = vsel %vm1554, %v1575, %v1579
        %v1691 = vsel %vm1555, %v1575, %v1579
        %v1692 = vsel %vm1556, %v1575, %v1579
        %v1693 = vsel %vm1557, %v1575, %v1579
        %v1694 = vsel %vm1558, %v1575, %v1579
        %v1695 = vsel %vm1559, %v1575, %v1579
        %v1696 = vsel %vm1560, %v1575, %v1579
        %v1697 = vsel %vm1561, %v1575, %v1579
        %v1698 = vsel %vm1562, %v1575, %v1579
        %v1699 = vsel %vm1563, %v1575, %v1579
        %v1700 = vsel %vm1564, %v1575, %v1579
        %v1701 = vsel %vm1565, %v1575, %v1579
        %v1702 = vsel %vm1566, %v1575, %v1579
        %v1703 = vsel %vm1567, %v1575, %v1579
        %v1704 = vsel %vm1568, %v1575, %v1579
        %v1705 = vsel %vm1569, %v1575, %v1579
        %v1706 = vsel %vm1570, %v1575, %v1579
        %v1707 = vsel %vm1571, %v1575, %v1579
        %v1708 = vadd.f32 %v546, %v1580
        %v1709 = vadd.f32 %v547, %v1581
        %v1710 = vadd.f32 %v548, %v1582
        %v1711 = vadd.f32 %v549, %v1583
        %v1712 = vadd.f32 %v550, %v1584
        %v1713 = vadd.f32 %v551, %v1585
        %v1714 = vadd.f32 %v552, %v1586
        %v1715 = vadd.f32 %v553, %v1587
        %v1716 = vadd.f32 %v554, %v1588
        %v1717 = vadd.f32 %v555, %v1589
        %v1718 = vadd.f32 %v556, %v1590
        %v1719 = vadd.f32 %v557, %v1591
        %v1720 = vadd.f32 %v558, %v1592
        %v1721 = vadd.f32 %v559, %v1593
        %v1722 = vadd.f32 %v560, %v1594
        %v1723 = vadd.f32 %v561, %v1595
        %v1724 = vadd.f32 %v562, %v1596
        %v1725 = vadd.f32 %v563, %v1597
        %v1726 = vadd.f32 %v564, %v1598
        %v1727 = vadd.f32 %v565, %v1599
        %v1728 = vadd.f32 %v566, %v1600
        %v1729 = vadd.f32 %v567, %v1601
        %v1730 = vadd.f32 %v568, %v1602
        %v1731 = vadd.f32 %v569, %v1603
        %v1732 = vadd.f32 %v570, %v1604
        %v1733 = vadd.f32 %v571, %v1605
        %v1734 = vadd.f32 %v572, %v1606
        %v1735 = vadd.f32 %v573, %v1607
        %v1736 = vadd.f32 %v574, %v1608
        %v1737 = vadd.f32 %v575, %v1609
        %v1738 = vadd.f32 %v576, %v1610
        %v1739 = vadd.f32 %v577, %v1611
        %v1740 = vadd.f32 %v578, %v1612
        %v1741 = vadd.f32 %v579, %v1613
        %v1742 = vadd.f32 %v580, %v1614
        %v1743 = vadd.f32 %v581, %v1615
        %v1744 = vadd.f32 %v582, %v1616
        %v1745 = vadd.f32 %v583, %v1617
        %v1746 = vadd.f32 %v584, %v1618
        %v1747 = vadd.f32 %v585, %v1619
        %v1748 = vadd.f32 %v586, %v1620
        %v1749 = vadd.f32 %v587, %v1621
        %v1750 = vadd.f32 %v588, %v1622
        %v1751 = vadd.f32 %v589, %v1623
        %v1752 = vadd.f32 %v590, %v1624
        %v1753 = vadd.f32 %v591, %v1625
        %v1754 = vadd.f32 %v592, %v1626
        %v1755 = vadd.f32 %v593, %v1627
        %v1756 = vadd.f32 %v594, %v1628
        %v1757 = vadd.f32 %v595, %v1629
        %v1758 = vadd.f32 %v596, %v1630
        %v1759 = vadd.f32 %v597, %v1631
        %v1760 = vadd.f32 %v598, %v1632
        %v1761 = vadd.f32 %v599, %v1633
        %v1762 = vadd.f32 %v600, %v1634
        %v1763 = vadd.f32 %v601, %v1635
        %v1764 = vadd.f32 %v602, %v1636
        %v1765 = vadd.f32 %v603, %v1637
        %v1766 = vadd.f32 %v604, %v1638
        %v1767 = vadd.f32 %v605, %v1639
        %v1768 = vadd.f32 %v606, %v1640
        %v1769 = vadd.f32 %v607, %v1641
        %v1770 = vadd.f32 %v608, %v1642
        %v1771 = vadd.f32 %v609, %v1643
        %v1772 = vadd.f32 %v610, %v1644
        %v1773 = vadd.f32 %v611, %v1645
        %v1774 = vadd.f32 %v612, %v1646
        %v1775 = vadd.f32 %v613, %v1647
        %v1776 = vadd.f32 %v614, %v1648
        %v1777 = vadd.f32 %v615, %v1649
        %v1778 = vadd.f32 %v616, %v1650
        %v1779 = vadd.f32 %v617, %v1651
        %v1780 = vadd.f32 %v618, %v1652
        %v1781 = vadd.f32 %v619, %v1653
        %v1782 = vadd.f32 %v620, %v1654
        %v1783 = vadd.f32 %v621, %v1655
        %v1784 = vadd.f32 %v622, %v1656
        %v1785 = vadd.f32 %v623, %v1657
        %v1786 = vadd.f32 %v624, %v1658
        %v1787 = vadd.f32 %v625, %v1659
        %v1788 = vadd.f32 %v626, %v1660
        %v1789 = vadd.f32 %v627, %v1661
        %v1790 = vadd.f32 %v628, %v1662
        %v1791 = vadd.f32 %v629, %v1663
        %v1792 = vadd.f32 %v630, %v1664
        %v1793 = vadd.f32 %v631, %v1665
        %v1794 = vadd.f32 %v632, %v1666
        %v1795 = vadd.f32 %v633, %v1667
        %v1796 = vadd.f32 %v634, %v1668
        %v1797 = vadd.f32 %v635, %v1669
        %v1798 = vadd.f32 %v636, %v1670
        %v1799 = vadd.f32 %v637, %v1671
        %v1800 = vadd.f32 %v638, %v1672
        %v1801 = vadd.f32 %v639, %v1673
        %v1802 = vadd.f32 %v640, %v1674
        %v1803 = vadd.f32 %v641, %v1675
        %v1804 = vadd.f32 %v642, %v1676
        %v1805 = vadd.f32 %v643, %v1677
        %v1806 = vadd.f32 %v644, %v1678
        %v1807 = vadd.f32 %v645, %v1679
        %v1808 = vadd.f32 %v646, %v1680
        %v1809 = vadd.f32 %v647, %v1681
        %v1810 = vadd.f32 %v648, %v1682
        %v1811 = vadd.f32 %v649, %v1683
        %v1812 = vadd.f32 %v650, %v1684
        %v1813 = vadd.f32 %v651, %v1685
        %v1814 = vadd.f32 %v652, %v1686
        %v1815 = vadd.f32 %v653, %v1687
        %v1816 = vadd.f32 %v654, %v1688
        %v1817 = vadd.f32 %v655, %v1689
        %v1818 = vadd.f32 %v656, %v1690
        %v1819 = vadd.f32 %v657, %v1691
        %v1820 = vadd.f32 %v658, %v1692
        %v1821 = vadd.f32 %v659, %v1693
        %v1822 = vadd.f32 %v660, %v1694
        %v1823 = vadd.f32 %v661, %v1695
        %v1824 = vadd.f32 %v662, %v1696
        %v1825 = vadd.f32 %v663, %v1697
        %v1826 = vadd.f32 %v664, %v1698
        %v1827 = vadd.f32 %v665, %v1699
        %v1828 = vadd.f32 %v666, %v1700
        %v1829 = vadd.f32 %v667, %v1701
        %v1830 = vadd.f32 %v668, %v1702
        %v1831 = vadd.f32 %v669, %v1703
        %v1832 = vadd.f32 %v670, %v1704
        %v1833 = vadd.f32 %v671, %v1705
        %v1834 = vadd.f32 %v672, %v1706
        %v1835 = vadd.f32 %v673, %v1707
        %1836 = vadd.xlane.f32.xlu0 %v1708
        %v1837 = vpop.xlane.xlu0 %1836
        %1838 = vadd.xlane.f32.xlu0 %v1709
        %v1839 = vpop.xlane.xlu0 %1838
        %1840 = vadd.xlane.f32.xlu0 %v1710
        %v1841 = vpop.xlane.xlu0 %1840
        %1842 = vadd.xlane.f32.xlu0 %v1711
        %v1843 = vpop.xlane.xlu0 %1842
        %1844 = vadd.xlane.f32.xlu0 %v1712
        %v1845 = vpop.xlane.xlu0 %1844
        %1846 = vadd.xlane.f32.xlu0 %v1713
        %v1847 = vpop.xlane.xlu0 %1846
        %1848 = vadd.xlane.f32.xlu0 %v1714
        %v1849 = vpop.xlane.xlu0 %1848
        %1850 = vadd.xlane.f32.xlu0 %v1715
        %v1851 = vpop.xlane.xlu0 %1850
        %1852 = vadd.xlane.f32.xlu0 %v1716
        %v1853 = vpop.xlane.xlu0 %1852
        %1854 = vadd.xlane.f32.xlu0 %v1717
        %v1855 = vpop.xlane.xlu0 %1854
        %1856 = vadd.xlane.f32.xlu0 %v1718
        %v1857 = vpop.xlane.xlu0 %1856
        %1858 = vadd.xlane.f32.xlu0 %v1719
        %v1859 = vpop.xlane.xlu0 %1858
        %1860 = vadd.xlane.f32.xlu0 %v1720
        %v1861 = vpop.xlane.xlu0 %1860
        %1862 = vadd.xlane.f32.xlu0 %v1721
        %v1863 = vpop.xlane.xlu0 %1862
        %1864 = vadd.xlane.f32.xlu0 %v1722
        %v1865 = vpop.xlane.xlu0 %1864
        %1866 = vadd.xlane.f32.xlu0 %v1723
        %v1867 = vpop.xlane.xlu0 %1866
        %1868 = vadd.xlane.f32.xlu0 %v1724
        %v1869 = vpop.xlane.xlu0 %1868
        %1870 = vadd.xlane.f32.xlu0 %v1725
        %v1871 = vpop.xlane.xlu0 %1870
        %1872 = vadd.xlane.f32.xlu0 %v1726
        %v1873 = vpop.xlane.xlu0 %1872
        %1874 = vadd.xlane.f32.xlu0 %v1727
        %v1875 = vpop.xlane.xlu0 %1874
        %1876 = vadd.xlane.f32.xlu0 %v1728
        %v1877 = vpop.xlane.xlu0 %1876
        %1878 = vadd.xlane.f32.xlu0 %v1729
        %v1879 = vpop.xlane.xlu0 %1878
        %1880 = vadd.xlane.f32.xlu0 %v1730
        %v1881 = vpop.xlane.xlu0 %1880
        %1882 = vadd.xlane.f32.xlu0 %v1731
        %v1883 = vpop.xlane.xlu0 %1882
        %1884 = vadd.xlane.f32.xlu0 %v1732
        %v1885 = vpop.xlane.xlu0 %1884
        %1886 = vadd.xlane.f32.xlu0 %v1733
        %v1887 = vpop.xlane.xlu0 %1886
        %1888 = vadd.xlane.f32.xlu0 %v1734
        %v1889 = vpop.xlane.xlu0 %1888
        %1890 = vadd.xlane.f32.xlu0 %v1735
        %v1891 = vpop.xlane.xlu0 %1890
        %1892 = vadd.xlane.f32.xlu0 %v1736
        %v1893 = vpop.xlane.xlu0 %1892
        %1894 = vadd.xlane.f32.xlu0 %v1737
        %v1895 = vpop.xlane.xlu0 %1894
        %1896 = vadd.xlane.f32.xlu0 %v1738
        %v1897 = vpop.xlane.xlu0 %1896
        %1898 = vadd.xlane.f32.xlu0 %v1739
        %v1899 = vpop.xlane.xlu0 %1898
        %1900 = vadd.xlane.f32.xlu0 %v1740
        %v1901 = vpop.xlane.xlu0 %1900
        %1902 = vadd.xlane.f32.xlu0 %v1741
        %v1903 = vpop.xlane.xlu0 %1902
        %1904 = vadd.xlane.f32.xlu0 %v1742
        %v1905 = vpop.xlane.xlu0 %1904
        %1906 = vadd.xlane.f32.xlu0 %v1743
        %v1907 = vpop.xlane.xlu0 %1906
        %1908 = vadd.xlane.f32.xlu0 %v1744
        %v1909 = vpop.xlane.xlu0 %1908
        %1910 = vadd.xlane.f32.xlu0 %v1745
        %v1911 = vpop.xlane.xlu0 %1910
        %1912 = vadd.xlane.f32.xlu0 %v1746
        %v1913 = vpop.xlane.xlu0 %1912
        %1914 = vadd.xlane.f32.xlu0 %v1747
        %v1915 = vpop.xlane.xlu0 %1914
        %1916 = vadd.xlane.f32.xlu0 %v1748
        %v1917 = vpop.xlane.xlu0 %1916
        %1918 = vadd.xlane.f32.xlu0 %v1749
        %v1919 = vpop.xlane.xlu0 %1918
        %1920 = vadd.xlane.f32.xlu0 %v1750
        %v1921 = vpop.xlane.xlu0 %1920
        %1922 = vadd.xlane.f32.xlu0 %v1751
        %v1923 = vpop.xlane.xlu0 %1922
        %1924 = vadd.xlane.f32.xlu0 %v1752
        %v1925 = vpop.xlane.xlu0 %1924
        %1926 = vadd.xlane.f32.xlu0 %v1753
        %v1927 = vpop.xlane.xlu0 %1926
        %1928 = vadd.xlane.f32.xlu0 %v1754
        %v1929 = vpop.xlane.xlu0 %1928
        %1930 = vadd.xlane.f32.xlu0 %v1755
        %v1931 = vpop.xlane.xlu0 %1930
        %1932 = vadd.xlane.f32.xlu0 %v1756
        %v1933 = vpop.xlane.xlu0 %1932
        %1934 = vadd.xlane.f32.xlu0 %v1757
        %v1935 = vpop.xlane.xlu0 %1934
        %1936 = vadd.xlane.f32.xlu0 %v1758
        %v1937 = vpop.xlane.xlu0 %1936
        %1938 = vadd.xlane.f32.xlu0 %v1759
        %v1939 = vpop.xlane.xlu0 %1938
        %1940 = vadd.xlane.f32.xlu0 %v1760
        %v1941 = vpop.xlane.xlu0 %1940
        %1942 = vadd.xlane.f32.xlu0 %v1761
        %v1943 = vpop.xlane.xlu0 %1942
        %1944 = vadd.xlane.f32.xlu0 %v1762
        %v1945 = vpop.xlane.xlu0 %1944
        %1946 = vadd.xlane.f32.xlu0 %v1763
        %v1947 = vpop.xlane.xlu0 %1946
        %1948 = vadd.xlane.f32.xlu0 %v1764
        %v1949 = vpop.xlane.xlu0 %1948
        %1950 = vadd.xlane.f32.xlu0 %v1765
        %v1951 = vpop.xlane.xlu0 %1950
        %1952 = vadd.xlane.f32.xlu0 %v1766
        %v1953 = vpop.xlane.xlu0 %1952
        %1954 = vadd.xlane.f32.xlu0 %v1767
        %v1955 = vpop.xlane.xlu0 %1954
        %1956 = vadd.xlane.f32.xlu0 %v1768
        %v1957 = vpop.xlane.xlu0 %1956
        %1958 = vadd.xlane.f32.xlu0 %v1769
        %v1959 = vpop.xlane.xlu0 %1958
        %1960 = vadd.xlane.f32.xlu0 %v1770
        %v1961 = vpop.xlane.xlu0 %1960
        %1962 = vadd.xlane.f32.xlu0 %v1771
        %v1963 = vpop.xlane.xlu0 %1962
        %1964 = vadd.xlane.f32.xlu0 %v1772
        %v1965 = vpop.xlane.xlu0 %1964
        %1966 = vadd.xlane.f32.xlu0 %v1773
        %v1967 = vpop.xlane.xlu0 %1966
        %1968 = vadd.xlane.f32.xlu0 %v1774
        %v1969 = vpop.xlane.xlu0 %1968
        %1970 = vadd.xlane.f32.xlu0 %v1775
        %v1971 = vpop.xlane.xlu0 %1970
        %1972 = vadd.xlane.f32.xlu0 %v1776
        %v1973 = vpop.xlane.xlu0 %1972
        %1974 = vadd.xlane.f32.xlu0 %v1777
        %v1975 = vpop.xlane.xlu0 %1974
        %1976 = vadd.xlane.f32.xlu0 %v1778
        %v1977 = vpop.xlane.xlu0 %1976
        %1978 = vadd.xlane.f32.xlu0 %v1779
        %v1979 = vpop.xlane.xlu0 %1978
        %1980 = vadd.xlane.f32.xlu0 %v1780
        %v1981 = vpop.xlane.xlu0 %1980
        %1982 = vadd.xlane.f32.xlu0 %v1781
        %v1983 = vpop.xlane.xlu0 %1982
        %1984 = vadd.xlane.f32.xlu0 %v1782
        %v1985 = vpop.xlane.xlu0 %1984
        %1986 = vadd.xlane.f32.xlu0 %v1783
        %v1987 = vpop.xlane.xlu0 %1986
        %1988 = vadd.xlane.f32.xlu0 %v1784
        %v1989 = vpop.xlane.xlu0 %1988
        %1990 = vadd.xlane.f32.xlu0 %v1785
        %v1991 = vpop.xlane.xlu0 %1990
        %1992 = vadd.xlane.f32.xlu0 %v1786
        %v1993 = vpop.xlane.xlu0 %1992
        %1994 = vadd.xlane.f32.xlu0 %v1787
        %v1995 = vpop.xlane.xlu0 %1994
        %1996 = vadd.xlane.f32.xlu0 %v1788
        %v1997 = vpop.xlane.xlu0 %1996
        %1998 = vadd.xlane.f32.xlu0 %v1789
        %v1999 = vpop.xlane.xlu0 %1998
        %2000 = vadd.xlane.f32.xlu0 %v1790
        %v2001 = vpop.xlane.xlu0 %2000
        %2002 = vadd.xlane.f32.xlu0 %v1791
        %v2003 = vpop.xlane.xlu0 %2002
        %2004 = vadd.xlane.f32.xlu0 %v1792
        %v2005 = vpop.xlane.xlu0 %2004
        %2006 = vadd.xlane.f32.xlu0 %v1793
        %v2007 = vpop.xlane.xlu0 %2006
        %2008 = vadd.xlane.f32.xlu0 %v1794
        %v2009 = vpop.xlane.xlu0 %2008
        %2010 = vadd.xlane.f32.xlu0 %v1795
        %v2011 = vpop.xlane.xlu0 %2010
        %2012 = vadd.xlane.f32.xlu0 %v1796
        %v2013 = vpop.xlane.xlu0 %2012
        %2014 = vadd.xlane.f32.xlu0 %v1797
        %v2015 = vpop.xlane.xlu0 %2014
        %2016 = vadd.xlane.f32.xlu0 %v1798
        %v2017 = vpop.xlane.xlu0 %2016
        %2018 = vadd.xlane.f32.xlu0 %v1799
        %v2019 = vpop.xlane.xlu0 %2018
        %2020 = vadd.xlane.f32.xlu0 %v1800
        %v2021 = vpop.xlane.xlu0 %2020
        %2022 = vadd.xlane.f32.xlu0 %v1801
        %v2023 = vpop.xlane.xlu0 %2022
        %2024 = vadd.xlane.f32.xlu0 %v1802
        %v2025 = vpop.xlane.xlu0 %2024
        %2026 = vadd.xlane.f32.xlu0 %v1803
        %v2027 = vpop.xlane.xlu0 %2026
        %2028 = vadd.xlane.f32.xlu0 %v1804
        %v2029 = vpop.xlane.xlu0 %2028
        %2030 = vadd.xlane.f32.xlu0 %v1805
        %v2031 = vpop.xlane.xlu0 %2030
        %2032 = vadd.xlane.f32.xlu0 %v1806
        %v2033 = vpop.xlane.xlu0 %2032
        %2034 = vadd.xlane.f32.xlu0 %v1807
        %v2035 = vpop.xlane.xlu0 %2034
        %2036 = vadd.xlane.f32.xlu0 %v1808
        %v2037 = vpop.xlane.xlu0 %2036
        %2038 = vadd.xlane.f32.xlu0 %v1809
        %v2039 = vpop.xlane.xlu0 %2038
        %2040 = vadd.xlane.f32.xlu0 %v1810
        %v2041 = vpop.xlane.xlu0 %2040
        %2042 = vadd.xlane.f32.xlu0 %v1811
        %v2043 = vpop.xlane.xlu0 %2042
        %2044 = vadd.xlane.f32.xlu0 %v1812
        %v2045 = vpop.xlane.xlu0 %2044
        %2046 = vadd.xlane.f32.xlu0 %v1813
        %v2047 = vpop.xlane.xlu0 %2046
        %2048 = vadd.xlane.f32.xlu0 %v1814
        %v2049 = vpop.xlane.xlu0 %2048
        %2050 = vadd.xlane.f32.xlu0 %v1815
        %v2051 = vpop.xlane.xlu0 %2050
        %2052 = vadd.xlane.f32.xlu0 %v1816
        %v2053 = vpop.xlane.xlu0 %2052
        %2054 = vadd.xlane.f32.xlu0 %v1817
        %v2055 = vpop.xlane.xlu0 %2054
        %2056 = vadd.xlane.f32.xlu0 %v1818
        %v2057 = vpop.xlane.xlu0 %2056
        %2058 = vadd.xlane.f32.xlu0 %v1819
        %v2059 = vpop.xlane.xlu0 %2058
        %2060 = vadd.xlane.f32.xlu0 %v1820
        %v2061 = vpop.xlane.xlu0 %2060
        %2062 = vadd.xlane.f32.xlu0 %v1821
        %v2063 = vpop.xlane.xlu0 %2062
        %2064 = vadd.xlane.f32.xlu0 %v1822
        %v2065 = vpop.xlane.xlu0 %2064
        %2066 = vadd.xlane.f32.xlu0 %v1823
        %v2067 = vpop.xlane.xlu0 %2066
        %2068 = vadd.xlane.f32.xlu0 %v1824
        %v2069 = vpop.xlane.xlu0 %2068
        %2070 = vadd.xlane.f32.xlu0 %v1825
        %v2071 = vpop.xlane.xlu0 %2070
        %2072 = vadd.xlane.f32.xlu0 %v1826
        %v2073 = vpop.xlane.xlu0 %2072
        %2074 = vadd.xlane.f32.xlu0 %v1827
        %v2075 = vpop.xlane.xlu0 %2074
        %2076 = vadd.xlane.f32.xlu0 %v1828
        %v2077 = vpop.xlane.xlu0 %2076
        %2078 = vadd.xlane.f32.xlu0 %v1829
        %v2079 = vpop.xlane.xlu0 %2078
        %2080 = vadd.xlane.f32.xlu0 %v1830
        %v2081 = vpop.xlane.xlu0 %2080
        %2082 = vadd.xlane.f32.xlu0 %v1831
        %v2083 = vpop.xlane.xlu0 %2082
        %2084 = vadd.xlane.f32.xlu0 %v1832
        %v2085 = vpop.xlane.xlu0 %2084
        %2086 = vadd.xlane.f32.xlu0 %v1833
        %v2087 = vpop.xlane.xlu0 %2086
        %2088 = vadd.xlane.f32.xlu0 %v1834
        %v2089 = vpop.xlane.xlu0 %2088
        %2090 = vadd.xlane.f32.xlu0 %v1835
        %v2091 = vpop.xlane.xlu0 %2090
        %v2092 = vmul.f32 %v1708, %v1708
        %v2093 = vmul.f32 %v1709, %v1709
        %v2094 = vmul.f32 %v1710, %v1710
        %v2095 = vmul.f32 %v1711, %v1711
        %v2096 = vmul.f32 %v1712, %v1712
        %v2097 = vmul.f32 %v1713, %v1713
        %v2098 = vmul.f32 %v1714, %v1714
        %v2099 = vmul.f32 %v1715, %v1715
        %v2100 = vmul.f32 %v1716, %v1716
        %v2101 = vmul.f32 %v1717, %v1717
        %v2102 = vmul.f32 %v1718, %v1718
        %v2103 = vmul.f32 %v1719, %v1719
        %v2104 = vmul.f32 %v1720, %v1720
        %v2105 = vmul.f32 %v1721, %v1721
        %v2106 = vmul.f32 %v1722, %v1722
        %v2107 = vmul.f32 %v1723, %v1723
        %v2108 = vmul.f32 %v1724, %v1724
        %v2109 = vmul.f32 %v1725, %v1725
        %v2110 = vmul.f32 %v1726, %v1726
        %v2111 = vmul.f32 %v1727, %v1727
        %v2112 = vmul.f32 %v1728, %v1728
        %v2113 = vmul.f32 %v1729, %v1729
        %v2114 = vmul.f32 %v1730, %v1730
        %v2115 = vmul.f32 %v1731, %v1731
        %v2116 = vmul.f32 %v1732, %v1732
        %v2117 = vmul.f32 %v1733, %v1733
        %v2118 = vmul.f32 %v1734, %v1734
        %v2119 = vmul.f32 %v1735, %v1735
        %v2120 = vmul.f32 %v1736, %v1736
        %v2121 = vmul.f32 %v1737, %v1737
        %v2122 = vmul.f32 %v1738, %v1738
        %v2123 = vmul.f32 %v1739, %v1739
        %v2124 = vmul.f32 %v1740, %v1740
        %v2125 = vmul.f32 %v1741, %v1741
        %v2126 = vmul.f32 %v1742, %v1742
        %v2127 = vmul.f32 %v1743, %v1743
        %v2128 = vmul.f32 %v1744, %v1744
        %v2129 = vmul.f32 %v1745, %v1745
        %v2130 = vmul.f32 %v1746, %v1746
        %v2131 = vmul.f32 %v1747, %v1747
        %v2132 = vmul.f32 %v1748, %v1748
        %v2133 = vmul.f32 %v1749, %v1749
        %v2134 = vmul.f32 %v1750, %v1750
        %v2135 = vmul.f32 %v1751, %v1751
        %v2136 = vmul.f32 %v1752, %v1752
        %v2137 = vmul.f32 %v1753, %v1753
        %v2138 = vmul.f32 %v1754, %v1754
        %v2139 = vmul.f32 %v1755, %v1755
        %v2140 = vmul.f32 %v1756, %v1756
        %v2141 = vmul.f32 %v1757, %v1757
        %v2142 = vmul.f32 %v1758, %v1758
        %v2143 = vmul.f32 %v1759, %v1759
        %v2144 = vmul.f32 %v1760, %v1760
        %v2145 = vmul.f32 %v1761, %v1761
        %v2146 = vmul.f32 %v1762, %v1762
        %v2147 = vmul.f32 %v1763, %v1763
        %v2148 = vmul.f32 %v1764, %v1764
        %v2149 = vmul.f32 %v1765, %v1765
        %v2150 = vmul.f32 %v1766, %v1766
        %v2151 = vmul.f32 %v1767, %v1767
        %v2152 = vmul.f32 %v1768, %v1768
        %v2153 = vmul.f32 %v1769, %v1769
        %v2154 = vmul.f32 %v1770, %v1770
        %v2155 = vmul.f32 %v1771, %v1771
        %v2156 = vmul.f32 %v1772, %v1772
        %v2157 = vmul.f32 %v1773, %v1773
        %v2158 = vmul.f32 %v1774, %v1774
        %v2159 = vmul.f32 %v1775, %v1775
        %v2160 = vmul.f32 %v1776, %v1776
        %v2161 = vmul.f32 %v1777, %v1777
        %v2162 = vmul.f32 %v1778, %v1778
        %v2163 = vmul.f32 %v1779, %v1779
        %v2164 = vmul.f32 %v1780, %v1780
        %v2165 = vmul.f32 %v1781, %v1781
        %v2166 = vmul.f32 %v1782, %v1782
        %v2167 = vmul.f32 %v1783, %v1783
        %v2168 = vmul.f32 %v1784, %v1784
        %v2169 = vmul.f32 %v1785, %v1785
        %v2170 = vmul.f32 %v1786, %v1786
        %v2171 = vmul.f32 %v1787, %v1787
        %v2172 = vmul.f32 %v1788, %v1788
        %v2173 = vmul.f32 %v1789, %v1789
        %v2174 = vmul.f32 %v1790, %v1790
        %v2175 = vmul.f32 %v1791, %v1791
        %v2176 = vmul.f32 %v1792, %v1792
        %v2177 = vmul.f32 %v1793, %v1793
        %v2178 = vmul.f32 %v1794, %v1794
        %v2179 = vmul.f32 %v1795, %v1795
        %v2180 = vmul.f32 %v1796, %v1796
        %v2181 = vmul.f32 %v1797, %v1797
        %v2182 = vmul.f32 %v1798, %v1798
        %v2183 = vmul.f32 %v1799, %v1799
        %v2184 = vmul.f32 %v1800, %v1800
        %v2185 = vmul.f32 %v1801, %v1801
        %v2186 = vmul.f32 %v1802, %v1802
        %v2187 = vmul.f32 %v1803, %v1803
        %v2188 = vmul.f32 %v1804, %v1804
        %v2189 = vmul.f32 %v1805, %v1805
        %v2190 = vmul.f32 %v1806, %v1806
        %v2191 = vmul.f32 %v1807, %v1807
        %v2192 = vmul.f32 %v1808, %v1808
        %v2193 = vmul.f32 %v1809, %v1809
        %v2194 = vmul.f32 %v1810, %v1810
        %v2195 = vmul.f32 %v1811, %v1811
        %v2196 = vmul.f32 %v1812, %v1812
        %v2197 = vmul.f32 %v1813, %v1813
        %v2198 = vmul.f32 %v1814, %v1814
        %v2199 = vmul.f32 %v1815, %v1815
        %v2200 = vmul.f32 %v1816, %v1816
        %v2201 = vmul.f32 %v1817, %v1817
        %v2202 = vmul.f32 %v1818, %v1818
        %v2203 = vmul.f32 %v1819, %v1819
        %v2204 = vmul.f32 %v1820, %v1820
        %v2205 = vmul.f32 %v1821, %v1821
        %v2206 = vmul.f32 %v1822, %v1822
        %v2207 = vmul.f32 %v1823, %v1823
        %v2208 = vmul.f32 %v1824, %v1824
        %v2209 = vmul.f32 %v1825, %v1825
        %v2210 = vmul.f32 %v1826, %v1826
        %v2211 = vmul.f32 %v1827, %v1827
        %v2212 = vmul.f32 %v1828, %v1828
        %v2213 = vmul.f32 %v1829, %v1829
        %v2214 = vmul.f32 %v1830, %v1830
        %v2215 = vmul.f32 %v1831, %v1831
        %v2216 = vmul.f32 %v1832, %v1832
        %v2217 = vmul.f32 %v1833, %v1833
        %v2218 = vmul.f32 %v1834, %v1834
        %v2219 = vmul.f32 %v1835, %v1835
        %2220 = vadd.xlane.f32.xlu0 %v2092
        %v2221 = vpop.xlane.xlu0 %2220
        %2222 = vadd.xlane.f32.xlu0 %v2093
        %v2223 = vpop.xlane.xlu0 %2222
        %2224 = vadd.xlane.f32.xlu0 %v2094
        %v2225 = vpop.xlane.xlu0 %2224
        %2226 = vadd.xlane.f32.xlu0 %v2095
        %v2227 = vpop.xlane.xlu0 %2226
        %2228 = vadd.xlane.f32.xlu0 %v2096
        %v2229 = vpop.xlane.xlu0 %2228
        %2230 = vadd.xlane.f32.xlu0 %v2097
        %v2231 = vpop.xlane.xlu0 %2230
        %2232 = vadd.xlane.f32.xlu0 %v2098
        %v2233 = vpop.xlane.xlu0 %2232
        %2234 = vadd.xlane.f32.xlu0 %v2099
        %v2235 = vpop.xlane.xlu0 %2234
        %2236 = vadd.xlane.f32.xlu0 %v2100
        %v2237 = vpop.xlane.xlu0 %2236
        %2238 = vadd.xlane.f32.xlu0 %v2101
        %v2239 = vpop.xlane.xlu0 %2238
        %2240 = vadd.xlane.f32.xlu0 %v2102
        %v2241 = vpop.xlane.xlu0 %2240
        %2242 = vadd.xlane.f32.xlu0 %v2103
        %v2243 = vpop.xlane.xlu0 %2242
        %2244 = vadd.xlane.f32.xlu0 %v2104
        %v2245 = vpop.xlane.xlu0 %2244
        %2246 = vadd.xlane.f32.xlu0 %v2105
        %v2247 = vpop.xlane.xlu0 %2246
        %2248 = vadd.xlane.f32.xlu0 %v2106
        %v2249 = vpop.xlane.xlu0 %2248
        %2250 = vadd.xlane.f32.xlu0 %v2107
        %v2251 = vpop.xlane.xlu0 %2250
        %2252 = vadd.xlane.f32.xlu0 %v2108
        %v2253 = vpop.xlane.xlu0 %2252
        %2254 = vadd.xlane.f32.xlu0 %v2109
        %v2255 = vpop.xlane.xlu0 %2254
        %2256 = vadd.xlane.f32.xlu0 %v2110
        %v2257 = vpop.xlane.xlu0 %2256
        %2258 = vadd.xlane.f32.xlu0 %v2111
        %v2259 = vpop.xlane.xlu0 %2258
        %2260 = vadd.xlane.f32.xlu0 %v2112
        %v2261 = vpop.xlane.xlu0 %2260
        %2262 = vadd.xlane.f32.xlu0 %v2113
        %v2263 = vpop.xlane.xlu0 %2262
        %2264 = vadd.xlane.f32.xlu0 %v2114
        %v2265 = vpop.xlane.xlu0 %2264
        %2266 = vadd.xlane.f32.xlu0 %v2115
        %v2267 = vpop.xlane.xlu0 %2266
        %2268 = vadd.xlane.f32.xlu0 %v2116
        %v2269 = vpop.xlane.xlu0 %2268
        %2270 = vadd.xlane.f32.xlu0 %v2117
        %v2271 = vpop.xlane.xlu0 %2270
        %2272 = vadd.xlane.f32.xlu0 %v2118
        %v2273 = vpop.xlane.xlu0 %2272
        %2274 = vadd.xlane.f32.xlu0 %v2119
        %v2275 = vpop.xlane.xlu0 %2274
        %2276 = vadd.xlane.f32.xlu0 %v2120
        %v2277 = vpop.xlane.xlu0 %2276
        %2278 = vadd.xlane.f32.xlu0 %v2121
        %v2279 = vpop.xlane.xlu0 %2278
        %2280 = vadd.xlane.f32.xlu0 %v2122
        %v2281 = vpop.xlane.xlu0 %2280
        %2282 = vadd.xlane.f32.xlu0 %v2123
        %v2283 = vpop.xlane.xlu0 %2282
        %2284 = vadd.xlane.f32.xlu0 %v2124
        %v2285 = vpop.xlane.xlu0 %2284
        %2286 = vadd.xlane.f32.xlu0 %v2125
        %v2287 = vpop.xlane.xlu0 %2286
        %2288 = vadd.xlane.f32.xlu0 %v2126
        %v2289 = vpop.xlane.xlu0 %2288
        %2290 = vadd.xlane.f32.xlu0 %v2127
        %v2291 = vpop.xlane.xlu0 %2290
        %2292 = vadd.xlane.f32.xlu0 %v2128
        %v2293 = vpop.xlane.xlu0 %2292
        %2294 = vadd.xlane.f32.xlu0 %v2129
        %v2295 = vpop.xlane.xlu0 %2294
        %2296 = vadd.xlane.f32.xlu0 %v2130
        %v2297 = vpop.xlane.xlu0 %2296
        %2298 = vadd.xlane.f32.xlu0 %v2131
        %v2299 = vpop.xlane.xlu0 %2298
        %2300 = vadd.xlane.f32.xlu0 %v2132
        %v2301 = vpop.xlane.xlu0 %2300
        %2302 = vadd.xlane.f32.xlu0 %v2133
        %v2303 = vpop.xlane.xlu0 %2302
        %2304 = vadd.xlane.f32.xlu0 %v2134
        %v2305 = vpop.xlane.xlu0 %2304
        %2306 = vadd.xlane.f32.xlu0 %v2135
        %v2307 = vpop.xlane.xlu0 %2306
        %2308 = vadd.xlane.f32.xlu0 %v2136
        %v2309 = vpop.xlane.xlu0 %2308
        %2310 = vadd.xlane.f32.xlu0 %v2137
        %v2311 = vpop.xlane.xlu0 %2310
        %2312 = vadd.xlane.f32.xlu0 %v2138
        %v2313 = vpop.xlane.xlu0 %2312
        %2314 = vadd.xlane.f32.xlu0 %v2139
        %v2315 = vpop.xlane.xlu0 %2314
        %2316 = vadd.xlane.f32.xlu0 %v2140
        %v2317 = vpop.xlane.xlu0 %2316
        %2318 = vadd.xlane.f32.xlu0 %v2141
        %v2319 = vpop.xlane.xlu0 %2318
        %2320 = vadd.xlane.f32.xlu0 %v2142
        %v2321 = vpop.xlane.xlu0 %2320
        %2322 = vadd.xlane.f32.xlu0 %v2143
        %v2323 = vpop.xlane.xlu0 %2322
        %2324 = vadd.xlane.f32.xlu0 %v2144
        %v2325 = vpop.xlane.xlu0 %2324
        %2326 = vadd.xlane.f32.xlu0 %v2145
        %v2327 = vpop.xlane.xlu0 %2326
        %2328 = vadd.xlane.f32.xlu0 %v2146
        %v2329 = vpop.xlane.xlu0 %2328
        %2330 = vadd.xlane.f32.xlu0 %v2147
        %v2331 = vpop.xlane.xlu0 %2330
        %2332 = vadd.xlane.f32.xlu0 %v2148
        %v2333 = vpop.xlane.xlu0 %2332
        %2334 = vadd.xlane.f32.xlu0 %v2149
        %v2335 = vpop.xlane.xlu0 %2334
        %2336 = vadd.xlane.f32.xlu0 %v2150
        %v2337 = vpop.xlane.xlu0 %2336
        %2338 = vadd.xlane.f32.xlu0 %v2151
        %v2339 = vpop.xlane.xlu0 %2338
        %2340 = vadd.xlane.f32.xlu0 %v2152
        %v2341 = vpop.xlane.xlu0 %2340
        %2342 = vadd.xlane.f32.xlu0 %v2153
        %v2343 = vpop.xlane.xlu0 %2342
        %2344 = vadd.xlane.f32.xlu0 %v2154
        %v2345 = vpop.xlane.xlu0 %2344
        %2346 = vadd.xlane.f32.xlu0 %v2155
        %v2347 = vpop.xlane.xlu0 %2346
        %2348 = vadd.xlane.f32.xlu0 %v2156
        %v2349 = vpop.xlane.xlu0 %2348
        %2350 = vadd.xlane.f32.xlu0 %v2157
        %v2351 = vpop.xlane.xlu0 %2350
        %2352 = vadd.xlane.f32.xlu0 %v2158
        %v2353 = vpop.xlane.xlu0 %2352
        %2354 = vadd.xlane.f32.xlu0 %v2159
        %v2355 = vpop.xlane.xlu0 %2354
        %2356 = vadd.xlane.f32.xlu0 %v2160
        %v2357 = vpop.xlane.xlu0 %2356
        %2358 = vadd.xlane.f32.xlu0 %v2161
        %v2359 = vpop.xlane.xlu0 %2358
        %2360 = vadd.xlane.f32.xlu0 %v2162
        %v2361 = vpop.xlane.xlu0 %2360
        %2362 = vadd.xlane.f32.xlu0 %v2163
        %v2363 = vpop.xlane.xlu0 %2362
        %2364 = vadd.xlane.f32.xlu0 %v2164
        %v2365 = vpop.xlane.xlu0 %2364
        %2366 = vadd.xlane.f32.xlu0 %v2165
        %v2367 = vpop.xlane.xlu0 %2366
        %2368 = vadd.xlane.f32.xlu0 %v2166
        %v2369 = vpop.xlane.xlu0 %2368
        %2370 = vadd.xlane.f32.xlu0 %v2167
        %v2371 = vpop.xlane.xlu0 %2370
        %2372 = vadd.xlane.f32.xlu0 %v2168
        %v2373 = vpop.xlane.xlu0 %2372
        %2374 = vadd.xlane.f32.xlu0 %v2169
        %v2375 = vpop.xlane.xlu0 %2374
        %2376 = vadd.xlane.f32.xlu0 %v2170
        %v2377 = vpop.xlane.xlu0 %2376
        %2378 = vadd.xlane.f32.xlu0 %v2171
        %v2379 = vpop.xlane.xlu0 %2378
        %2380 = vadd.xlane.f32.xlu0 %v2172
        %v2381 = vpop.xlane.xlu0 %2380
        %2382 = vadd.xlane.f32.xlu0 %v2173
        %v2383 = vpop.xlane.xlu0 %2382
        %2384 = vadd.xlane.f32.xlu0 %v2174
        %v2385 = vpop.xlane.xlu0 %2384
        %2386 = vadd.xlane.f32.xlu0 %v2175
        %v2387 = vpop.xlane.xlu0 %2386
        %2388 = vadd.xlane.f32.xlu0 %v2176
        %v2389 = vpop.xlane.xlu0 %2388
        %2390 = vadd.xlane.f32.xlu0 %v2177
        %v2391 = vpop.xlane.xlu0 %2390
        %2392 = vadd.xlane.f32.xlu0 %v2178
        %v2393 = vpop.xlane.xlu0 %2392
        %2394 = vadd.xlane.f32.xlu0 %v2179
        %v2395 = vpop.xlane.xlu0 %2394
        %2396 = vadd.xlane.f32.xlu0 %v2180
        %v2397 = vpop.xlane.xlu0 %2396
        %2398 = vadd.xlane.f32.xlu0 %v2181
        %v2399 = vpop.xlane.xlu0 %2398
        %2400 = vadd.xlane.f32.xlu0 %v2182
        %v2401 = vpop.xlane.xlu0 %2400
        %2402 = vadd.xlane.f32.xlu0 %v2183
        %v2403 = vpop.xlane.xlu0 %2402
        %2404 = vadd.xlane.f32.xlu0 %v2184
        %v2405 = vpop.xlane.xlu0 %2404
        %2406 = vadd.xlane.f32.xlu0 %v2185
        %v2407 = vpop.xlane.xlu0 %2406
        %2408 = vadd.xlane.f32.xlu0 %v2186
        %v2409 = vpop.xlane.xlu0 %2408
        %2410 = vadd.xlane.f32.xlu0 %v2187
        %v2411 = vpop.xlane.xlu0 %2410
        %2412 = vadd.xlane.f32.xlu0 %v2188
        %v2413 = vpop.xlane.xlu0 %2412
        %2414 = vadd.xlane.f32.xlu0 %v2189
        %v2415 = vpop.xlane.xlu0 %2414
        %2416 = vadd.xlane.f32.xlu0 %v2190
        %v2417 = vpop.xlane.xlu0 %2416
        %2418 = vadd.xlane.f32.xlu0 %v2191
        %v2419 = vpop.xlane.xlu0 %2418
        %2420 = vadd.xlane.f32.xlu0 %v2192
        %v2421 = vpop.xlane.xlu0 %2420
        %2422 = vadd.xlane.f32.xlu0 %v2193
        %v2423 = vpop.xlane.xlu0 %2422
        %2424 = vadd.xlane.f32.xlu0 %v2194
        %v2425 = vpop.xlane.xlu0 %2424
        %2426 = vadd.xlane.f32.xlu0 %v2195
        %v2427 = vpop.xlane.xlu0 %2426
        %2428 = vadd.xlane.f32.xlu0 %v2196
        %v2429 = vpop.xlane.xlu0 %2428
        %2430 = vadd.xlane.f32.xlu0 %v2197
        %v2431 = vpop.xlane.xlu0 %2430
        %2432 = vadd.xlane.f32.xlu0 %v2198
        %v2433 = vpop.xlane.xlu0 %2432
        %2434 = vadd.xlane.f32.xlu0 %v2199
        %v2435 = vpop.xlane.xlu0 %2434
        %2436 = vadd.xlane.f32.xlu0 %v2200
        %v2437 = vpop.xlane.xlu0 %2436
        %2438 = vadd.xlane.f32.xlu0 %v2201
        %v2439 = vpop.xlane.xlu0 %2438
        %2440 = vadd.xlane.f32.xlu0 %v2202
        %v2441 = vpop.xlane.xlu0 %2440
        %2442 = vadd.xlane.f32.xlu0 %v2203
        %v2443 = vpop.xlane.xlu0 %2442
        %2444 = vadd.xlane.f32.xlu0 %v2204
        %v2445 = vpop.xlane.xlu0 %2444
        %2446 = vadd.xlane.f32.xlu0 %v2205
        %v2447 = vpop.xlane.xlu0 %2446
        %2448 = vadd.xlane.f32.xlu0 %v2206
        %v2449 = vpop.xlane.xlu0 %2448
        %2450 = vadd.xlane.f32.xlu0 %v2207
        %v2451 = vpop.xlane.xlu0 %2450
        %2452 = vadd.xlane.f32.xlu0 %v2208
        %v2453 = vpop.xlane.xlu0 %2452
        %2454 = vadd.xlane.f32.xlu0 %v2209
        %v2455 = vpop.xlane.xlu0 %2454
        %2456 = vadd.xlane.f32.xlu0 %v2210
        %v2457 = vpop.xlane.xlu0 %2456
        %2458 = vadd.xlane.f32.xlu0 %v2211
        %v2459 = vpop.xlane.xlu0 %2458
        %2460 = vadd.xlane.f32.xlu0 %v2212
        %v2461 = vpop.xlane.xlu0 %2460
        %2462 = vadd.xlane.f32.xlu0 %v2213
        %v2463 = vpop.xlane.xlu0 %2462
        %2464 = vadd.xlane.f32.xlu0 %v2214
        %v2465 = vpop.xlane.xlu0 %2464
        %2466 = vadd.xlane.f32.xlu0 %v2215
        %v2467 = vpop.xlane.xlu0 %2466
        %2468 = vadd.xlane.f32.xlu0 %v2216
        %v2469 = vpop.xlane.xlu0 %2468
        %2470 = vadd.xlane.f32.xlu0 %v2217
        %v2471 = vpop.xlane.xlu0 %2470
        %2472 = vadd.xlane.f32.xlu0 %v2218
        %v2473 = vpop.xlane.xlu0 %2472
        %2474 = vadd.xlane.f32.xlu0 %v2219
        %v2475 = vpop.xlane.xlu0 %2474
        %v2476 = vmul.f32 %v1837, 0.0078125
        %v2477 = vmul.f32 %v1839, 0.0078125
        %v2478 = vmul.f32 %v1841, 0.0078125
        %v2479 = vmul.f32 %v1843, 0.0078125
        %v2480 = vmul.f32 %v1845, 0.0078125
        %v2481 = vmul.f32 %v1847, 0.0078125
        %v2482 = vmul.f32 %v1849, 0.0078125
        %v2483 = vmul.f32 %v1851, 0.0078125
        %v2484 = vmul.f32 %v1853, 0.0078125
        %v2485 = vmul.f32 %v1855, 0.0078125
        %v2486 = vmul.f32 %v1857, 0.0078125
        %v2487 = vmul.f32 %v1859, 0.0078125
        %v2488 = vmul.f32 %v1861, 0.0078125
        %v2489 = vmul.f32 %v1863, 0.0078125
        %v2490 = vmul.f32 %v1865, 0.0078125
        %v2491 = vmul.f32 %v1867, 0.0078125
        %v2492 = vmul.f32 %v1869, 0.0078125
        %v2493 = vmul.f32 %v1871, 0.0078125
        %v2494 = vmul.f32 %v1873, 0.0078125
        %v2495 = vmul.f32 %v1875, 0.0078125
        %v2496 = vmul.f32 %v1877, 0.0078125
        %v2497 = vmul.f32 %v1879, 0.0078125
        %v2498 = vmul.f32 %v1881, 0.0078125
        %v2499 = vmul.f32 %v1883, 0.0078125
        %v2500 = vmul.f32 %v1885, 0.0078125
        %v2501 = vmul.f32 %v1887, 0.0078125
        %v2502 = vmul.f32 %v1889, 0.0078125
        %v2503 = vmul.f32 %v1891, 0.0078125
        %v2504 = vmul.f32 %v1893, 0.0078125
        %v2505 = vmul.f32 %v1895, 0.0078125
        %v2506 = vmul.f32 %v1897, 0.0078125
        %v2507 = vmul.f32 %v1899, 0.0078125
        %v2508 = vmul.f32 %v1901, 0.0078125
        %v2509 = vmul.f32 %v1903, 0.0078125
        %v2510 = vmul.f32 %v1905, 0.0078125
        %v2511 = vmul.f32 %v1907, 0.0078125
        %v2512 = vmul.f32 %v1909, 0.0078125
        %v2513 = vmul.f32 %v1911, 0.0078125
        %v2514 = vmul.f32 %v1913, 0.0078125
        %v2515 = vmul.f32 %v1915, 0.0078125
        %v2516 = vmul.f32 %v1917, 0.0078125
        %v2517 = vmul.f32 %v1919, 0.0078125
        %v2518 = vmul.f32 %v1921, 0.0078125
        %v2519 = vmul.f32 %v1923, 0.0078125
        %v2520 = vmul.f32 %v1925, 0.0078125
        %v2521 = vmul.f32 %v1927, 0.0078125
        %v2522 = vmul.f32 %v1929, 0.0078125
        %v2523 = vmul.f32 %v1931, 0.0078125
        %v2524 = vmul.f32 %v1933, 0.0078125
        %v2525 = vmul.f32 %v1935, 0.0078125
        %v2526 = vmul.f32 %v1937, 0.0078125
        %v2527 = vmul.f32 %v1939, 0.0078125
        %v2528 = vmul.f32 %v1941, 0.0078125
        %v2529 = vmul.f32 %v1943, 0.0078125
        %v2530 = vmul.f32 %v1945, 0.0078125
        %v2531 = vmul.f32 %v1947, 0.0078125
        %v2532 = vmul.f32 %v1949, 0.0078125
        %v2533 = vmul.f32 %v1951, 0.0078125
        %v2534 = vmul.f32 %v1953, 0.0078125
        %v2535 = vmul.f32 %v1955, 0.0078125
        %v2536 = vmul.f32 %v1957, 0.0078125
        %v2537 = vmul.f32 %v1959, 0.0078125
        %v2538 = vmul.f32 %v1961, 0.0078125
        %v2539 = vmul.f32 %v1963, 0.0078125
        %v2540 = vmul.f32 %v1965, 0.0078125
        %v2541 = vmul.f32 %v1967, 0.0078125
        %v2542 = vmul.f32 %v1969, 0.0078125
        %v2543 = vmul.f32 %v1971, 0.0078125
        %v2544 = vmul.f32 %v1973, 0.0078125
        %v2545 = vmul.f32 %v1975, 0.0078125
        %v2546 = vmul.f32 %v1977, 0.0078125
        %v2547 = vmul.f32 %v1979, 0.0078125
        %v2548 = vmul.f32 %v1981, 0.0078125
        %v2549 = vmul.f32 %v1983, 0.0078125
        %v2550 = vmul.f32 %v1985, 0.0078125
        %v2551 = vmul.f32 %v1987, 0.0078125
        %v2552 = vmul.f32 %v1989, 0.0078125
        %v2553 = vmul.f32 %v1991, 0.0078125
        %v2554 = vmul.f32 %v1993, 0.0078125
        %v2555 = vmul.f32 %v1995, 0.0078125
        %v2556 = vmul.f32 %v1997, 0.0078125
        %v2557 = vmul.f32 %v1999, 0.0078125
        %v2558 = vmul.f32 %v2001, 0.0078125
        %v2559 = vmul.f32 %v2003, 0.0078125
        %v2560 = vmul.f32 %v2005, 0.0078125
        %v2561 = vmul.f32 %v2007, 0.0078125
        %v2562 = vmul.f32 %v2009, 0.0078125
        %v2563 = vmul.f32 %v2011, 0.0078125
        %v2564 = vmul.f32 %v2013, 0.0078125
        %v2565 = vmul.f32 %v2015, 0.0078125
        %v2566 = vmul.f32 %v2017, 0.0078125
        %v2567 = vmul.f32 %v2019, 0.0078125
        %v2568 = vmul.f32 %v2021, 0.0078125
        %v2569 = vmul.f32 %v2023, 0.0078125
        %v2570 = vmul.f32 %v2025, 0.0078125
        %v2571 = vmul.f32 %v2027, 0.0078125
        %v2572 = vmul.f32 %v2029, 0.0078125
        %v2573 = vmul.f32 %v2031, 0.0078125
        %v2574 = vmul.f32 %v2033, 0.0078125
        %v2575 = vmul.f32 %v2035, 0.0078125
        %v2576 = vmul.f32 %v2037, 0.0078125
        %v2577 = vmul.f32 %v2039, 0.0078125
        %v2578 = vmul.f32 %v2041, 0.0078125
        %v2579 = vmul.f32 %v2043, 0.0078125
        %v2580 = vmul.f32 %v2045, 0.0078125
        %v2581 = vmul.f32 %v2047, 0.0078125
        %v2582 = vmul.f32 %v2049, 0.0078125
        %v2583 = vmul.f32 %v2051, 0.0078125
        %v2584 = vmul.f32 %v2053, 0.0078125
        %v2585 = vmul.f32 %v2055, 0.0078125
        %v2586 = vmul.f32 %v2057, 0.0078125
        %v2587 = vmul.f32 %v2059, 0.0078125
        %v2588 = vmul.f32 %v2061, 0.0078125
        %v2589 = vmul.f32 %v2063, 0.0078125
        %v2590 = vmul.f32 %v2065, 0.0078125
        %v2591 = vmul.f32 %v2067, 0.0078125
        %v2592 = vmul.f32 %v2069, 0.0078125
        %v2593 = vmul.f32 %v2071, 0.0078125
        %v2594 = vmul.f32 %v2073, 0.0078125
        %v2595 = vmul.f32 %v2075, 0.0078125
        %v2596 = vmul.f32 %v2077, 0.0078125
        %v2597 = vmul.f32 %v2079, 0.0078125
        %v2598 = vmul.f32 %v2081, 0.0078125
        %v2599 = vmul.f32 %v2083, 0.0078125
        %v2600 = vmul.f32 %v2085, 0.0078125
        %v2601 = vmul.f32 %v2087, 0.0078125
        %v2602 = vmul.f32 %v2089, 0.0078125
        %v2603 = vmul.f32 %v2091, 0.0078125
        %v2604 = vmul.f32 %v2221, 0.0078125
        %v2605 = vmul.f32 %v2223, 0.0078125
        %v2606 = vmul.f32 %v2225, 0.0078125
        %v2607 = vmul.f32 %v2227, 0.0078125
        %v2608 = vmul.f32 %v2229, 0.0078125
        %v2609 = vmul.f32 %v2231, 0.0078125
        %v2610 = vmul.f32 %v2233, 0.0078125
        %v2611 = vmul.f32 %v2235, 0.0078125
        %v2612 = vmul.f32 %v2237, 0.0078125
        %v2613 = vmul.f32 %v2239, 0.0078125
        %v2614 = vmul.f32 %v2241, 0.0078125
        %v2615 = vmul.f32 %v2243, 0.0078125
        %v2616 = vmul.f32 %v2245, 0.0078125
        %v2617 = vmul.f32 %v2247, 0.0078125
        %v2618 = vmul.f32 %v2249, 0.0078125
        %v2619 = vmul.f32 %v2251, 0.0078125
        %v2620 = vmul.f32 %v2253, 0.0078125
        %v2621 = vmul.f32 %v2255, 0.0078125
        %v2622 = vmul.f32 %v2257, 0.0078125
        %v2623 = vmul.f32 %v2259, 0.0078125
        %v2624 = vmul.f32 %v2261, 0.0078125
        %v2625 = vmul.f32 %v2263, 0.0078125
        %v2626 = vmul.f32 %v2265, 0.0078125
        %v2627 = vmul.f32 %v2267, 0.0078125
        %v2628 = vmul.f32 %v2269, 0.0078125
        %v2629 = vmul.f32 %v2271, 0.0078125
        %v2630 = vmul.f32 %v2273, 0.0078125
        %v2631 = vmul.f32 %v2275, 0.0078125
        %v2632 = vmul.f32 %v2277, 0.0078125
        %v2633 = vmul.f32 %v2279, 0.0078125
        %v2634 = vmul.f32 %v2281, 0.0078125
        %v2635 = vmul.f32 %v2283, 0.0078125
        %v2636 = vmul.f32 %v2285, 0.0078125
        %v2637 = vmul.f32 %v2287, 0.0078125
        %v2638 = vmul.f32 %v2289, 0.0078125
        %v2639 = vmul.f32 %v2291, 0.0078125
        %v2640 = vmul.f32 %v2293, 0.0078125
        %v2641 = vmul.f32 %v2295, 0.0078125
        %v2642 = vmul.f32 %v2297, 0.0078125
        %v2643 = vmul.f32 %v2299, 0.0078125
        %v2644 = vmul.f32 %v2301, 0.0078125
        %v2645 = vmul.f32 %v2303, 0.0078125
        %v2646 = vmul.f32 %v2305, 0.0078125
        %v2647 = vmul.f32 %v2307, 0.0078125
        %v2648 = vmul.f32 %v2309, 0.0078125
        %v2649 = vmul.f32 %v2311, 0.0078125
        %v2650 = vmul.f32 %v2313, 0.0078125
        %v2651 = vmul.f32 %v2315, 0.0078125
        %v2652 = vmul.f32 %v2317, 0.0078125
        %v2653 = vmul.f32 %v2319, 0.0078125
        %v2654 = vmul.f32 %v2321, 0.0078125
        %v2655 = vmul.f32 %v2323, 0.0078125
        %v2656 = vmul.f32 %v2325, 0.0078125
        %v2657 = vmul.f32 %v2327, 0.0078125
        %v2658 = vmul.f32 %v2329, 0.0078125
        %v2659 = vmul.f32 %v2331, 0.0078125
        %v2660 = vmul.f32 %v2333, 0.0078125
        %v2661 = vmul.f32 %v2335, 0.0078125
        %v2662 = vmul.f32 %v2337, 0.0078125
        %v2663 = vmul.f32 %v2339, 0.0078125
        %v2664 = vmul.f32 %v2341, 0.0078125
        %v2665 = vmul.f32 %v2343, 0.0078125
        %v2666 = vmul.f32 %v2345, 0.0078125
        %v2667 = vmul.f32 %v2347, 0.0078125
        %v2668 = vmul.f32 %v2349, 0.0078125
        %v2669 = vmul.f32 %v2351, 0.0078125
        %v2670 = vmul.f32 %v2353, 0.0078125
        %v2671 = vmul.f32 %v2355, 0.0078125
        %v2672 = vmul.f32 %v2357, 0.0078125
        %v2673 = vmul.f32 %v2359, 0.0078125
        %v2674 = vmul.f32 %v2361, 0.0078125
        %v2675 = vmul.f32 %v2363, 0.0078125
        %v2676 = vmul.f32 %v2365, 0.0078125
        %v2677 = vmul.f32 %v2367, 0.0078125
        %v2678 = vmul.f32 %v2369, 0.0078125
        %v2679 = vmul.f32 %v2371, 0.0078125
        %v2680 = vmul.f32 %v2373, 0.0078125
        %v2681 = vmul.f32 %v2375, 0.0078125
        %v2682 = vmul.f32 %v2377, 0.0078125
        %v2683 = vmul.f32 %v2379, 0.0078125
        %v2684 = vmul.f32 %v2381, 0.0078125
        %v2685 = vmul.f32 %v2383, 0.0078125
        %v2686 = vmul.f32 %v2385, 0.0078125
        %v2687 = vmul.f32 %v2387, 0.0078125
        %v2688 = vmul.f32 %v2389, 0.0078125
        %v2689 = vmul.f32 %v2391, 0.0078125
        %v2690 = vmul.f32 %v2393, 0.0078125
        %v2691 = vmul.f32 %v2395, 0.0078125
        %v2692 = vmul.f32 %v2397, 0.0078125
        %v2693 = vmul.f32 %v2399, 0.0078125
        %v2694 = vmul.f32 %v2401, 0.0078125
        %v2695 = vmul.f32 %v2403, 0.0078125
        %v2696 = vmul.f32 %v2405, 0.0078125
        %v2697 = vmul.f32 %v2407, 0.0078125
        %v2698 = vmul.f32 %v2409, 0.0078125
        %v2699 = vmul.f32 %v2411, 0.0078125
        %v2700 = vmul.f32 %v2413, 0.0078125
        %v2701 = vmul.f32 %v2415, 0.0078125
        %v2702 = vmul.f32 %v2417, 0.0078125
        %v2703 = vmul.f32 %v2419, 0.0078125
        %v2704 = vmul.f32 %v2421, 0.0078125
        %v2705 = vmul.f32 %v2423, 0.0078125
        %v2706 = vmul.f32 %v2425, 0.0078125
        %v2707 = vmul.f32 %v2427, 0.0078125
        %v2708 = vmul.f32 %v2429, 0.0078125
        %v2709 = vmul.f32 %v2431, 0.0078125
        %v2710 = vmul.f32 %v2433, 0.0078125
        %v2711 = vmul.f32 %v2435, 0.0078125
        %v2712 = vmul.f32 %v2437, 0.0078125
        %v2713 = vmul.f32 %v2439, 0.0078125
        %v2714 = vmul.f32 %v2441, 0.0078125
        %v2715 = vmul.f32 %v2443, 0.0078125
        %v2716 = vmul.f32 %v2445, 0.0078125
        %v2717 = vmul.f32 %v2447, 0.0078125
        %v2718 = vmul.f32 %v2449, 0.0078125
        %v2719 = vmul.f32 %v2451, 0.0078125
        %v2720 = vmul.f32 %v2453, 0.0078125
        %v2721 = vmul.f32 %v2455, 0.0078125
        %v2722 = vmul.f32 %v2457, 0.0078125
        %v2723 = vmul.f32 %v2459, 0.0078125
        %v2724 = vmul.f32 %v2461, 0.0078125
        %v2725 = vmul.f32 %v2463, 0.0078125
        %v2726 = vmul.f32 %v2465, 0.0078125
        %v2727 = vmul.f32 %v2467, 0.0078125
        %v2728 = vmul.f32 %v2469, 0.0078125
        %v2729 = vmul.f32 %v2471, 0.0078125
        %v2730 = vmul.f32 %v2473, 0.0078125
        %v2731 = vmul.f32 %v2475, 0.0078125
        %v2732 = vmul.f32 %v2476, %v2476
        %v2733 = vmul.f32 %v2477, %v2477
        %v2734 = vmul.f32 %v2478, %v2478
        %v2735 = vmul.f32 %v2479, %v2479
        %v2736 = vmul.f32 %v2480, %v2480
        %v2737 = vmul.f32 %v2481, %v2481
        %v2738 = vmul.f32 %v2482, %v2482
        %v2739 = vmul.f32 %v2483, %v2483
        %v2740 = vmul.f32 %v2484, %v2484
        %v2741 = vmul.f32 %v2485, %v2485
        %v2742 = vmul.f32 %v2486, %v2486
        %v2743 = vmul.f32 %v2487, %v2487
        %v2744 = vmul.f32 %v2488, %v2488
        %v2745 = vmul.f32 %v2489, %v2489
        %v2746 = vmul.f32 %v2490, %v2490
        %v2747 = vmul.f32 %v2491, %v2491
        %v2748 = vmul.f32 %v2492, %v2492
        %v2749 = vmul.f32 %v2493, %v2493
        %v2750 = vmul.f32 %v2494, %v2494
        %v2751 = vmul.f32 %v2495, %v2495
        %v2752 = vmul.f32 %v2496, %v2496
        %v2753 = vmul.f32 %v2497, %v2497
        %v2754 = vmul.f32 %v2498, %v2498
        %v2755 = vmul.f32 %v2499, %v2499
        %v2756 = vmul.f32 %v2500, %v2500
        %v2757 = vmul.f32 %v2501, %v2501
        %v2758 = vmul.f32 %v2502, %v2502
        %v2759 = vmul.f32 %v2503, %v2503
        %v2760 = vmul.f32 %v2504, %v2504
        %v2761 = vmul.f32 %v2505, %v2505
        %v2762 = vmul.f32 %v2506, %v2506
        %v2763 = vmul.f32 %v2507, %v2507
        %v2764 = vmul.f32 %v2508, %v2508
        %v2765 = vmul.f32 %v2509, %v2509
        %v2766 = vmul.f32 %v2510, %v2510
        %v2767 = vmul.f32 %v2511, %v2511
        %v2768 = vmul.f32 %v2512, %v2512
        %v2769 = vmul.f32 %v2513, %v2513
        %v2770 = vmul.f32 %v2514, %v2514
        %v2771 = vmul.f32 %v2515, %v2515
        %v2772 = vmul.f32 %v2516, %v2516
        %v2773 = vmul.f32 %v2517, %v2517
        %v2774 = vmul.f32 %v2518, %v2518
        %v2775 = vmul.f32 %v2519, %v2519
        %v2776 = vmul.f32 %v2520, %v2520
        %v2777 = vmul.f32 %v2521, %v2521
        %v2778 = vmul.f32 %v2522, %v2522
        %v2779 = vmul.f32 %v2523, %v2523
        %v2780 = vmul.f32 %v2524, %v2524
        %v2781 = vmul.f32 %v2525, %v2525
        %v2782 = vmul.f32 %v2526, %v2526
        %v2783 = vmul.f32 %v2527, %v2527
        %v2784 = vmul.f32 %v2528, %v2528
        %v2785 = vmul.f32 %v2529, %v2529
        %v2786 = vmul.f32 %v2530, %v2530
        %v2787 = vmul.f32 %v2531, %v2531
        %v2788 = vmul.f32 %v2532, %v2532
        %v2789 = vmul.f32 %v2533, %v2533
        %v2790 = vmul.f32 %v2534, %v2534
        %v2791 = vmul.f32 %v2535, %v2535
        %v2792 = vmul.f32 %v2536, %v2536
        %v2793 = vmul.f32 %v2537, %v2537
        %v2794 = vmul.f32 %v2538, %v2538
        %v2795 = vmul.f32 %v2539, %v2539
        %v2796 = vmul.f32 %v2540, %v2540
        %v2797 = vmul.f32 %v2541, %v2541
        %v2798 = vmul.f32 %v2542, %v2542
        %v2799 = vmul.f32 %v2543, %v2543
        %v2800 = vmul.f32 %v2544, %v2544
        %v2801 = vmul.f32 %v2545, %v2545
        %v2802 = vmul.f32 %v2546, %v2546
        %v2803 = vmul.f32 %v2547, %v2547
        %v2804 = vmul.f32 %v2548, %v2548
        %v2805 = vmul.f32 %v2549, %v2549
        %v2806 = vmul.f32 %v2550, %v2550
        %v2807 = vmul.f32 %v2551, %v2551
        %v2808 = vmul.f32 %v2552, %v2552
        %v2809 = vmul.f32 %v2553, %v2553
        %v2810 = vmul.f32 %v2554, %v2554
        %v2811 = vmul.f32 %v2555, %v2555
        %v2812 = vmul.f32 %v2556, %v2556
        %v2813 = vmul.f32 %v2557, %v2557
        %v2814 = vmul.f32 %v2558, %v2558
        %v2815 = vmul.f32 %v2559, %v2559
        %v2816 = vmul.f32 %v2560, %v2560
        %v2817 = vmul.f32 %v2561, %v2561
        %v2818 = vmul.f32 %v2562, %v2562
        %v2819 = vmul.f32 %v2563, %v2563
        %v2820 = vmul.f32 %v2564, %v2564
        %v2821 = vmul.f32 %v2565, %v2565
        %v2822 = vmul.f32 %v2566, %v2566
        %v2823 = vmul.f32 %v2567, %v2567
        %v2824 = vmul.f32 %v2568, %v2568
        %v2825 = vmul.f32 %v2569, %v2569
        %v2826 = vmul.f32 %v2570, %v2570
        %v2827 = vmul.f32 %v2571, %v2571
        %v2828 = vmul.f32 %v2572, %v2572
        %v2829 = vmul.f32 %v2573, %v2573
        %v2830 = vmul.f32 %v2574, %v2574
        %v2831 = vmul.f32 %v2575, %v2575
        %v2832 = vmul.f32 %v2576, %v2576
        %v2833 = vmul.f32 %v2577, %v2577
        %v2834 = vmul.f32 %v2578, %v2578
        %v2835 = vmul.f32 %v2579, %v2579
        %v2836 = vmul.f32 %v2580, %v2580
        %v2837 = vmul.f32 %v2581, %v2581
        %v2838 = vmul.f32 %v2582, %v2582
        %v2839 = vmul.f32 %v2583, %v2583
        %v2840 = vmul.f32 %v2584, %v2584
        %v2841 = vmul.f32 %v2585, %v2585
        %v2842 = vmul.f32 %v2586, %v2586
        %v2843 = vmul.f32 %v2587, %v2587
        %v2844 = vmul.f32 %v2588, %v2588
        %v2845 = vmul.f32 %v2589, %v2589
        %v2846 = vmul.f32 %v2590, %v2590
        %v2847 = vmul.f32 %v2591, %v2591
        %v2848 = vmul.f32 %v2592, %v2592
        %v2849 = vmul.f32 %v2593, %v2593
        %v2850 = vmul.f32 %v2594, %v2594
        %v2851 = vmul.f32 %v2595, %v2595
        %v2852 = vmul.f32 %v2596, %v2596
        %v2853 = vmul.f32 %v2597, %v2597
        %v2854 = vmul.f32 %v2598, %v2598
        %v2855 = vmul.f32 %v2599, %v2599
        %v2856 = vmul.f32 %v2600, %v2600
        %v2857 = vmul.f32 %v2601, %v2601
        %v2858 = vmul.f32 %v2602, %v2602
        %v2859 = vmul.f32 %v2603, %v2603
        %v2860 = vsub.f32 %v2604, %v2732
        %v2861 = vsub.f32 %v2605, %v2733
        %v2862 = vsub.f32 %v2606, %v2734
        %v2863 = vsub.f32 %v2607, %v2735
        %v2864 = vsub.f32 %v2608, %v2736
        %v2865 = vsub.f32 %v2609, %v2737
        %v2866 = vsub.f32 %v2610, %v2738
        %v2867 = vsub.f32 %v2611, %v2739
        %v2868 = vsub.f32 %v2612, %v2740
        %v2869 = vsub.f32 %v2613, %v2741
        %v2870 = vsub.f32 %v2614, %v2742
        %v2871 = vsub.f32 %v2615, %v2743
        %v2872 = vsub.f32 %v2616, %v2744
        %v2873 = vsub.f32 %v2617, %v2745
        %v2874 = vsub.f32 %v2618, %v2746
        %v2875 = vsub.f32 %v2619, %v2747
        %v2876 = vsub.f32 %v2620, %v2748
        %v2877 = vsub.f32 %v2621, %v2749
        %v2878 = vsub.f32 %v2622, %v2750
        %v2879 = vsub.f32 %v2623, %v2751
        %v2880 = vsub.f32 %v2624, %v2752
        %v2881 = vsub.f32 %v2625, %v2753
        %v2882 = vsub.f32 %v2626, %v2754
        %v2883 = vsub.f32 %v2627, %v2755
        %v2884 = vsub.f32 %v2628, %v2756
        %v2885 = vsub.f32 %v2629, %v2757
        %v2886 = vsub.f32 %v2630, %v2758
        %v2887 = vsub.f32 %v2631, %v2759
        %v2888 = vsub.f32 %v2632, %v2760
        %v2889 = vsub.f32 %v2633, %v2761
        %v2890 = vsub.f32 %v2634, %v2762
        %v2891 = vsub.f32 %v2635, %v2763
        %v2892 = vsub.f32 %v2636, %v2764
        %v2893 = vsub.f32 %v2637, %v2765
        %v2894 = vsub.f32 %v2638, %v2766
        %v2895 = vsub.f32 %v2639, %v2767
        %v2896 = vsub.f32 %v2640, %v2768
        %v2897 = vsub.f32 %v2641, %v2769
        %v2898 = vsub.f32 %v2642, %v2770
        %v2899 = vsub.f32 %v2643, %v2771
        %v2900 = vsub.f32 %v2644, %v2772
        %v2901 = vsub.f32 %v2645, %v2773
        %v2902 = vsub.f32 %v2646, %v2774
        %v2903 = vsub.f32 %v2647, %v2775
        %v2904 = vsub.f32 %v2648, %v2776
        %v2905 = vsub.f32 %v2649, %v2777
        %v2906 = vsub.f32 %v2650, %v2778
        %v2907 = vsub.f32 %v2651, %v2779
        %v2908 = vsub.f32 %v2652, %v2780
        %v2909 = vsub.f32 %v2653, %v2781
        %v2910 = vsub.f32 %v2654, %v2782
        %v2911 = vsub.f32 %v2655, %v2783
        %v2912 = vsub.f32 %v2656, %v2784
        %v2913 = vsub.f32 %v2657, %v2785
        %v2914 = vsub.f32 %v2658, %v2786
        %v2915 = vsub.f32 %v2659, %v2787
        %v2916 = vsub.f32 %v2660, %v2788
        %v2917 = vsub.f32 %v2661, %v2789
        %v2918 = vsub.f32 %v2662, %v2790
        %v2919 = vsub.f32 %v2663, %v2791
        %v2920 = vsub.f32 %v2664, %v2792
        %v2921 = vsub.f32 %v2665, %v2793
        %v2922 = vsub.f32 %v2666, %v2794
        %v2923 = vsub.f32 %v2667, %v2795
        %v2924 = vsub.f32 %v2668, %v2796
        %v2925 = vsub.f32 %v2669, %v2797
        %v2926 = vsub.f32 %v2670, %v2798
        %v2927 = vsub.f32 %v2671, %v2799
        %v2928 = vsub.f32 %v2672, %v2800
        %v2929 = vsub.f32 %v2673, %v2801
        %v2930 = vsub.f32 %v2674, %v2802
        %v2931 = vsub.f32 %v2675, %v2803
        %v2932 = vsub.f32 %v2676, %v2804
        %v2933 = vsub.f32 %v2677, %v2805
        %v2934 = vsub.f32 %v2678, %v2806
        %v2935 = vsub.f32 %v2679, %v2807
        %v2936 = vsub.f32 %v2680, %v2808
        %v2937 = vsub.f32 %v2681, %v2809
        %v2938 = vsub.f32 %v2682, %v2810
        %v2939 = vsub.f32 %v2683, %v2811
        %v2940 = vsub.f32 %v2684, %v2812
        %v2941 = vsub.f32 %v2685, %v2813
        %v2942 = vsub.f32 %v2686, %v2814
        %v2943 = vsub.f32 %v2687, %v2815
        %v2944 = vsub.f32 %v2688, %v2816
        %v2945 = vsub.f32 %v2689, %v2817
        %v2946 = vsub.f32 %v2690, %v2818
        %v2947 = vsub.f32 %v2691, %v2819
        %v2948 = vsub.f32 %v2692, %v2820
        %v2949 = vsub.f32 %v2693, %v2821
        %v2950 = vsub.f32 %v2694, %v2822
        %v2951 = vsub.f32 %v2695, %v2823
        %v2952 = vsub.f32 %v2696, %v2824
        %v2953 = vsub.f32 %v2697, %v2825
        %v2954 = vsub.f32 %v2698, %v2826
        %v2955 = vsub.f32 %v2699, %v2827
        %v2956 = vsub.f32 %v2700, %v2828
        %v2957 = vsub.f32 %v2701, %v2829
        %v2958 = vsub.f32 %v2702, %v2830
        %v2959 = vsub.f32 %v2703, %v2831
        %v2960 = vsub.f32 %v2704, %v2832
        %v2961 = vsub.f32 %v2705, %v2833
        %v2962 = vsub.f32 %v2706, %v2834
        %v2963 = vsub.f32 %v2707, %v2835
        %v2964 = vsub.f32 %v2708, %v2836
        %v2965 = vsub.f32 %v2709, %v2837
        %v2966 = vsub.f32 %v2710, %v2838
        %v2967 = vsub.f32 %v2711, %v2839
        %v2968 = vsub.f32 %v2712, %v2840
        %v2969 = vsub.f32 %v2713, %v2841
        %v2970 = vsub.f32 %v2714, %v2842
        %v2971 = vsub.f32 %v2715, %v2843
        %v2972 = vsub.f32 %v2716, %v2844
        %v2973 = vsub.f32 %v2717, %v2845
        %v2974 = vsub.f32 %v2718, %v2846
        %v2975 = vsub.f32 %v2719, %v2847
        %v2976 = vsub.f32 %v2720, %v2848
        %v2977 = vsub.f32 %v2721, %v2849
        %v2978 = vsub.f32 %v2722, %v2850
        %v2979 = vsub.f32 %v2723, %v2851
        %v2980 = vsub.f32 %v2724, %v2852
        %v2981 = vsub.f32 %v2725, %v2853
        %v2982 = vsub.f32 %v2726, %v2854
        %v2983 = vsub.f32 %v2727, %v2855
        %v2984 = vsub.f32 %v2728, %v2856
        %v2985 = vsub.f32 %v2729, %v2857
        %v2986 = vsub.f32 %v2730, %v2858
        %v2987 = vsub.f32 %v2731, %v2859
        %v2988 = vmax.f32 %v2860, 0.0
        %v2989 = vmax.f32 %v2861, 0.0
        %v2990 = vmax.f32 %v2862, 0.0
        %v2991 = vmax.f32 %v2863, 0.0
        %v2992 = vmax.f32 %v2864, 0.0
        %v2993 = vmax.f32 %v2865, 0.0
        %v2994 = vmax.f32 %v2866, 0.0
        %v2995 = vmax.f32 %v2867, 0.0
        %v2996 = vmax.f32 %v2868, 0.0
        %v2997 = vmax.f32 %v2869, 0.0
        %v2998 = vmax.f32 %v2870, 0.0
        %v2999 = vmax.f32 %v2871, 0.0
        %v3000 = vmax.f32 %v2872, 0.0
        %v3001 = vmax.f32 %v2873, 0.0
        %v3002 = vmax.f32 %v2874, 0.0
        %v3003 = vmax.f32 %v2875, 0.0
        %v3004 = vmax.f32 %v2876, 0.0
        %v3005 = vmax.f32 %v2877, 0.0
        %v3006 = vmax.f32 %v2878, 0.0
        %v3007 = vmax.f32 %v2879, 0.0
        %v3008 = vmax.f32 %v2880, 0.0
        %v3009 = vmax.f32 %v2881, 0.0
        %v3010 = vmax.f32 %v2882, 0.0
        %v3011 = vmax.f32 %v2883, 0.0
        %v3012 = vmax.f32 %v2884, 0.0
        %v3013 = vmax.f32 %v2885, 0.0
        %v3014 = vmax.f32 %v2886, 0.0
        %v3015 = vmax.f32 %v2887, 0.0
        %v3016 = vmax.f32 %v2888, 0.0
        %v3017 = vmax.f32 %v2889, 0.0
        %v3018 = vmax.f32 %v2890, 0.0
        %v3019 = vmax.f32 %v2891, 0.0
        %v3020 = vmax.f32 %v2892, 0.0
        %v3021 = vmax.f32 %v2893, 0.0
        %v3022 = vmax.f32 %v2894, 0.0
        %v3023 = vmax.f32 %v2895, 0.0
        %v3024 = vmax.f32 %v2896, 0.0
        %v3025 = vmax.f32 %v2897, 0.0
        %v3026 = vmax.f32 %v2898, 0.0
        %v3027 = vmax.f32 %v2899, 0.0
        %v3028 = vmax.f32 %v2900, 0.0
        %v3029 = vmax.f32 %v2901, 0.0
        %v3030 = vmax.f32 %v2902, 0.0
        %v3031 = vmax.f32 %v2903, 0.0
        %v3032 = vmax.f32 %v2904, 0.0
        %v3033 = vmax.f32 %v2905, 0.0
        %v3034 = vmax.f32 %v2906, 0.0
        %v3035 = vmax.f32 %v2907, 0.0
        %v3036 = vmax.f32 %v2908, 0.0
        %v3037 = vmax.f32 %v2909, 0.0
        %v3038 = vmax.f32 %v2910, 0.0
        %v3039 = vmax.f32 %v2911, 0.0
        %v3040 = vmax.f32 %v2912, 0.0
        %v3041 = vmax.f32 %v2913, 0.0
        %v3042 = vmax.f32 %v2914, 0.0
        %v3043 = vmax.f32 %v2915, 0.0
        %v3044 = vmax.f32 %v2916, 0.0
        %v3045 = vmax.f32 %v2917, 0.0
        %v3046 = vmax.f32 %v2918, 0.0
        %v3047 = vmax.f32 %v2919, 0.0
        %v3048 = vmax.f32 %v2920, 0.0
        %v3049 = vmax.f32 %v2921, 0.0
        %v3050 = vmax.f32 %v2922, 0.0
        %v3051 = vmax.f32 %v2923, 0.0
        %v3052 = vmax.f32 %v2924, 0.0
        %v3053 = vmax.f32 %v2925, 0.0
        %v3054 = vmax.f32 %v2926, 0.0
        %v3055 = vmax.f32 %v2927, 0.0
        %v3056 = vmax.f32 %v2928, 0.0
        %v3057 = vmax.f32 %v2929, 0.0
        %v3058 = vmax.f32 %v2930, 0.0
        %v3059 = vmax.f32 %v2931, 0.0
        %v3060 = vmax.f32 %v2932, 0.0
        %v3061 = vmax.f32 %v2933, 0.0
        %v3062 = vmax.f32 %v2934, 0.0
        %v3063 = vmax.f32 %v2935, 0.0
        %v3064 = vmax.f32 %v2936, 0.0
        %v3065 = vmax.f32 %v2937, 0.0
        %v3066 = vmax.f32 %v2938, 0.0
        %v3067 = vmax.f32 %v2939, 0.0
        %v3068 = vmax.f32 %v2940, 0.0
        %v3069 = vmax.f32 %v2941, 0.0
        %v3070 = vmax.f32 %v2942, 0.0
        %v3071 = vmax.f32 %v2943, 0.0
        %v3072 = vmax.f32 %v2944, 0.0
        %v3073 = vmax.f32 %v2945, 0.0
        %v3074 = vmax.f32 %v2946, 0.0
        %v3075 = vmax.f32 %v2947, 0.0
        %v3076 = vmax.f32 %v2948, 0.0
        %v3077 = vmax.f32 %v2949, 0.0
        %v3078 = vmax.f32 %v2950, 0.0
        %v3079 = vmax.f32 %v2951, 0.0
        %v3080 = vmax.f32 %v2952, 0.0
        %v3081 = vmax.f32 %v2953, 0.0
        %v3082 = vmax.f32 %v2954, 0.0
        %v3083 = vmax.f32 %v2955, 0.0
        %v3084 = vmax.f32 %v2956, 0.0
        %v3085 = vmax.f32 %v2957, 0.0
        %v3086 = vmax.f32 %v2958, 0.0
        %v3087 = vmax.f32 %v2959, 0.0
        %v3088 = vmax.f32 %v2960, 0.0
        %v3089 = vmax.f32 %v2961, 0.0
        %v3090 = vmax.f32 %v2962, 0.0
        %v3091 = vmax.f32 %v2963, 0.0
        %v3092 = vmax.f32 %v2964, 0.0
        %v3093 = vmax.f32 %v2965, 0.0
        %v3094 = vmax.f32 %v2966, 0.0
        %v3095 = vmax.f32 %v2967, 0.0
        %v3096 = vmax.f32 %v2968, 0.0
        %v3097 = vmax.f32 %v2969, 0.0
        %v3098 = vmax.f32 %v2970, 0.0
        %v3099 = vmax.f32 %v2971, 0.0
        %v3100 = vmax.f32 %v2972, 0.0
        %v3101 = vmax.f32 %v2973, 0.0
        %v3102 = vmax.f32 %v2974, 0.0
        %v3103 = vmax.f32 %v2975, 0.0
        %v3104 = vmax.f32 %v2976, 0.0
        %v3105 = vmax.f32 %v2977, 0.0
        %v3106 = vmax.f32 %v2978, 0.0
        %v3107 = vmax.f32 %v2979, 0.0
        %v3108 = vmax.f32 %v2980, 0.0
        %v3109 = vmax.f32 %v2981, 0.0
        %v3110 = vmax.f32 %v2982, 0.0
        %v3111 = vmax.f32 %v2983, 0.0
        %v3112 = vmax.f32 %v2984, 0.0
        %v3113 = vmax.f32 %v2985, 0.0
        %v3114 = vmax.f32 %v2986, 0.0
        %v3115 = vmax.f32 %v2987, 0.0
        %v3116 = vsub.f32 %v1708, %v2476
        %v3117 = vsub.f32 %v1709, %v2477
        %v3118 = vsub.f32 %v1710, %v2478
        %v3119 = vsub.f32 %v1711, %v2479
        %v3120 = vsub.f32 %v1712, %v2480
        %v3121 = vsub.f32 %v1713, %v2481
        %v3122 = vsub.f32 %v1714, %v2482
        %v3123 = vsub.f32 %v1715, %v2483
        %v3124 = vsub.f32 %v1716, %v2484
        %v3125 = vsub.f32 %v1717, %v2485
        %v3126 = vsub.f32 %v1718, %v2486
        %v3127 = vsub.f32 %v1719, %v2487
        %v3128 = vsub.f32 %v1720, %v2488
        %v3129 = vsub.f32 %v1721, %v2489
        %v3130 = vsub.f32 %v1722, %v2490
        %v3131 = vsub.f32 %v1723, %v2491
        %v3132 = vsub.f32 %v1724, %v2492
        %v3133 = vsub.f32 %v1725, %v2493
        %v3134 = vsub.f32 %v1726, %v2494
        %v3135 = vsub.f32 %v1727, %v2495
        %v3136 = vsub.f32 %v1728, %v2496
        %v3137 = vsub.f32 %v1729, %v2497
        %v3138 = vsub.f32 %v1730, %v2498
        %v3139 = vsub.f32 %v1731, %v2499
        %v3140 = vsub.f32 %v1732, %v2500
        %v3141 = vsub.f32 %v1733, %v2501
        %v3142 = vsub.f32 %v1734, %v2502
        %v3143 = vsub.f32 %v1735, %v2503
        %v3144 = vsub.f32 %v1736, %v2504
        %v3145 = vsub.f32 %v1737, %v2505
        %v3146 = vsub.f32 %v1738, %v2506
        %v3147 = vsub.f32 %v1739, %v2507
        %v3148 = vsub.f32 %v1740, %v2508
        %v3149 = vsub.f32 %v1741, %v2509
        %v3150 = vsub.f32 %v1742, %v2510
        %v3151 = vsub.f32 %v1743, %v2511
        %v3152 = vsub.f32 %v1744, %v2512
        %v3153 = vsub.f32 %v1745, %v2513
        %v3154 = vsub.f32 %v1746, %v2514
        %v3155 = vsub.f32 %v1747, %v2515
        %v3156 = vsub.f32 %v1748, %v2516
        %v3157 = vsub.f32 %v1749, %v2517
        %v3158 = vsub.f32 %v1750, %v2518
        %v3159 = vsub.f32 %v1751, %v2519
        %v3160 = vsub.f32 %v1752, %v2520
        %v3161 = vsub.f32 %v1753, %v2521
        %v3162 = vsub.f32 %v1754, %v2522
        %v3163 = vsub.f32 %v1755, %v2523
        %v3164 = vsub.f32 %v1756, %v2524
        %v3165 = vsub.f32 %v1757, %v2525
        %v3166 = vsub.f32 %v1758, %v2526
        %v3167 = vsub.f32 %v1759, %v2527
        %v3168 = vsub.f32 %v1760, %v2528
        %v3169 = vsub.f32 %v1761, %v2529
        %v3170 = vsub.f32 %v1762, %v2530
        %v3171 = vsub.f32 %v1763, %v2531
        %v3172 = vsub.f32 %v1764, %v2532
        %v3173 = vsub.f32 %v1765, %v2533
        %v3174 = vsub.f32 %v1766, %v2534
        %v3175 = vsub.f32 %v1767, %v2535
        %v3176 = vsub.f32 %v1768, %v2536
        %v3177 = vsub.f32 %v1769, %v2537
        %v3178 = vsub.f32 %v1770, %v2538
        %v3179 = vsub.f32 %v1771, %v2539
        %v3180 = vsub.f32 %v1772, %v2540
        %v3181 = vsub.f32 %v1773, %v2541
        %v3182 = vsub.f32 %v1774, %v2542
        %v3183 = vsub.f32 %v1775, %v2543
        %v3184 = vsub.f32 %v1776, %v2544
        %v3185 = vsub.f32 %v1777, %v2545
        %v3186 = vsub.f32 %v1778, %v2546
        %v3187 = vsub.f32 %v1779, %v2547
        %v3188 = vsub.f32 %v1780, %v2548
        %v3189 = vsub.f32 %v1781, %v2549
        %v3190 = vsub.f32 %v1782, %v2550
        %v3191 = vsub.f32 %v1783, %v2551
        %v3192 = vsub.f32 %v1784, %v2552
        %v3193 = vsub.f32 %v1785, %v2553
        %v3194 = vsub.f32 %v1786, %v2554
        %v3195 = vsub.f32 %v1787, %v2555
        %v3196 = vsub.f32 %v1788, %v2556
        %v3197 = vsub.f32 %v1789, %v2557
        %v3198 = vsub.f32 %v1790, %v2558
        %v3199 = vsub.f32 %v1791, %v2559
        %v3200 = vsub.f32 %v1792, %v2560
        %v3201 = vsub.f32 %v1793, %v2561
        %v3202 = vsub.f32 %v1794, %v2562
        %v3203 = vsub.f32 %v1795, %v2563
        %v3204 = vsub.f32 %v1796, %v2564
        %v3205 = vsub.f32 %v1797, %v2565
        %v3206 = vsub.f32 %v1798, %v2566
        %v3207 = vsub.f32 %v1799, %v2567
        %v3208 = vsub.f32 %v1800, %v2568
        %v3209 = vsub.f32 %v1801, %v2569
        %v3210 = vsub.f32 %v1802, %v2570
        %v3211 = vsub.f32 %v1803, %v2571
        %v3212 = vsub.f32 %v1804, %v2572
        %v3213 = vsub.f32 %v1805, %v2573
        %v3214 = vsub.f32 %v1806, %v2574
        %v3215 = vsub.f32 %v1807, %v2575
        %v3216 = vsub.f32 %v1808, %v2576
        %v3217 = vsub.f32 %v1809, %v2577
        %v3218 = vsub.f32 %v1810, %v2578
        %v3219 = vsub.f32 %v1811, %v2579
        %v3220 = vsub.f32 %v1812, %v2580
        %v3221 = vsub.f32 %v1813, %v2581
        %v3222 = vsub.f32 %v1814, %v2582
        %v3223 = vsub.f32 %v1815, %v2583
        %v3224 = vsub.f32 %v1816, %v2584
        %v3225 = vsub.f32 %v1817, %v2585
        %v3226 = vsub.f32 %v1818, %v2586
        %v3227 = vsub.f32 %v1819, %v2587
        %v3228 = vsub.f32 %v1820, %v2588
        %v3229 = vsub.f32 %v1821, %v2589
        %v3230 = vsub.f32 %v1822, %v2590
        %v3231 = vsub.f32 %v1823, %v2591
        %v3232 = vsub.f32 %v1824, %v2592
        %v3233 = vsub.f32 %v1825, %v2593
        %v3234 = vsub.f32 %v1826, %v2594
        %v3235 = vsub.f32 %v1827, %v2595
        %v3236 = vsub.f32 %v1828, %v2596
        %v3237 = vsub.f32 %v1829, %v2597
        %v3238 = vsub.f32 %v1830, %v2598
        %v3239 = vsub.f32 %v1831, %v2599
        %v3240 = vsub.f32 %v1832, %v2600
        %v3241 = vsub.f32 %v1833, %v2601
        %v3242 = vsub.f32 %v1834, %v2602
        %v3243 = vsub.f32 %v1835, %v2603
        %v3244 = vadd.f32 %v2988, 1e-12
        %v3245 = vadd.f32 %v2989, 1e-12
        %v3246 = vadd.f32 %v2990, 1e-12
        %v3247 = vadd.f32 %v2991, 1e-12
        %v3248 = vadd.f32 %v2992, 1e-12
        %v3249 = vadd.f32 %v2993, 1e-12
        %v3250 = vadd.f32 %v2994, 1e-12
        %v3251 = vadd.f32 %v2995, 1e-12
        %v3252 = vadd.f32 %v2996, 1e-12
        %v3253 = vadd.f32 %v2997, 1e-12
        %v3254 = vadd.f32 %v2998, 1e-12
        %v3255 = vadd.f32 %v2999, 1e-12
        %v3256 = vadd.f32 %v3000, 1e-12
        %v3257 = vadd.f32 %v3001, 1e-12
        %v3258 = vadd.f32 %v3002, 1e-12
        %v3259 = vadd.f32 %v3003, 1e-12
        %v3260 = vadd.f32 %v3004, 1e-12
        %v3261 = vadd.f32 %v3005, 1e-12
        %v3262 = vadd.f32 %v3006, 1e-12
        %v3263 = vadd.f32 %v3007, 1e-12
        %v3264 = vadd.f32 %v3008, 1e-12
        %v3265 = vadd.f32 %v3009, 1e-12
        %v3266 = vadd.f32 %v3010, 1e-12
        %v3267 = vadd.f32 %v3011, 1e-12
        %v3268 = vadd.f32 %v3012, 1e-12
        %v3269 = vadd.f32 %v3013, 1e-12
        %v3270 = vadd.f32 %v3014, 1e-12
        %v3271 = vadd.f32 %v3015, 1e-12
        %v3272 = vadd.f32 %v3016, 1e-12
        %v3273 = vadd.f32 %v3017, 1e-12
        %v3274 = vadd.f32 %v3018, 1e-12
        %v3275 = vadd.f32 %v3019, 1e-12
        %v3276 = vadd.f32 %v3020, 1e-12
        %v3277 = vadd.f32 %v3021, 1e-12
        %v3278 = vadd.f32 %v3022, 1e-12
        %v3279 = vadd.f32 %v3023, 1e-12
        %v3280 = vadd.f32 %v3024, 1e-12
        %v3281 = vadd.f32 %v3025, 1e-12
        %v3282 = vadd.f32 %v3026, 1e-12
        %v3283 = vadd.f32 %v3027, 1e-12
        %v3284 = vadd.f32 %v3028, 1e-12
        %v3285 = vadd.f32 %v3029, 1e-12
        %v3286 = vadd.f32 %v3030, 1e-12
        %v3287 = vadd.f32 %v3031, 1e-12
        %v3288 = vadd.f32 %v3032, 1e-12
        %v3289 = vadd.f32 %v3033, 1e-12
        %v3290 = vadd.f32 %v3034, 1e-12
        %v3291 = vadd.f32 %v3035, 1e-12
        %v3292 = vadd.f32 %v3036, 1e-12
        %v3293 = vadd.f32 %v3037, 1e-12
        %v3294 = vadd.f32 %v3038, 1e-12
        %v3295 = vadd.f32 %v3039, 1e-12
        %v3296 = vadd.f32 %v3040, 1e-12
        %v3297 = vadd.f32 %v3041, 1e-12
        %v3298 = vadd.f32 %v3042, 1e-12
        %v3299 = vadd.f32 %v3043, 1e-12
        %v3300 = vadd.f32 %v3044, 1e-12
        %v3301 = vadd.f32 %v3045, 1e-12
        %v3302 = vadd.f32 %v3046, 1e-12
        %v3303 = vadd.f32 %v3047, 1e-12
        %v3304 = vadd.f32 %v3048, 1e-12
        %v3305 = vadd.f32 %v3049, 1e-12
        %v3306 = vadd.f32 %v3050, 1e-12
        %v3307 = vadd.f32 %v3051, 1e-12
        %v3308 = vadd.f32 %v3052, 1e-12
        %v3309 = vadd.f32 %v3053, 1e-12
        %v3310 = vadd.f32 %v3054, 1e-12
        %v3311 = vadd.f32 %v3055, 1e-12
        %v3312 = vadd.f32 %v3056, 1e-12
        %v3313 = vadd.f32 %v3057, 1e-12
        %v3314 = vadd.f32 %v3058, 1e-12
        %v3315 = vadd.f32 %v3059, 1e-12
        %v3316 = vadd.f32 %v3060, 1e-12
        %v3317 = vadd.f32 %v3061, 1e-12
        %v3318 = vadd.f32 %v3062, 1e-12
        %v3319 = vadd.f32 %v3063, 1e-12
        %v3320 = vadd.f32 %v3064, 1e-12
        %v3321 = vadd.f32 %v3065, 1e-12
        %v3322 = vadd.f32 %v3066, 1e-12
        %v3323 = vadd.f32 %v3067, 1e-12
        %v3324 = vadd.f32 %v3068, 1e-12
        %v3325 = vadd.f32 %v3069, 1e-12
        %v3326 = vadd.f32 %v3070, 1e-12
        %v3327 = vadd.f32 %v3071, 1e-12
        %v3328 = vadd.f32 %v3072, 1e-12
        %v3329 = vadd.f32 %v3073, 1e-12
        %v3330 = vadd.f32 %v3074, 1e-12
        %v3331 = vadd.f32 %v3075, 1e-12
        %v3332 = vadd.f32 %v3076, 1e-12
        %v3333 = vadd.f32 %v3077, 1e-12
        %v3334 = vadd.f32 %v3078, 1e-12
        %v3335 = vadd.f32 %v3079, 1e-12
        %v3336 = vadd.f32 %v3080, 1e-12
        %v3337 = vadd.f32 %v3081, 1e-12
        %v3338 = vadd.f32 %v3082, 1e-12
        %v3339 = vadd.f32 %v3083, 1e-12
        %v3340 = vadd.f32 %v3084, 1e-12
        %v3341 = vadd.f32 %v3085, 1e-12
        %v3342 = vadd.f32 %v3086, 1e-12
        %v3343 = vadd.f32 %v3087, 1e-12
        %v3344 = vadd.f32 %v3088, 1e-12
        %v3345 = vadd.f32 %v3089, 1e-12
        %v3346 = vadd.f32 %v3090, 1e-12
        %v3347 = vadd.f32 %v3091, 1e-12
        %v3348 = vadd.f32 %v3092, 1e-12
        %v3349 = vadd.f32 %v3093, 1e-12
        %v3350 = vadd.f32 %v3094, 1e-12
        %v3351 = vadd.f32 %v3095, 1e-12
        %v3352 = vadd.f32 %v3096, 1e-12
        %v3353 = vadd.f32 %v3097, 1e-12
        %v3354 = vadd.f32 %v3098, 1e-12
        %v3355 = vadd.f32 %v3099, 1e-12
        %v3356 = vadd.f32 %v3100, 1e-12
        %v3357 = vadd.f32 %v3101, 1e-12
        %v3358 = vadd.f32 %v3102, 1e-12
        %v3359 = vadd.f32 %v3103, 1e-12
        %v3360 = vadd.f32 %v3104, 1e-12
        %v3361 = vadd.f32 %v3105, 1e-12
        %v3362 = vadd.f32 %v3106, 1e-12
        %v3363 = vadd.f32 %v3107, 1e-12
        %v3364 = vadd.f32 %v3108, 1e-12
        %v3365 = vadd.f32 %v3109, 1e-12
        %v3366 = vadd.f32 %v3110, 1e-12
        %v3367 = vadd.f32 %v3111, 1e-12
        %v3368 = vadd.f32 %v3112, 1e-12
        %v3369 = vadd.f32 %v3113, 1e-12
        %v3370 = vadd.f32 %v3114, 1e-12
        %v3371 = vadd.f32 %v3115, 1e-12
        %v3372 = vrsqrt.pop %v3244
        %v3373 = vrsqrt.pop %v3245
        %v3374 = vrsqrt.pop %v3246
        %v3375 = vrsqrt.pop %v3247
        %v3376 = vrsqrt.pop %v3248
        %v3377 = vrsqrt.pop %v3249
        %v3378 = vrsqrt.pop %v3250
        %v3379 = vrsqrt.pop %v3251
        %v3380 = vrsqrt.pop %v3252
        %v3381 = vrsqrt.pop %v3253
        %v3382 = vrsqrt.pop %v3254
        %v3383 = vrsqrt.pop %v3255
        %v3384 = vrsqrt.pop %v3256
        %v3385 = vrsqrt.pop %v3257
        %v3386 = vrsqrt.pop %v3258
        %v3387 = vrsqrt.pop %v3259
        %v3388 = vrsqrt.pop %v3260
        %v3389 = vrsqrt.pop %v3261
        %v3390 = vrsqrt.pop %v3262
        %v3391 = vrsqrt.pop %v3263
        %v3392 = vrsqrt.pop %v3264
        %v3393 = vrsqrt.pop %v3265
        %v3394 = vrsqrt.pop %v3266
        %v3395 = vrsqrt.pop %v3267
        %v3396 = vrsqrt.pop %v3268
        %v3397 = vrsqrt.pop %v3269
        %v3398 = vrsqrt.pop %v3270
        %v3399 = vrsqrt.pop %v3271
        %v3400 = vrsqrt.pop %v3272
        %v3401 = vrsqrt.pop %v3273
        %v3402 = vrsqrt.pop %v3274
        %v3403 = vrsqrt.pop %v3275
        %v3404 = vrsqrt.pop %v3276
        %v3405 = vrsqrt.pop %v3277
        %v3406 = vrsqrt.pop %v3278
        %v3407 = vrsqrt.pop %v3279
        %v3408 = vrsqrt.pop %v3280
        %v3409 = vrsqrt.pop %v3281
        %v3410 = vrsqrt.pop %v3282
        %v3411 = vrsqrt.pop %v3283
        %v3412 = vrsqrt.pop %v3284
        %v3413 = vrsqrt.pop %v3285
        %v3414 = vrsqrt.pop %v3286
        %v3415 = vrsqrt.pop %v3287
        %v3416 = vrsqrt.pop %v3288
        %v3417 = vrsqrt.pop %v3289
        %v3418 = vrsqrt.pop %v3290
        %v3419 = vrsqrt.pop %v3291
        %v3420 = vrsqrt.pop %v3292
        %v3421 = vrsqrt.pop %v3293
        %v3422 = vrsqrt.pop %v3294
        %v3423 = vrsqrt.pop %v3295
        %v3424 = vrsqrt.pop %v3296
        %v3425 = vrsqrt.pop %v3297
        %v3426 = vrsqrt.pop %v3298
        %v3427 = vrsqrt.pop %v3299
        %v3428 = vrsqrt.pop %v3300
        %v3429 = vrsqrt.pop %v3301
        %v3430 = vrsqrt.pop %v3302
        %v3431 = vrsqrt.pop %v3303
        %v3432 = vrsqrt.pop %v3304
        %v3433 = vrsqrt.pop %v3305
        %v3434 = vrsqrt.pop %v3306
        %v3435 = vrsqrt.pop %v3307
        %v3436 = vrsqrt.pop %v3308
        %v3437 = vrsqrt.pop %v3309
        %v3438 = vrsqrt.pop %v3310
        %v3439 = vrsqrt.pop %v3311
        %v3440 = vrsqrt.pop %v3312
        %v3441 = vrsqrt.pop %v3313
        %v3442 = vrsqrt.pop %v3314
        %v3443 = vrsqrt.pop %v3315
        %v3444 = vrsqrt.pop %v3316
        %v3445 = vrsqrt.pop %v3317
        %v3446 = vrsqrt.pop %v3318
        %v3447 = vrsqrt.pop %v3319
        %v3448 = vrsqrt.pop %v3320
        %v3449 = vrsqrt.pop %v3321
        %v3450 = vrsqrt.pop %v3322
        %v3451 = vrsqrt.pop %v3323
        %v3452 = vrsqrt.pop %v3324
        %v3453 = vrsqrt.pop %v3325
        %v3454 = vrsqrt.pop %v3326
        %v3455 = vrsqrt.pop %v3327
        %v3456 = vrsqrt.pop %v3328
        %v3457 = vrsqrt.pop %v3329
        %v3458 = vrsqrt.pop %v3330
        %v3459 = vrsqrt.pop %v3331
        %v3460 = vrsqrt.pop %v3332
        %v3461 = vrsqrt.pop %v3333
        %v3462 = vrsqrt.pop %v3334
        %v3463 = vrsqrt.pop %v3335
        %v3464 = vrsqrt.pop %v3336
        %v3465 = vrsqrt.pop %v3337
        %v3466 = vrsqrt.pop %v3338
        %v3467 = vrsqrt.pop %v3339
        %v3468 = vrsqrt.pop %v3340
        %v3469 = vrsqrt.pop %v3341
        %v3470 = vrsqrt.pop %v3342
        %v3471 = vrsqrt.pop %v3343
        %v3472 = vrsqrt.pop %v3344
        %v3473 = vrsqrt.pop %v3345
        %v3474 = vrsqrt.pop %v3346
        %v3475 = vrsqrt.pop %v3347
        %v3476 = vrsqrt.pop %v3348
        %v3477 = vrsqrt.pop %v3349
        %v3478 = vrsqrt.pop %v3350
        %v3479 = vrsqrt.pop %v3351
        %v3480 = vrsqrt.pop %v3352
        %v3481 = vrsqrt.pop %v3353
        %v3482 = vrsqrt.pop %v3354
        %v3483 = vrsqrt.pop %v3355
        %v3484 = vrsqrt.pop %v3356
        %v3485 = vrsqrt.pop %v3357
        %v3486 = vrsqrt.pop %v3358
        %v3487 = vrsqrt.pop %v3359
        %v3488 = vrsqrt.pop %v3360
        %v3489 = vrsqrt.pop %v3361
        %v3490 = vrsqrt.pop %v3362
        %v3491 = vrsqrt.pop %v3363
        %v3492 = vrsqrt.pop %v3364
        %v3493 = vrsqrt.pop %v3365
        %v3494 = vrsqrt.pop %v3366
        %v3495 = vrsqrt.pop %v3367
        %v3496 = vrsqrt.pop %v3368
        %v3497 = vrsqrt.pop %v3369
        %v3498 = vrsqrt.pop %v3370
        %v3499 = vrsqrt.pop %v3371
        %v3500 = vmul.f32 %v3116, %v3372
        %v3501 = vmul.f32 %v3117, %v3373
        %v3502 = vmul.f32 %v3118, %v3374
        %v3503 = vmul.f32 %v3119, %v3375
        %v3504 = vmul.f32 %v3120, %v3376
        %v3505 = vmul.f32 %v3121, %v3377
        %v3506 = vmul.f32 %v3122, %v3378
        %v3507 = vmul.f32 %v3123, %v3379
        %v3508 = vmul.f32 %v3124, %v3380
        %v3509 = vmul.f32 %v3125, %v3381
        %v3510 = vmul.f32 %v3126, %v3382
        %v3511 = vmul.f32 %v3127, %v3383
        %v3512 = vmul.f32 %v3128, %v3384
        %v3513 = vmul.f32 %v3129, %v3385
        %v3514 = vmul.f32 %v3130, %v3386
        %v3515 = vmul.f32 %v3131, %v3387
        %v3516 = vmul.f32 %v3132, %v3388
        %v3517 = vmul.f32 %v3133, %v3389
        %v3518 = vmul.f32 %v3134, %v3390
        %v3519 = vmul.f32 %v3135, %v3391
        %v3520 = vmul.f32 %v3136, %v3392
        %v3521 = vmul.f32 %v3137, %v3393
        %v3522 = vmul.f32 %v3138, %v3394
        %v3523 = vmul.f32 %v3139, %v3395
        %v3524 = vmul.f32 %v3140, %v3396
        %v3525 = vmul.f32 %v3141, %v3397
        %v3526 = vmul.f32 %v3142, %v3398
        %v3527 = vmul.f32 %v3143, %v3399
        %v3528 = vmul.f32 %v3144, %v3400
        %v3529 = vmul.f32 %v3145, %v3401
        %v3530 = vmul.f32 %v3146, %v3402
        %v3531 = vmul.f32 %v3147, %v3403
        %v3532 = vmul.f32 %v3148, %v3404
        %v3533 = vmul.f32 %v3149, %v3405
        %v3534 = vmul.f32 %v3150, %v3406
        %v3535 = vmul.f32 %v3151, %v3407
        %v3536 = vmul.f32 %v3152, %v3408
        %v3537 = vmul.f32 %v3153, %v3409
        %v3538 = vmul.f32 %v3154, %v3410
        %v3539 = vmul.f32 %v3155, %v3411
        %v3540 = vmul.f32 %v3156, %v3412
        %v3541 = vmul.f32 %v3157, %v3413
        %v3542 = vmul.f32 %v3158, %v3414
        %v3543 = vmul.f32 %v3159, %v3415
        %v3544 = vmul.f32 %v3160, %v3416
        %v3545 = vmul.f32 %v3161, %v3417
        %v3546 = vmul.f32 %v3162, %v3418
        %v3547 = vmul.f32 %v3163, %v3419
        %v3548 = vmul.f32 %v3164, %v3420
        %v3549 = vmul.f32 %v3165, %v3421
        %v3550 = vmul.f32 %v3166, %v3422
        %v3551 = vmul.f32 %v3167, %v3423
        %v3552 = vmul.f32 %v3168, %v3424
        %v3553 = vmul.f32 %v3169, %v3425
        %v3554 = vmul.f32 %v3170, %v3426
        %v3555 = vmul.f32 %v3171, %v3427
        %v3556 = vmul.f32 %v3172, %v3428
        %v3557 = vmul.f32 %v3173, %v3429
        %v3558 = vmul.f32 %v3174, %v3430
        %v3559 = vmul.f32 %v3175, %v3431
        %v3560 = vmul.f32 %v3176, %v3432
        %v3561 = vmul.f32 %v3177, %v3433
        %v3562 = vmul.f32 %v3178, %v3434
        %v3563 = vmul.f32 %v3179, %v3435
        %v3564 = vmul.f32 %v3180, %v3436
        %v3565 = vmul.f32 %v3181, %v3437
        %v3566 = vmul.f32 %v3182, %v3438
        %v3567 = vmul.f32 %v3183, %v3439
        %v3568 = vmul.f32 %v3184, %v3440
        %v3569 = vmul.f32 %v3185, %v3441
        %v3570 = vmul.f32 %v3186, %v3442
        %v3571 = vmul.f32 %v3187, %v3443
        %v3572 = vmul.f32 %v3188, %v3444
        %v3573 = vmul.f32 %v3189, %v3445
        %v3574 = vmul.f32 %v3190, %v3446
        %v3575 = vmul.f32 %v3191, %v3447
        %v3576 = vmul.f32 %v3192, %v3448
        %v3577 = vmul.f32 %v3193, %v3449
        %v3578 = vmul.f32 %v3194, %v3450
        %v3579 = vmul.f32 %v3195, %v3451
        %v3580 = vmul.f32 %v3196, %v3452
        %v3581 = vmul.f32 %v3197, %v3453
        %v3582 = vmul.f32 %v3198, %v3454
        %v3583 = vmul.f32 %v3199, %v3455
        %v3584 = vmul.f32 %v3200, %v3456
        %v3585 = vmul.f32 %v3201, %v3457
        %v3586 = vmul.f32 %v3202, %v3458
        %v3587 = vmul.f32 %v3203, %v3459
        %v3588 = vmul.f32 %v3204, %v3460
        %v3589 = vmul.f32 %v3205, %v3461
        %v3590 = vmul.f32 %v3206, %v3462
        %v3591 = vmul.f32 %v3207, %v3463
        %v3592 = vmul.f32 %v3208, %v3464
        %v3593 = vmul.f32 %v3209, %v3465
        %v3594 = vmul.f32 %v3210, %v3466
        %v3595 = vmul.f32 %v3211, %v3467
        %v3596 = vmul.f32 %v3212, %v3468
        %v3597 = vmul.f32 %v3213, %v3469
        %v3598 = vmul.f32 %v3214, %v3470
        %v3599 = vmul.f32 %v3215, %v3471
        %v3600 = vmul.f32 %v3216, %v3472
        %v3601 = vmul.f32 %v3217, %v3473
        %v3602 = vmul.f32 %v3218, %v3474
        %v3603 = vmul.f32 %v3219, %v3475
        %v3604 = vmul.f32 %v3220, %v3476
        %v3605 = vmul.f32 %v3221, %v3477
        %v3606 = vmul.f32 %v3222, %v3478
        %v3607 = vmul.f32 %v3223, %v3479
        %v3608 = vmul.f32 %v3224, %v3480
        %v3609 = vmul.f32 %v3225, %v3481
        %v3610 = vmul.f32 %v3226, %v3482
        %v3611 = vmul.f32 %v3227, %v3483
        %v3612 = vmul.f32 %v3228, %v3484
        %v3613 = vmul.f32 %v3229, %v3485
        %v3614 = vmul.f32 %v3230, %v3486
        %v3615 = vmul.f32 %v3231, %v3487
        %v3616 = vmul.f32 %v3232, %v3488
        %v3617 = vmul.f32 %v3233, %v3489
        %v3618 = vmul.f32 %v3234, %v3490
        %v3619 = vmul.f32 %v3235, %v3491
        %v3620 = vmul.f32 %v3236, %v3492
        %v3621 = vmul.f32 %v3237, %v3493
        %v3622 = vmul.f32 %v3238, %v3494
        %v3623 = vmul.f32 %v3239, %v3495
        %v3624 = vmul.f32 %v3240, %v3496
        %v3625 = vmul.f32 %v3241, %v3497
        %v3626 = vmul.f32 %v3242, %v3498
        %v3627 = vmul.f32 %v3243, %v3499
        %v3628 = vld [vmem:[%s4] sm:$0x1]
        %v3630 = vlaneseq
        %v3631 = vshrl.u32 %v3630, 7
        %v3632 = vsub.s32 0, %v3631
        %v3633 = vrot.slane %v3628, %v3632
        %v3635 = vmul.f32 %v3500, %v3633
        %v3636 = vmul.f32 %v3501, %v3633
        %v3637 = vmul.f32 %v3502, %v3633
        %v3638 = vmul.f32 %v3503, %v3633
        %v3639 = vmul.f32 %v3504, %v3633
        %v3640 = vmul.f32 %v3505, %v3633
        %v3641 = vmul.f32 %v3506, %v3633
        %v3642 = vmul.f32 %v3507, %v3633
        %v3643 = vmul.f32 %v3508, %v3633
        %v3644 = vmul.f32 %v3509, %v3633
        %v3645 = vmul.f32 %v3510, %v3633
        %v3646 = vmul.f32 %v3511, %v3633
        %v3647 = vmul.f32 %v3512, %v3633
        %v3648 = vmul.f32 %v3513, %v3633
        %v3649 = vmul.f32 %v3514, %v3633
        %v3650 = vmul.f32 %v3515, %v3633
        %v3651 = vmul.f32 %v3516, %v3633
        %v3652 = vmul.f32 %v3517, %v3633
        %v3653 = vmul.f32 %v3518, %v3633
        %v3654 = vmul.f32 %v3519, %v3633
        %v3655 = vmul.f32 %v3520, %v3633
        %v3656 = vmul.f32 %v3521, %v3633
        %v3657 = vmul.f32 %v3522, %v3633
        %v3658 = vmul.f32 %v3523, %v3633
        %v3659 = vmul.f32 %v3524, %v3633
        %v3660 = vmul.f32 %v3525, %v3633
        %v3661 = vmul.f32 %v3526, %v3633
        %v3662 = vmul.f32 %v3527, %v3633
        %v3663 = vmul.f32 %v3528, %v3633
        %v3664 = vmul.f32 %v3529, %v3633
        %v3665 = vmul.f32 %v3530, %v3633
        %v3666 = vmul.f32 %v3531, %v3633
        %v3667 = vmul.f32 %v3532, %v3633
        %v3668 = vmul.f32 %v3533, %v3633
        %v3669 = vmul.f32 %v3534, %v3633
        %v3670 = vmul.f32 %v3535, %v3633
        %v3671 = vmul.f32 %v3536, %v3633
        %v3672 = vmul.f32 %v3537, %v3633
        %v3673 = vmul.f32 %v3538, %v3633
        %v3674 = vmul.f32 %v3539, %v3633
        %v3675 = vmul.f32 %v3540, %v3633
        %v3676 = vmul.f32 %v3541, %v3633
        %v3677 = vmul.f32 %v3542, %v3633
        %v3678 = vmul.f32 %v3543, %v3633
        %v3679 = vmul.f32 %v3544, %v3633
        %v3680 = vmul.f32 %v3545, %v3633
        %v3681 = vmul.f32 %v3546, %v3633
        %v3682 = vmul.f32 %v3547, %v3633
        %v3683 = vmul.f32 %v3548, %v3633
        %v3684 = vmul.f32 %v3549, %v3633
        %v3685 = vmul.f32 %v3550, %v3633
        %v3686 = vmul.f32 %v3551, %v3633
        %v3687 = vmul.f32 %v3552, %v3633
        %v3688 = vmul.f32 %v3553, %v3633
        %v3689 = vmul.f32 %v3554, %v3633
        %v3690 = vmul.f32 %v3555, %v3633
        %v3691 = vmul.f32 %v3556, %v3633
        %v3692 = vmul.f32 %v3557, %v3633
        %v3693 = vmul.f32 %v3558, %v3633
        %v3694 = vmul.f32 %v3559, %v3633
        %v3695 = vmul.f32 %v3560, %v3633
        %v3696 = vmul.f32 %v3561, %v3633
        %v3697 = vmul.f32 %v3562, %v3633
        %v3698 = vmul.f32 %v3563, %v3633
        %v3699 = vmul.f32 %v3564, %v3633
        %v3700 = vmul.f32 %v3565, %v3633
        %v3701 = vmul.f32 %v3566, %v3633
        %v3702 = vmul.f32 %v3567, %v3633
        %v3703 = vmul.f32 %v3568, %v3633
        %v3704 = vmul.f32 %v3569, %v3633
        %v3705 = vmul.f32 %v3570, %v3633
        %v3706 = vmul.f32 %v3571, %v3633
        %v3707 = vmul.f32 %v3572, %v3633
        %v3708 = vmul.f32 %v3573, %v3633
        %v3709 = vmul.f32 %v3574, %v3633
        %v3710 = vmul.f32 %v3575, %v3633
        %v3711 = vmul.f32 %v3576, %v3633
        %v3712 = vmul.f32 %v3577, %v3633
        %v3713 = vmul.f32 %v3578, %v3633
        %v3714 = vmul.f32 %v3579, %v3633
        %v3715 = vmul.f32 %v3580, %v3633
        %v3716 = vmul.f32 %v3581, %v3633
        %v3717 = vmul.f32 %v3582, %v3633
        %v3718 = vmul.f32 %v3583, %v3633
        %v3719 = vmul.f32 %v3584, %v3633
        %v3720 = vmul.f32 %v3585, %v3633
        %v3721 = vmul.f32 %v3586, %v3633
        %v3722 = vmul.f32 %v3587, %v3633
        %v3723 = vmul.f32 %v3588, %v3633
        %v3724 = vmul.f32 %v3589, %v3633
        %v3725 = vmul.f32 %v3590, %v3633
        %v3726 = vmul.f32 %v3591, %v3633
        %v3727 = vmul.f32 %v3592, %v3633
        %v3728 = vmul.f32 %v3593, %v3633
        %v3729 = vmul.f32 %v3594, %v3633
        %v3730 = vmul.f32 %v3595, %v3633
        %v3731 = vmul.f32 %v3596, %v3633
        %v3732 = vmul.f32 %v3597, %v3633
        %v3733 = vmul.f32 %v3598, %v3633
        %v3734 = vmul.f32 %v3599, %v3633
        %v3735 = vmul.f32 %v3600, %v3633
        %v3736 = vmul.f32 %v3601, %v3633
        %v3737 = vmul.f32 %v3602, %v3633
        %v3738 = vmul.f32 %v3603, %v3633
        %v3739 = vmul.f32 %v3604, %v3633
        %v3740 = vmul.f32 %v3605, %v3633
        %v3741 = vmul.f32 %v3606, %v3633
        %v3742 = vmul.f32 %v3607, %v3633
        %v3743 = vmul.f32 %v3608, %v3633
        %v3744 = vmul.f32 %v3609, %v3633
        %v3745 = vmul.f32 %v3610, %v3633
        %v3746 = vmul.f32 %v3611, %v3633
        %v3747 = vmul.f32 %v3612, %v3633
        %v3748 = vmul.f32 %v3613, %v3633
        %v3749 = vmul.f32 %v3614, %v3633
        %v3750 = vmul.f32 %v3615, %v3633
        %v3751 = vmul.f32 %v3616, %v3633
        %v3752 = vmul.f32 %v3617, %v3633
        %v3753 = vmul.f32 %v3618, %v3633
        %v3754 = vmul.f32 %v3619, %v3633
        %v3755 = vmul.f32 %v3620, %v3633
        %v3756 = vmul.f32 %v3621, %v3633
        %v3757 = vmul.f32 %v3622, %v3633
        %v3758 = vmul.f32 %v3623, %v3633
        %v3759 = vmul.f32 %v3624, %v3633
        %v3760 = vmul.f32 %v3625, %v3633
        %v3761 = vmul.f32 %v3626, %v3633
        %v3762 = vmul.f32 %v3627, %v3633
        %v3763 = vld [vmem:[%s5] sm:$0x1]
        %v3765 = vlaneseq
        %v3766 = vshrl.u32 %v3765, 7
        %v3767 = vsub.s32 0, %v3766
        %v3768 = vrot.slane %v3763, %v3767
        %v3770 = vadd.f32 %v3635, %v3768
        %v3771 = vadd.f32 %v3636, %v3768
        %v3772 = vadd.f32 %v3637, %v3768
        %v3773 = vadd.f32 %v3638, %v3768
        %v3774 = vadd.f32 %v3639, %v3768
        %v3775 = vadd.f32 %v3640, %v3768
        %v3776 = vadd.f32 %v3641, %v3768
        %v3777 = vadd.f32 %v3642, %v3768
        %v3778 = vadd.f32 %v3643, %v3768
        %v3779 = vadd.f32 %v3644, %v3768
        %v3780 = vadd.f32 %v3645, %v3768
        %v3781 = vadd.f32 %v3646, %v3768
        %v3782 = vadd.f32 %v3647, %v3768
        %v3783 = vadd.f32 %v3648, %v3768
        %v3784 = vadd.f32 %v3649, %v3768
        %v3785 = vadd.f32 %v3650, %v3768
        %v3786 = vadd.f32 %v3651, %v3768
        %v3787 = vadd.f32 %v3652, %v3768
        %v3788 = vadd.f32 %v3653, %v3768
        %v3789 = vadd.f32 %v3654, %v3768
        %v3790 = vadd.f32 %v3655, %v3768
        %v3791 = vadd.f32 %v3656, %v3768
        %v3792 = vadd.f32 %v3657, %v3768
        %v3793 = vadd.f32 %v3658, %v3768
        %v3794 = vadd.f32 %v3659, %v3768
        %v3795 = vadd.f32 %v3660, %v3768
        %v3796 = vadd.f32 %v3661, %v3768
        %v3797 = vadd.f32 %v3662, %v3768
        %v3798 = vadd.f32 %v3663, %v3768
        %v3799 = vadd.f32 %v3664, %v3768
        %v3800 = vadd.f32 %v3665, %v3768
        %v3801 = vadd.f32 %v3666, %v3768
        %v3802 = vadd.f32 %v3667, %v3768
        %v3803 = vadd.f32 %v3668, %v3768
        %v3804 = vadd.f32 %v3669, %v3768
        %v3805 = vadd.f32 %v3670, %v3768
        %v3806 = vadd.f32 %v3671, %v3768
        %v3807 = vadd.f32 %v3672, %v3768
        %v3808 = vadd.f32 %v3673, %v3768
        %v3809 = vadd.f32 %v3674, %v3768
        %v3810 = vadd.f32 %v3675, %v3768
        %v3811 = vadd.f32 %v3676, %v3768
        %v3812 = vadd.f32 %v3677, %v3768
        %v3813 = vadd.f32 %v3678, %v3768
        %v3814 = vadd.f32 %v3679, %v3768
        %v3815 = vadd.f32 %v3680, %v3768
        %v3816 = vadd.f32 %v3681, %v3768
        %v3817 = vadd.f32 %v3682, %v3768
        %v3818 = vadd.f32 %v3683, %v3768
        %v3819 = vadd.f32 %v3684, %v3768
        %v3820 = vadd.f32 %v3685, %v3768
        %v3821 = vadd.f32 %v3686, %v3768
        %v3822 = vadd.f32 %v3687, %v3768
        %v3823 = vadd.f32 %v3688, %v3768
        %v3824 = vadd.f32 %v3689, %v3768
        %v3825 = vadd.f32 %v3690, %v3768
        %v3826 = vadd.f32 %v3691, %v3768
        %v3827 = vadd.f32 %v3692, %v3768
        %v3828 = vadd.f32 %v3693, %v3768
        %v3829 = vadd.f32 %v3694, %v3768
        %v3830 = vadd.f32 %v3695, %v3768
        %v3831 = vadd.f32 %v3696, %v3768
        %v3832 = vadd.f32 %v3697, %v3768
        %v3833 = vadd.f32 %v3698, %v3768
        %v3834 = vadd.f32 %v3699, %v3768
        %v3835 = vadd.f32 %v3700, %v3768
        %v3836 = vadd.f32 %v3701, %v3768
        %v3837 = vadd.f32 %v3702, %v3768
        %v3838 = vadd.f32 %v3703, %v3768
        %v3839 = vadd.f32 %v3704, %v3768
        %v3840 = vadd.f32 %v3705, %v3768
        %v3841 = vadd.f32 %v3706, %v3768
        %v3842 = vadd.f32 %v3707, %v3768
        %v3843 = vadd.f32 %v3708, %v3768
        %v3844 = vadd.f32 %v3709, %v3768
        %v3845 = vadd.f32 %v3710, %v3768
        %v3846 = vadd.f32 %v3711, %v3768
        %v3847 = vadd.f32 %v3712, %v3768
        %v3848 = vadd.f32 %v3713, %v3768
        %v3849 = vadd.f32 %v3714, %v3768
        %v3850 = vadd.f32 %v3715, %v3768
        %v3851 = vadd.f32 %v3716, %v3768
        %v3852 = vadd.f32 %v3717, %v3768
        %v3853 = vadd.f32 %v3718, %v3768
        %v3854 = vadd.f32 %v3719, %v3768
        %v3855 = vadd.f32 %v3720, %v3768
        %v3856 = vadd.f32 %v3721, %v3768
        %v3857 = vadd.f32 %v3722, %v3768
        %v3858 = vadd.f32 %v3723, %v3768
        %v3859 = vadd.f32 %v3724, %v3768
        %v3860 = vadd.f32 %v3725, %v3768
        %v3861 = vadd.f32 %v3726, %v3768
        %v3862 = vadd.f32 %v3727, %v3768
        %v3863 = vadd.f32 %v3728, %v3768
        %v3864 = vadd.f32 %v3729, %v3768
        %v3865 = vadd.f32 %v3730, %v3768
        %v3866 = vadd.f32 %v3731, %v3768
        %v3867 = vadd.f32 %v3732, %v3768
        %v3868 = vadd.f32 %v3733, %v3768
        %v3869 = vadd.f32 %v3734, %v3768
        %v3870 = vadd.f32 %v3735, %v3768
        %v3871 = vadd.f32 %v3736, %v3768
        %v3872 = vadd.f32 %v3737, %v3768
        %v3873 = vadd.f32 %v3738, %v3768
        %v3874 = vadd.f32 %v3739, %v3768
        %v3875 = vadd.f32 %v3740, %v3768
        %v3876 = vadd.f32 %v3741, %v3768
        %v3877 = vadd.f32 %v3742, %v3768
        %v3878 = vadd.f32 %v3743, %v3768
        %v3879 = vadd.f32 %v3744, %v3768
        %v3880 = vadd.f32 %v3745, %v3768
        %v3881 = vadd.f32 %v3746, %v3768
        %v3882 = vadd.f32 %v3747, %v3768
        %v3883 = vadd.f32 %v3748, %v3768
        %v3884 = vadd.f32 %v3749, %v3768
        %v3885 = vadd.f32 %v3750, %v3768
        %v3886 = vadd.f32 %v3751, %v3768
        %v3887 = vadd.f32 %v3752, %v3768
        %v3888 = vadd.f32 %v3753, %v3768
        %v3889 = vadd.f32 %v3754, %v3768
        %v3890 = vadd.f32 %v3755, %v3768
        %v3891 = vadd.f32 %v3756, %v3768
        %v3892 = vadd.f32 %v3757, %v3768
        %v3893 = vadd.f32 %v3758, %v3768
        %v3894 = vadd.f32 %v3759, %v3768
        %v3895 = vadd.f32 %v3760, %v3768
        %v3896 = vadd.f32 %v3761, %v3768
        %v3897 = vadd.f32 %v3762, %v3768
        %3898 = vst [vmem:[%s276] sm:$0xff] %v3770
        %3899 = vst [vmem:[%s276 + $0x8] sm:$0xff] %v3771
        %3900 = vst [vmem:[%s276 + $0x10] sm:$0xff] %v3772
        %3901 = vst [vmem:[%s276 + $0x18] sm:$0xff] %v3773
        %3902 = vst [vmem:[%s276 + $0x20] sm:$0xff] %v3774
        %3903 = vst [vmem:[%s276 + $0x28] sm:$0xff] %v3775
        %3904 = vst [vmem:[%s276 + $0x30] sm:$0xff] %v3776
        %3905 = vst [vmem:[%s276 + $0x38] sm:$0xff] %v3777
        %3906 = vst [vmem:[%s276 + $0x40] sm:$0xff] %v3778
        %3907 = vst [vmem:[%s276 + $0x48] sm:$0xff] %v3779
        %3908 = vst [vmem:[%s276 + $0x50] sm:$0xff] %v3780
        %3909 = vst [vmem:[%s276 + $0x58] sm:$0xff] %v3781
        %3910 = vst [vmem:[%s276 + $0x60] sm:$0xff] %v3782
        %3911 = vst [vmem:[%s276 + $0x68] sm:$0xff] %v3783
        %3912 = vst [vmem:[%s276 + $0x70] sm:$0xff] %v3784
        %3913 = vst [vmem:[%s276 + $0x78] sm:$0xff] %v3785
        %3914 = vst [vmem:[%s276 + $0x80] sm:$0xff] %v3786
        %3915 = vst [vmem:[%s276 + $0x88] sm:$0xff] %v3787
        %3916 = vst [vmem:[%s276 + $0x90] sm:$0xff] %v3788
        %3917 = vst [vmem:[%s276 + $0x98] sm:$0xff] %v3789
        %3918 = vst [vmem:[%s276 + $0xa0] sm:$0xff] %v3790
        %3919 = vst [vmem:[%s276 + $0xa8] sm:$0xff] %v3791
        %3920 = vst [vmem:[%s276 + $0xb0] sm:$0xff] %v3792
        %3921 = vst [vmem:[%s276 + $0xb8] sm:$0xff] %v3793
        %3922 = vst [vmem:[%s276 + $0xc0] sm:$0xff] %v3794
        %3923 = vst [vmem:[%s276 + $0xc8] sm:$0xff] %v3795
        %3924 = vst [vmem:[%s276 + $0xd0] sm:$0xff] %v3796
        %3925 = vst [vmem:[%s276 + $0xd8] sm:$0xff] %v3797
        %3926 = vst [vmem:[%s276 + $0xe0] sm:$0xff] %v3798
        %3927 = vst [vmem:[%s276 + $0xe8] sm:$0xff] %v3799
        %3928 = vst [vmem:[%s276 + $0xf0] sm:$0xff] %v3800
        %3929 = vst [vmem:[%s276 + $0xf8] sm:$0xff] %v3801
        %3930 = vst [vmem:[%s276 + $0x100] sm:$0xff] %v3802
        %3931 = vst [vmem:[%s276 + $0x108] sm:$0xff] %v3803
        %3932 = vst [vmem:[%s276 + $0x110] sm:$0xff] %v3804
        %3933 = vst [vmem:[%s276 + $0x118] sm:$0xff] %v3805
        %3934 = vst [vmem:[%s276 + $0x120] sm:$0xff] %v3806
        %3935 = vst [vmem:[%s276 + $0x128] sm:$0xff] %v3807
        %3936 = vst [vmem:[%s276 + $0x130] sm:$0xff] %v3808
        %3937 = vst [vmem:[%s276 + $0x138] sm:$0xff] %v3809
        %3938 = vst [vmem:[%s276 + $0x140] sm:$0xff] %v3810
        %3939 = vst [vmem:[%s276 + $0x148] sm:$0xff] %v3811
        %3940 = vst [vmem:[%s276 + $0x150] sm:$0xff] %v3812
        %3941 = vst [vmem:[%s276 + $0x158] sm:$0xff] %v3813
        %3942 = vst [vmem:[%s276 + $0x160] sm:$0xff] %v3814
        %3943 = vst [vmem:[%s276 + $0x168] sm:$0xff] %v3815
        %3944 = vst [vmem:[%s276 + $0x170] sm:$0xff] %v3816
        %3945 = vst [vmem:[%s276 + $0x178] sm:$0xff] %v3817
        %3946 = vst [vmem:[%s276 + $0x180] sm:$0xff] %v3818
        %3947 = vst [vmem:[%s276 + $0x188] sm:$0xff] %v3819
        %3948 = vst [vmem:[%s276 + $0x190] sm:$0xff] %v3820
        %3949 = vst [vmem:[%s276 + $0x198] sm:$0xff] %v3821
        %3950 = vst [vmem:[%s276 + $0x1a0] sm:$0xff] %v3822
        %3951 = vst [vmem:[%s276 + $0x1a8] sm:$0xff] %v3823
        %3952 = vst [vmem:[%s276 + $0x1b0] sm:$0xff] %v3824
        %3953 = vst [vmem:[%s276 + $0x1b8] sm:$0xff] %v3825
        %3954 = vst [vmem:[%s276 + $0x1c0] sm:$0xff] %v3826
        %3955 = vst [vmem:[%s276 + $0x1c8] sm:$0xff] %v3827
        %3956 = vst [vmem:[%s276 + $0x1d0] sm:$0xff] %v3828
        %3957 = vst [vmem:[%s276 + $0x1d8] sm:$0xff] %v3829
        %3958 = vst [vmem:[%s276 + $0x1e0] sm:$0xff] %v3830
        %3959 = vst [vmem:[%s276 + $0x1e8] sm:$0xff] %v3831
        %3960 = vst [vmem:[%s276 + $0x1f0] sm:$0xff] %v3832
        %3961 = vst [vmem:[%s276 + $0x1f8] sm:$0xff] %v3833
        %3962 = vst [vmem:[%s276 + $0x200] sm:$0xff] %v3834
        %3963 = vst [vmem:[%s276 + $0x208] sm:$0xff] %v3835
        %3964 = vst [vmem:[%s276 + $0x210] sm:$0xff] %v3836
        %3965 = vst [vmem:[%s276 + $0x218] sm:$0xff] %v3837
        %3966 = vst [vmem:[%s276 + $0x220] sm:$0xff] %v3838
        %3967 = vst [vmem:[%s276 + $0x228] sm:$0xff] %v3839
        %3968 = vst [vmem:[%s276 + $0x230] sm:$0xff] %v3840
        %3969 = vst [vmem:[%s276 + $0x238] sm:$0xff] %v3841
        %3970 = vst [vmem:[%s276 + $0x240] sm:$0xff] %v3842
        %3971 = vst [vmem:[%s276 + $0x248] sm:$0xff] %v3843
        %3972 = vst [vmem:[%s276 + $0x250] sm:$0xff] %v3844
        %3973 = vst [vmem:[%s276 + $0x258] sm:$0xff] %v3845
        %3974 = vst [vmem:[%s276 + $0x260] sm:$0xff] %v3846
        %3975 = vst [vmem:[%s276 + $0x268] sm:$0xff] %v3847
        %3976 = vst [vmem:[%s276 + $0x270] sm:$0xff] %v3848
        %3977 = vst [vmem:[%s276 + $0x278] sm:$0xff] %v3849
        %3978 = vst [vmem:[%s276 + $0x280] sm:$0xff] %v3850
        %3979 = vst [vmem:[%s276 + $0x288] sm:$0xff] %v3851
        %3980 = vst [vmem:[%s276 + $0x290] sm:$0xff] %v3852
        %3981 = vst [vmem:[%s276 + $0x298] sm:$0xff] %v3853
        %3982 = vst [vmem:[%s276 + $0x2a0] sm:$0xff] %v3854
        %3983 = vst [vmem:[%s276 + $0x2a8] sm:$0xff] %v3855
        %3984 = vst [vmem:[%s276 + $0x2b0] sm:$0xff] %v3856
        %3985 = vst [vmem:[%s276 + $0x2b8] sm:$0xff] %v3857
        %3986 = vst [vmem:[%s276 + $0x2c0] sm:$0xff] %v3858
        %3987 = vst [vmem:[%s276 + $0x2c8] sm:$0xff] %v3859
        %3988 = vst [vmem:[%s276 + $0x2d0] sm:$0xff] %v3860
        %3989 = vst [vmem:[%s276 + $0x2d8] sm:$0xff] %v3861
        %3990 = vst [vmem:[%s276 + $0x2e0] sm:$0xff] %v3862
        %3991 = vst [vmem:[%s276 + $0x2e8] sm:$0xff] %v3863
        %3992 = vst [vmem:[%s276 + $0x2f0] sm:$0xff] %v3864
        %3993 = vst [vmem:[%s276 + $0x2f8] sm:$0xff] %v3865
        %3994 = vst [vmem:[%s276 + $0x300] sm:$0xff] %v3866
        %3995 = vst [vmem:[%s276 + $0x308] sm:$0xff] %v3867
        %3996 = vst [vmem:[%s276 + $0x310] sm:$0xff] %v3868
        %3997 = vst [vmem:[%s276 + $0x318] sm:$0xff] %v3869
        %3998 = vst [vmem:[%s276 + $0x320] sm:$0xff] %v3870
        %3999 = vst [vmem:[%s276 + $0x328] sm:$0xff] %v3871
        %4000 = vst [vmem:[%s276 + $0x330] sm:$0xff] %v3872
        %4001 = vst [vmem:[%s276 + $0x338] sm:$0xff] %v3873
        %4002 = vst [vmem:[%s276 + $0x340] sm:$0xff] %v3874
        %4003 = vst [vmem:[%s276 + $0x348] sm:$0xff] %v3875
        %4004 = vst [vmem:[%s276 + $0x350] sm:$0xff] %v3876
        %4005 = vst [vmem:[%s276 + $0x358] sm:$0xff] %v3877
        %4006 = vst [vmem:[%s276 + $0x360] sm:$0xff] %v3878
        %4007 = vst [vmem:[%s276 + $0x368] sm:$0xff] %v3879
        %4008 = vst [vmem:[%s276 + $0x370] sm:$0xff] %v3880
        %4009 = vst [vmem:[%s276 + $0x378] sm:$0xff] %v3881
        %4010 = vst [vmem:[%s276 + $0x380] sm:$0xff] %v3882
        %4011 = vst [vmem:[%s276 + $0x388] sm:$0xff] %v3883
        %4012 = vst [vmem:[%s276 + $0x390] sm:$0xff] %v3884
        %4013 = vst [vmem:[%s276 + $0x398] sm:$0xff] %v3885
        %4014 = vst [vmem:[%s276 + $0x3a0] sm:$0xff] %v3886
        %4015 = vst [vmem:[%s276 + $0x3a8] sm:$0xff] %v3887
        %4016 = vst [vmem:[%s276 + $0x3b0] sm:$0xff] %v3888
        %4017 = vst [vmem:[%s276 + $0x3b8] sm:$0xff] %v3889
        %4018 = vst [vmem:[%s276 + $0x3c0] sm:$0xff] %v3890
        %4019 = vst [vmem:[%s276 + $0x3c8] sm:$0xff] %v3891
        %4020 = vst [vmem:[%s276 + $0x3d0] sm:$0xff] %v3892
        %4021 = vst [vmem:[%s276 + $0x3d8] sm:$0xff] %v3893
        %4022 = vst [vmem:[%s276 + $0x3e0] sm:$0xff] %v3894
        %4023 = vst [vmem:[%s276 + $0x3e8] sm:$0xff] %v3895
        %4024 = vst [vmem:[%s276 + $0x3f0] sm:$0xff] %v3896
        %4025 = vst [vmem:[%s276 + $0x3f8] sm:$0xff] %v3897
        %s4026 = sand.u32 %s165, 1
        %s4027 = scalar_lea.sflag [#allocation4], %s4026
        %s4028 = sand.u32 %s165, 1
        %s4029 = smul.addr %s4028, 1024
        %s4030 = scalar_lea.vmem [#allocation5], %s4029
        // Predicated region
        $region49: #{tpu_custom_call.1} parent=43 // pred_check
          %p4031 = pneg %p175
        $region50: #{tpu_custom_call.1} parent=43 // pred_check_branch
          %4033 = sbr.rel (%p4031) target = $region52
        $region51: #{tpu_custom_call.1} parent=43 // pred_region
          %s4034 = smul.u32 128, %s21
          %s4036 = ssub.s32 16384, 16384
          %4037 = vsyncadd %s4027, %s4036
          %s4038 = smul.addr %s4034, 128
          %s4039 = scalar_lea.hbm %s6, %s4038
          %s4040 = sshll.u32 %s4030, 4
          %s4041 = int_to_ptr.vmem [resolvable:$true] %s4040
          %4046 = dma.vmem_to_hbm [thread:$0]  %s4041, 16384, %s4039, %s4027, 128, 128, 8
        $region52: #{tpu_custom_call.1} parent=43 // pred_fallthru
          _
      $region44: #{tpu_custom_call.1} parent=5 // pred_fallthru
        _
      %p4047 = scmp.le.s32.totalorder 2, %s16
      // Predicated region
      $region53: #{tpu_custom_call.1} parent=5 // pred_check
        %p4048 = pneg %p4047
      $region54: #{tpu_custom_call.1} parent=5 // pred_check_branch
        %4050 = sbr.rel (%p4048) target = $region56
      $region55: #{tpu_custom_call.1} parent=5 // pred_region
        %s4051 = ssub.s32 %s16, 2
        // Predicated region
        $region57: #{tpu_custom_call.1} parent=55 // pred_check
          %p4052 = pneg %p181
        $region58: #{tpu_custom_call.1} parent=55 // pred_check_branch
          %4054 = sbr.rel (%p4052) target = $region60
        $region59: #{tpu_custom_call.1} parent=55 // pred_region
          %s4055 = sand.u32 %s166, 1
          %s4056 = scalar_lea.sflag [#allocation4], %s4055
          %s4057 = sand.u32 %s166, 1
          %s4058 = smul.addr %s4057, 1024
          %s4059 = scalar_lea.vmem [#allocation5], %s4058
          %4060 = dma.done %s4056, 16384
        $region60: #{tpu_custom_call.1} parent=55 // pred_fallthru
          _
      $region56: #{tpu_custom_call.1} parent=5 // pred_fallthru
        _
    $region6: #{tpu_custom_call.1} parent=1 // loop_footer
      %s20 = sadd.s32 1, %s16
    $region7: #{tpu_custom_call.1} parent=1 // loop_footer_branch
      %15 = sbr.rel target = $region3
    $region8: #{tpu_custom_call.1} parent=1 // loop_exit
      _
    %4061 = vsyncpa [#allocation3], 1
    %s4062 = scalar_lea.sflag [#allocation3], 1
    %4063 = vsyncpa %s4062, 1
    %4064 = vsyncpa [#allocation4], 1
    %s4065 = scalar_lea.sflag [#allocation4], 1
    %4066 = vsyncpa %s4065, 1

</llo_original>
